<compile_context>
chip_gen: v7x
topology: tpu7x:2x2x1
jax: 0.10.0
libtpu: 0.0.40
codegen_flags: <defaults>
</compile_context>

<pallas_src>
import math

import jax
import jax.numpy as jnp
from jax.experimental import pallas as pl
from jax.experimental.pallas import tpu as pltpu

LN_EPS = 1e-5     # nn.LayerNorm default eps
LANE = 128
TIME_PAD = 16     # bf16 sublane packing is (16, 128)


def _round_up(n, m):
    return (n + m - 1) // m * m


# -----------------------------------------------------------------------------
# Fused 3-layer Pallas kernel
# -----------------------------------------------------------------------------
def tcn_pallas(x_padded, packed, *, c_out_real, t_real, block_b, fused_flags,
               vmem_limit_bytes, single_buffer_weights):
    """x_padded: (B, T_pad, Cp) bf16 (channels/time zero-padded) -> (B, T_pad, Cp) f32."""
    B, T, Cp = x_padded.shape
    assert B % block_b == 0
    nb = B // block_b
    BT = block_b
    M = BT * T
    inv_c = 1.0 / float(c_out_real)

    def kernel(x_ref,
               w1_ref, b1_ref, g1_ref, be1_ref,
               w2_ref, b2_ref, g2_ref, be2_ref,
               w3_ref, b3_ref, g3_ref, be3_ref,
               out_ref):
        # Zero-cost reshape: (BT, T, Cp) -> (BT*T, Cp); T is a multiple of 16.
        h = x_ref[...].reshape(M, Cp)                        # bf16

        rows = None
        if (BT > 1) or (t_real != T):
            rows = jax.lax.broadcasted_iota(jnp.int32, (M, 1), 0) % T
        seam_top = (rows == 0) if BT > 1 else None           # wrap rows of x[t-1] tap
        seam_bot = (rows == T - 1) if BT > 1 else None       # wrap rows of x[t+1] tap
        pad_rows = (rows >= t_real) if t_real != T else None  # zero-padded time rows

        zrow = jnp.zeros((1, Cp), jnp.bfloat16)

        def im2col(hb):
            # (M, Cp) -> (M, 3*Cp) with taps [x[t-1], x[t], x[t+1]], built once
            # over the flattened batch*time axis; batch seam rows zeroed.
            xm1 = jnp.concatenate([zrow, hb[:M - 1]], axis=0)
            xp1 = jnp.concatenate([hb[1:], zrow], axis=0)
            if seam_top is not None:
                xm1 = jnp.where(seam_top, 0, xm1)
                xp1 = jnp.where(seam_bot, 0, xp1)
            return jnp.concatenate([xm1, hb, xp1], axis=-1)

        def conv_ln_relu(h_in, w_ref, b_ref, g_ref, beta_ref, fused_residual,
                         mask_time_pad):
            hb = h_in.astype(jnp.bfloat16)                   # bf16 MXU operands
            y = jnp.dot(im2col(hb), w_ref[...],
                        preferred_element_type=jnp.float32) + b_ref[...]
            if fused_residual:
                acc, res = y[:, :Cp], y[:, Cp:]              # main conv | residual conv
            else:
                acc, res = y, h_in                           # nn.Identity residual
            # One-pass LayerNorm stats over the REAL channel count (f32).
            s1 = jnp.sum(acc, axis=-1, keepdims=True)
            s2 = jnp.sum(acc * acc, axis=-1, keepdims=True)
            mu = s1 * inv_c
            var = jnp.maximum(s2 * inv_c - mu * mu, 0.0)     # clamp rounding negatives
            normed = (acc - mu) * jax.lax.rsqrt(var + LN_EPS)
            normed = normed * g_ref[...] + beta_ref[...]
            out = jnp.maximum(normed + res, 0.0)             # nn.ReLU (f32)
            if mask_time_pad and pad_rows is not None:
                out = jnp.where(pad_rows, 0.0, out)          # keep padded rows zero
            return out

        h = conv_ln_relu(h, w1_ref, b1_ref, g1_ref, be1_ref, fused_flags[0], True)
        h = conv_ln_relu(h, w2_ref, b2_ref, g2_ref, be2_ref, fused_flags[1], True)
        # Last layer: padded time rows are sliced off in the wrapper -> no mask.
        h = conv_ln_relu(h, w3_ref, b3_ref, g3_ref, be3_ref, fused_flags[2], False)

        out_ref[...] = h.reshape(BT, T, Cp)

    def _invariant_spec(shape):
        # Weights / bias / gamma / beta: index_map is constant across the grid,
        # single-buffer them to free VMEM for a larger activation tile.
        if single_buffer_weights:
            return pl.BlockSpec(shape, lambda i: (0, 0),
                                pipeline_mode=pl.Buffered(1))
        return pl.BlockSpec(shape, lambda i: (0, 0))

    in_specs = [pl.BlockSpec((BT, T, Cp), lambda i: (i, 0, 0))]
    in_specs += [_invariant_spec(a.shape) for a in packed]

    return pl.pallas_call(
        kernel,
        out_shape=jax.ShapeDtypeStruct((B, T, Cp), jnp.float32),
        grid=(nb,),
        in_specs=in_specs,
        out_specs=pl.BlockSpec((BT, T, Cp), lambda i: (i, 0, 0)),
        compiler_params=pltpu.CompilerParams(
            dimension_semantics=("parallel",),
            vmem_limit_bytes=vmem_limit_bytes),
    )(x_padded, *packed)


# -----------------------------------------------------------------------------
# Parameters (synthetic, matching the PyTorch module structure)
# -----------------------------------------------------------------------------
def init_tcn_params(key, in_dim, out_dim):
    """Layer 1 has a real residual Conv1d (in_dim != out_dim); layers 2/3 use
    nn.Identity residuals. LayerNorm init: weight=1, bias=0."""
    params = []
    dims = [(in_dim, out_dim), (out_dim, out_dim), (out_dim, out_dim)]
    for ci, co in dims:
        key, k1, k2, k3, k4 = jax.random.split(key, 5)
        bound = 1.0 / math.sqrt(ci * 3)   # Conv1d default init bound
        p = dict(
            wc=jax.random.uniform(k1, (3, ci, co), jnp.float32, -bound, bound),
            bc=jax.random.uniform(k2, (co,), jnp.float32, -bound, bound),
            gamma=jnp.ones((co,), jnp.float32),
            beta=jnp.zeros((co,), jnp.float32),
        )
        if ci != co:  # residual_layer = Conv1d(ci, co, k=3, s=1, p=1)
            p['wr'] = jax.random.uniform(k3, (3, ci, co), jnp.float32, -bound, bound)
            p['br'] = jax.random.uniform(k4, (co,), jnp.float32, -bound, bound)
        params.append(p)
    return params


def pack_tcn_params(params, cp):
    """Lane-pad weights to cp channels, flatten the 3 taps into K, cast to bf16.
    Layers with a real residual conv get it fused along the output axis."""
    packed = []
    for p in params:
        ci, co = p['wc'].shape[1], p['wc'].shape[2]
        n = 2 * cp if 'wr' in p else cp
        w = jnp.zeros((3, cp, n), jnp.float32).at[:, :ci, :co].set(p['wc'])
        b = jnp.zeros((1, n), jnp.float32).at[0, :co].set(p['bc'])
        if 'wr' in p:
            w = w.at[:, :ci, cp:cp + co].set(p['wr'])
            b = b.at[0, cp:cp + co].set(p['br'])
        g = jnp.zeros((1, cp), jnp.float32).at[0, :co].set(p['gamma'])
        be = jnp.zeros((1, cp), jnp.float32).at[0, :co].set(p['beta'])
        packed += [w.reshape(3 * cp, n).astype(jnp.bfloat16), b, g, be]
    return packed


# -----------------------------------------------------------------------------
# Generation-aware tiling
# -----------------------------------------------------------------------------
def _vmem_capacity_bytes():
    try:
        info = pltpu.get_tpu_info()
        for attr in ("vmem_capacity_bytes", "vmem_size_bytes", "vmem_bytes"):
            v = getattr(info, attr, None)
            if v:
                return int(v)
    except Exception:
        pass
    return 64 * 1024 * 1024   # conservative default (v7x per-TensorCore VMEM)


def _pick_block_b(batch, t_pad, cp, weights_bytes, vmem_cap):
    # Per-grid-step VMEM: double-buffered bf16 input + f32 output blocks plus
    # in-kernel intermediates (bf16 im2col, f32 matmul/LN buffers) ~= 48 B per
    # (row, padded channel); weights budgeted twice in case single-buffering
    # falls back to the default.
    budget = max(int(vmem_cap * 0.4) - 2 * weights_bytes, 1 << 20)
    row_cap = int(min(8192, max(t_pad, budget // (48 * cp))))
    fitting = [d for d in range(1, batch + 1)
               if batch % d == 0 and d * t_pad <= row_cap]
    block_b = max(fitting) if fitting else 1
    # Prefer >=2 grid steps so the 'parallel' axis can shard over v7x's two
    # TensorCores, as long as the tile still has >=1024 rows to feed the MXU.
    multi = [d for d in fitting if batch // d >= 2]
    if multi and max(multi) * t_pad >= 1024:
        block_b = max(multi)
    return block_b


# -----------------------------------------------------------------------------
# Forward pass (matches TCN.forward)
# -----------------------------------------------------------------------------
def tcn_forward(params, spectrogram, style_embed, time_steps=None):
    """spectrogram: (B, C_spec, T); style_embed: (B, C_style) -> (B, out_dim, T)."""
    B, c_spec, T = spectrogram.shape
    c_style = style_embed.shape[1]
    in_dim = c_spec + c_style
    out_dim = params[0]['wc'].shape[2]
    cp = max(_round_up(in_dim, LANE), _round_up(out_dim, LANE))
    t_pad = _round_up(T, TIME_PAD)

    # self.dropout(spectrogram): identity in eval mode.
    # TODO(synk): training-mode Dropout(0.1) (stochastic) not implemented.
    style = jnp.broadcast_to(style_embed[:, :, None], (B, c_style, T))
    x = jnp.concatenate([spectrogram, style], axis=1)            # (B, in_dim, T)
    x = jnp.transpose(x, (0, 2, 1)).astype(jnp.bfloat16)         # bf16 staging buffer
    x = jnp.pad(x, ((0, 0), (0, t_pad - T), (0, cp - in_dim)))   # lane/sublane pad
    # TODO(synk): for very small channel counts, pass the un-padded (B, T, in_dim)
    # array with a full-extent block and pad inside the kernel to cut HBM bytes.

    packed = pack_tcn_params(params, cp)
    fused_flags = tuple('wr' in p for p in params)

    vmem_cap = _vmem_capacity_bytes()
    vmem_limit = max(32 * 1024 * 1024, int(vmem_cap * 3 // 4))
    weights_bytes = sum(int(a.size) * a.dtype.itemsize for a in packed)
    block_b = _pick_block_b(B, t_pad, cp, weights_bytes, vmem_cap)

    kwargs = dict(c_out_real=out_dim, t_real=T, block_b=block_b,
                  fused_flags=fused_flags, vmem_limit_bytes=vmem_limit)
    try:
        y = tcn_pallas(x, packed, single_buffer_weights=True, **kwargs)
    except Exception:
        # pipeline_mode=pl.Buffered(1) unsupported on this jax version: fall back.
        y = tcn_pallas(x, packed, single_buffer_weights=False, **kwargs)

    x1 = jnp.transpose(y[:, :T, :out_dim], (0, 2, 1))            # (B, out_dim, T)
    if time_steps is not None:
        # F.interpolate(mode='linear', align_corners=False) == half-pixel linear
        # resize; plain-JAX glue, not part of the hot path.
        x1 = jax.image.resize(x1, (B, out_dim, time_steps), method="linear")
    return x1


# -----------------------------------------------------------------------------
# Plain-JAX reference (for self-check). Mirrors the kernel's numeric contract
# (bf16 matmul operands, f32 accumulation / LayerNorm / residual / ReLU); the
# structural math (conv / LN / residual / ReLU order) is exactly the module's.
# -----------------------------------------------------------------------------
def _ref_conv_norm_relu(x, p):
    B, T, _ = x.shape
    xb = x.astype(jnp.bfloat16)
    xpad = jnp.pad(xb, ((0, 0), (1, 1), (0, 0)))

    def conv(w, b):
        wb = w.astype(jnp.bfloat16)
        return sum(jnp.einsum('btc,cd->btd', xpad[:, k:k + T], wb[k],
                              preferred_element_type=jnp.float32)
                   for k in range(3)) + b

    acc = conv(p['wc'], p['bc'])
    mu = acc.mean(-1, keepdims=True)
    var = ((acc - mu) ** 2).mean(-1, keepdims=True)
    normed = (acc - mu) / jnp.sqrt(var + LN_EPS) * p['gamma'] + p['beta']
    res = conv(p['wr'], p['br']) if 'wr' in p else x
    return jnp.maximum(normed + res, 0.0)


if __name__ == "__main__":
    key = jax.random.PRNGKey(0)
    B, C_spec, C_style, T = 2, 8, 8, 16
    in_dim, out_dim = C_spec + C_style, 32

    k_spec, k_style, k_params = jax.random.split(key, 3)
    spectrogram = jax.random.normal(k_spec, (B, C_spec, T), jnp.float32)
    style_embed = jax.random.normal(k_style, (B, C_style), jnp.float32)
    params = init_tcn_params(k_params, in_dim, out_dim)

    out = jax.block_until_ready(tcn_forward(params, spectrogram, style_embed))
    assert out.shape == (B, out_dim, T), out.shape

    # Self-check against the plain-JAX reference of the same math/precision.
    x = jnp.concatenate(
        [spectrogram, jnp.broadcast_to(style_embed[:, :, None], (B, C_style, T))],
        axis=1)
    x = jnp.transpose(x, (0, 2, 1))
    for p in params:
        x = _ref_conv_norm_relu(x, p)
    ref = jnp.transpose(x, (0, 2, 1))
    err = float(jnp.max(jnp.abs(out - ref)))
    assert jnp.allclose(out, ref, atol=3e-2, rtol=3e-2), f"max abs err {err}"

    print("KERNEL_OK")
</pallas_src>

<mosaic_0001>
module attributes {stable_mosaic.version = 11 : i64} {
  func.func @kernel(%arg0: i32, %arg1: memref<2x16x128xbf16, #tpu.memory_space<vmem>>, %arg2: memref<384x256xbf16, #tpu.memory_space<vmem>>, %arg3: memref<1x256xf32, #tpu.memory_space<vmem>>, %arg4: memref<1x128xf32, #tpu.memory_space<vmem>>, %arg5: memref<1x128xf32, #tpu.memory_space<vmem>>, %arg6: memref<384x128xbf16, #tpu.memory_space<vmem>>, %arg7: memref<1x128xf32, #tpu.memory_space<vmem>>, %arg8: memref<1x128xf32, #tpu.memory_space<vmem>>, %arg9: memref<1x128xf32, #tpu.memory_space<vmem>>, %arg10: memref<384x128xbf16, #tpu.memory_space<vmem>>, %arg11: memref<1x128xf32, #tpu.memory_space<vmem>>, %arg12: memref<1x128xf32, #tpu.memory_space<vmem>>, %arg13: memref<1x128xf32, #tpu.memory_space<vmem>>, %arg14: memref<2x16x128xf32, #tpu.memory_space<vmem>>) attributes {dimension_semantics = [#tpu.dimension_semantics<parallel>], iteration_bounds = array<i64: 1>, scalar_prefetch = 0 : i64, scratch_operands = 0 : i64, tpu.core_type = #tpu.core_type<tc>, window_params = [{transform_indices = @transform_0, window_bounds = array<i64: 2, 16, 128>}, {pipeline_mode = #tpu.pipeline_mode<synchronous>, transform_indices = @transform_1, window_bounds = array<i64: 384, 256>}, {pipeline_mode = #tpu.pipeline_mode<synchronous>, transform_indices = @transform_2, window_bounds = array<i64: 1, 256>}, {pipeline_mode = #tpu.pipeline_mode<synchronous>, transform_indices = @transform_3, window_bounds = array<i64: 1, 128>}, {pipeline_mode = #tpu.pipeline_mode<synchronous>, transform_indices = @transform_4, window_bounds = array<i64: 1, 128>}, {pipeline_mode = #tpu.pipeline_mode<synchronous>, transform_indices = @transform_5, window_bounds = array<i64: 384, 128>}, {pipeline_mode = #tpu.pipeline_mode<synchronous>, transform_indices = @transform_6, window_bounds = array<i64: 1, 128>}, {pipeline_mode = #tpu.pipeline_mode<synchronous>, transform_indices = @transform_7, window_bounds = array<i64: 1, 128>}, {pipeline_mode = #tpu.pipeline_mode<synchronous>, transform_indices = @transform_8, window_bounds = array<i64: 1, 128>}, {pipeline_mode = #tpu.pipeline_mode<synchronous>, transform_indices = @transform_9, window_bounds = array<i64: 384, 128>}, {pipeline_mode = #tpu.pipeline_mode<synchronous>, transform_indices = @transform_10, window_bounds = array<i64: 1, 128>}, {pipeline_mode = #tpu.pipeline_mode<synchronous>, transform_indices = @transform_11, window_bounds = array<i64: 1, 128>}, {pipeline_mode = #tpu.pipeline_mode<synchronous>, transform_indices = @transform_12, window_bounds = array<i64: 1, 128>}, {transform_indices = @transform_13, window_bounds = array<i64: 2, 16, 128>}]} {
    %c0 = arith.constant 0 : index
    %c0_0 = arith.constant 0 : index
    %c0_1 = arith.constant 0 : index
    %0 = vector.load %arg1[%c0, %c0_0, %c0_1] : memref<2x16x128xbf16, #tpu.memory_space<vmem>>, vector<2x16x128xbf16>
    %1 = vector.shape_cast %0 : vector<2x16x128xbf16> to vector<32x128xbf16>
    %2 = tpu.iota {dimensions = array<i32: 0>} : vector<32x1xi32>
    %c16_i32 = arith.constant 16 : i32
    %c0_i32 = arith.constant 0 : i32
    %3 = arith.cmpi eq, %c16_i32, %c0_i32 : i32
    %c1_i32 = arith.constant 1 : i32
    %4 = arith.select %3, %c1_i32, %c16_i32 : i32
    %5 = vector.broadcast %4 : i32 to vector<32x1xi32>
    %6 = arith.remsi %2, %5 : vector<32x1xi32>
    %c0_i32_2 = arith.constant 0 : i32
    %7 = vector.broadcast %c0_i32_2 : i32 to vector<32x1xi32>
    %8 = arith.cmpi ne, %6, %7 : vector<32x1xi32>
    %c0_i32_3 = arith.constant 0 : i32
    %9 = vector.broadcast %c0_i32_3 : i32 to vector<32x1xi32>
    %10 = arith.cmpi slt, %6, %9 : vector<32x1xi32>
    %c0_i32_4 = arith.constant 0 : i32
    %11 = arith.cmpi slt, %4, %c0_i32_4 : i32
    %12 = vector.broadcast %11 : i1 to vector<32x1xi1>
    %13 = vector.broadcast %12 : vector<32x1xi1> to vector<32x1xi1>
    %14 = arith.xori %10, %13 : vector<32x1xi1>
    %15 = arith.andi %14, %8 : vector<32x1xi1>
    %16 = vector.broadcast %4 : i32 to vector<32x1xi32>
    %17 = arith.addi %6, %16 : vector<32x1xi32>
    %18 = arith.select %15, %17, %6 : vector<32x1xi1>, vector<32x1xi32>
    %c0_i32_5 = arith.constant 0 : i32
    %19 = vector.broadcast %c0_i32_5 : i32 to vector<32x1xi32>
    %20 = arith.cmpi eq, %18, %19 : vector<32x1xi32>
    %c15_i32 = arith.constant 15 : i32
    %21 = vector.broadcast %c15_i32 : i32 to vector<32x1xi32>
    %22 = arith.cmpi eq, %18, %21 : vector<32x1xi32>
    %cst = arith.constant 0.000000e+00 : bf16
    %23 = vector.broadcast %cst : bf16 to vector<1x128xbf16>
    %24 = vector.extract_strided_slice %1 {offsets = [0, 0], sizes = [31, 128], strides = [1, 1]} : vector<32x128xbf16> to vector<31x128xbf16>
    %25 = tpu.concatenate %23, %24 in 0 : vector<1x128xbf16>, vector<31x128xbf16> -> vector<32x128xbf16>
    %26 = vector.extract_strided_slice %1 {offsets = [1, 0], sizes = [31, 128], strides = [1, 1]} : vector<32x128xbf16> to vector<31x128xbf16>
    %27 = tpu.concatenate %26, %23 in 0 : vector<31x128xbf16>, vector<1x128xbf16> -> vector<32x128xbf16>
    %c0_i32_6 = arith.constant 0 : i32
    %28 = arith.sitofp %c0_i32_6 : i32 to bf16
    %29 = vector.shape_cast %20 : vector<32x1xi1> to vector<32x1xi1>
    %30 = vector.broadcast %29 : vector<32x1xi1> to vector<32x128xi1>
    %31 = vector.broadcast %28 : bf16 to vector<32x128xbf16>
    %32 = arith.select %30, %31, %25 : vector<32x128xi1>, vector<32x128xbf16>
    %c0_i32_7 = arith.constant 0 : i32
    %33 = arith.sitofp %c0_i32_7 : i32 to bf16
    %34 = vector.shape_cast %22 : vector<32x1xi1> to vector<32x1xi1>
    %35 = vector.broadcast %34 : vector<32x1xi1> to vector<32x128xi1>
    %36 = vector.broadcast %33 : bf16 to vector<32x128xbf16>
    %37 = arith.select %35, %36, %27 : vector<32x128xi1>, vector<32x128xbf16>
    %38 = tpu.concatenate %32, %1, %37 in 1 : vector<32x128xbf16>, vector<32x128xbf16>, vector<32x128xbf16> -> vector<32x384xbf16>
    %c0_8 = arith.constant 0 : index
    %c0_9 = arith.constant 0 : index
    %39 = vector.load %arg2[%c0_8, %c0_9] : memref<384x256xbf16, #tpu.memory_space<vmem>>, vector<384x256xbf16>
    %cst_10 = arith.constant dense<0.000000e+00> : vector<32x256xf32>
    %40 = tpu.matmul %38, %39, %cst_10 {dimension_numbers = #tpu.dot_dimension_numbers<[1], [0], [0], [1], [0, 0, 1, 1], [], []>} : vector<32x384xbf16>, vector<384x256xbf16>, vector<32x256xf32> -> vector<32x256xf32>
    %c0_11 = arith.constant 0 : index
    %c0_12 = arith.constant 0 : index
    %41 = vector.load %arg3[%c0_11, %c0_12] : memref<1x256xf32, #tpu.memory_space<vmem>>, vector<1x256xf32>
    %42 = vector.broadcast %41 : vector<1x256xf32> to vector<32x256xf32>
    %43 = arith.addf %40, %42 : vector<32x256xf32>
    %44 = vector.extract_strided_slice %43 {offsets = [0, 0], sizes = [32, 128], strides = [1, 1]} : vector<32x256xf32> to vector<32x128xf32>
    %45 = vector.extract_strided_slice %43 {offsets = [0, 128], sizes = [32, 128], strides = [1, 1]} : vector<32x256xf32> to vector<32x128xf32>
    %cst_13 = arith.constant dense<0.000000e+00> : vector<32xf32>
    %46 = vector.multi_reduction <add>, %44, %cst_13 [1] : vector<32x128xf32> to vector<32xf32>
    %47 = vector.shape_cast %46 : vector<32xf32> to vector<32x1xf32>
    %48 = arith.mulf %44, %44 : vector<32x128xf32>
    %cst_14 = arith.constant dense<0.000000e+00> : vector<32xf32>
    %49 = vector.multi_reduction <add>, %48, %cst_14 [1] : vector<32x128xf32> to vector<32xf32>
    %50 = vector.shape_cast %49 : vector<32xf32> to vector<32x1xf32>
    %cst_15 = arith.constant 3.125000e-02 : f32
    %51 = vector.broadcast %cst_15 : f32 to vector<32x1xf32>
    %52 = arith.mulf %47, %51 : vector<32x1xf32>
    %cst_16 = arith.constant 3.125000e-02 : f32
    %53 = vector.broadcast %cst_16 : f32 to vector<32x1xf32>
    %54 = arith.mulf %50, %53 : vector<32x1xf32>
    %55 = arith.mulf %52, %52 : vector<32x1xf32>
    %56 = arith.subf %54, %55 : vector<32x1xf32>
    %cst_17 = arith.constant 0.000000e+00 : f32
    %57 = vector.broadcast %cst_17 : f32 to vector<32x1xf32>
    %58 = arith.maximumf %56, %57 : vector<32x1xf32>
    %59 = vector.broadcast %52 : vector<32x1xf32> to vector<32x128xf32>
    %60 = arith.subf %44, %59 : vector<32x128xf32>
    %cst_18 = arith.constant 9.99999974E-6 : f32
    %61 = vector.broadcast %cst_18 : f32 to vector<32x1xf32>
    %62 = arith.addf %58, %61 : vector<32x1xf32>
    %63 = math.rsqrt %62 : vector<32x1xf32>
    %64 = vector.broadcast %63 : vector<32x1xf32> to vector<32x128xf32>
    %65 = arith.mulf %60, %64 : vector<32x128xf32>
    %c0_19 = arith.constant 0 : index
    %c0_20 = arith.constant 0 : index
    %66 = vector.load %arg4[%c0_19, %c0_20] : memref<1x128xf32, #tpu.memory_space<vmem>>, vector<1x128xf32>
    %67 = vector.broadcast %66 : vector<1x128xf32> to vector<32x128xf32>
    %68 = arith.mulf %65, %67 : vector<32x128xf32>
    %c0_21 = arith.constant 0 : index
    %c0_22 = arith.constant 0 : index
    %69 = vector.load %arg5[%c0_21, %c0_22] : memref<1x128xf32, #tpu.memory_space<vmem>>, vector<1x128xf32>
    %70 = vector.broadcast %69 : vector<1x128xf32> to vector<32x128xf32>
    %71 = arith.addf %68, %70 : vector<32x128xf32>
    %72 = arith.addf %71, %45 : vector<32x128xf32>
    %cst_23 = arith.constant 0.000000e+00 : f32
    %73 = vector.broadcast %cst_23 : f32 to vector<32x128xf32>
    %74 = arith.maximumf %72, %73 : vector<32x128xf32>
    %75 = arith.truncf %74 : vector<32x128xf32> to vector<32x128xbf16>
    %76 = vector.extract_strided_slice %75 {offsets = [0, 0], sizes = [31, 128], strides = [1, 1]} : vector<32x128xbf16> to vector<31x128xbf16>
    %77 = tpu.concatenate %23, %76 in 0 : vector<1x128xbf16>, vector<31x128xbf16> -> vector<32x128xbf16>
    %78 = vector.extract_strided_slice %75 {offsets = [1, 0], sizes = [31, 128], strides = [1, 1]} : vector<32x128xbf16> to vector<31x128xbf16>
    %79 = tpu.concatenate %78, %23 in 0 : vector<31x128xbf16>, vector<1x128xbf16> -> vector<32x128xbf16>
    %c0_i32_24 = arith.constant 0 : i32
    %80 = arith.sitofp %c0_i32_24 : i32 to bf16
    %81 = vector.shape_cast %20 : vector<32x1xi1> to vector<32x1xi1>
    %82 = vector.broadcast %81 : vector<32x1xi1> to vector<32x128xi1>
    %83 = vector.broadcast %80 : bf16 to vector<32x128xbf16>
    %84 = arith.select %82, %83, %77 : vector<32x128xi1>, vector<32x128xbf16>
    %c0_i32_25 = arith.constant 0 : i32
    %85 = arith.sitofp %c0_i32_25 : i32 to bf16
    %86 = vector.shape_cast %22 : vector<32x1xi1> to vector<32x1xi1>
    %87 = vector.broadcast %86 : vector<32x1xi1> to vector<32x128xi1>
    %88 = vector.broadcast %85 : bf16 to vector<32x128xbf16>
    %89 = arith.select %87, %88, %79 : vector<32x128xi1>, vector<32x128xbf16>
    %90 = tpu.concatenate %84, %75, %89 in 1 : vector<32x128xbf16>, vector<32x128xbf16>, vector<32x128xbf16> -> vector<32x384xbf16>
    %c0_26 = arith.constant 0 : index
    %c0_27 = arith.constant 0 : index
    %91 = vector.load %arg6[%c0_26, %c0_27] : memref<384x128xbf16, #tpu.memory_space<vmem>>, vector<384x128xbf16>
    %cst_28 = arith.constant dense<0.000000e+00> : vector<32x128xf32>
    %92 = tpu.matmul %90, %91, %cst_28 {dimension_numbers = #tpu.dot_dimension_numbers<[1], [0], [0], [1], [0, 0, 1, 1], [], []>} : vector<32x384xbf16>, vector<384x128xbf16>, vector<32x128xf32> -> vector<32x128xf32>
    %c0_29 = arith.constant 0 : index
    %c0_30 = arith.constant 0 : index
    %93 = vector.load %arg7[%c0_29, %c0_30] : memref<1x128xf32, #tpu.memory_space<vmem>>, vector<1x128xf32>
    %94 = vector.broadcast %93 : vector<1x128xf32> to vector<32x128xf32>
    %95 = arith.addf %92, %94 : vector<32x128xf32>
    %cst_31 = arith.constant dense<0.000000e+00> : vector<32xf32>
    %96 = vector.multi_reduction <add>, %95, %cst_31 [1] : vector<32x128xf32> to vector<32xf32>
    %97 = vector.shape_cast %96 : vector<32xf32> to vector<32x1xf32>
    %98 = arith.mulf %95, %95 : vector<32x128xf32>
    %cst_32 = arith.constant dense<0.000000e+00> : vector<32xf32>
    %99 = vector.multi_reduction <add>, %98, %cst_32 [1] : vector<32x128xf32> to vector<32xf32>
    %100 = vector.shape_cast %99 : vector<32xf32> to vector<32x1xf32>
    %cst_33 = arith.constant 3.125000e-02 : f32
    %101 = vector.broadcast %cst_33 : f32 to vector<32x1xf32>
    %102 = arith.mulf %97, %101 : vector<32x1xf32>
    %cst_34 = arith.constant 3.125000e-02 : f32
    %103 = vector.broadcast %cst_34 : f32 to vector<32x1xf32>
    %104 = arith.mulf %100, %103 : vector<32x1xf32>
    %105 = arith.mulf %102, %102 : vector<32x1xf32>
    %106 = arith.subf %104, %105 : vector<32x1xf32>
    %cst_35 = arith.constant 0.000000e+00 : f32
    %107 = vector.broadcast %cst_35 : f32 to vector<32x1xf32>
    %108 = arith.maximumf %106, %107 : vector<32x1xf32>
    %109 = vector.broadcast %102 : vector<32x1xf32> to vector<32x128xf32>
    %110 = arith.subf %95, %109 : vector<32x128xf32>
    %cst_36 = arith.constant 9.99999974E-6 : f32
    %111 = vector.broadcast %cst_36 : f32 to vector<32x1xf32>
    %112 = arith.addf %108, %111 : vector<32x1xf32>
    %113 = math.rsqrt %112 : vector<32x1xf32>
    %114 = vector.broadcast %113 : vector<32x1xf32> to vector<32x128xf32>
    %115 = arith.mulf %110, %114 : vector<32x128xf32>
    %c0_37 = arith.constant 0 : index
    %c0_38 = arith.constant 0 : index
    %116 = vector.load %arg8[%c0_37, %c0_38] : memref<1x128xf32, #tpu.memory_space<vmem>>, vector<1x128xf32>
    %117 = vector.broadcast %116 : vector<1x128xf32> to vector<32x128xf32>
    %118 = arith.mulf %115, %117 : vector<32x128xf32>
    %c0_39 = arith.constant 0 : index
    %c0_40 = arith.constant 0 : index
    %119 = vector.load %arg9[%c0_39, %c0_40] : memref<1x128xf32, #tpu.memory_space<vmem>>, vector<1x128xf32>
    %120 = vector.broadcast %119 : vector<1x128xf32> to vector<32x128xf32>
    %121 = arith.addf %118, %120 : vector<32x128xf32>
    %122 = arith.addf %121, %74 : vector<32x128xf32>
    %cst_41 = arith.constant 0.000000e+00 : f32
    %123 = vector.broadcast %cst_41 : f32 to vector<32x128xf32>
    %124 = arith.maximumf %122, %123 : vector<32x128xf32>
    %125 = arith.truncf %124 : vector<32x128xf32> to vector<32x128xbf16>
    %126 = vector.extract_strided_slice %125 {offsets = [0, 0], sizes = [31, 128], strides = [1, 1]} : vector<32x128xbf16> to vector<31x128xbf16>
    %127 = tpu.concatenate %23, %126 in 0 : vector<1x128xbf16>, vector<31x128xbf16> -> vector<32x128xbf16>
    %128 = vector.extract_strided_slice %125 {offsets = [1, 0], sizes = [31, 128], strides = [1, 1]} : vector<32x128xbf16> to vector<31x128xbf16>
    %129 = tpu.concatenate %128, %23 in 0 : vector<31x128xbf16>, vector<1x128xbf16> -> vector<32x128xbf16>
    %c0_i32_42 = arith.constant 0 : i32
    %130 = arith.sitofp %c0_i32_42 : i32 to bf16
    %131 = vector.shape_cast %20 : vector<32x1xi1> to vector<32x1xi1>
    %132 = vector.broadcast %131 : vector<32x1xi1> to vector<32x128xi1>
    %133 = vector.broadcast %130 : bf16 to vector<32x128xbf16>
    %134 = arith.select %132, %133, %127 : vector<32x128xi1>, vector<32x128xbf16>
    %c0_i32_43 = arith.constant 0 : i32
    %135 = arith.sitofp %c0_i32_43 : i32 to bf16
    %136 = vector.shape_cast %22 : vector<32x1xi1> to vector<32x1xi1>
    %137 = vector.broadcast %136 : vector<32x1xi1> to vector<32x128xi1>
    %138 = vector.broadcast %135 : bf16 to vector<32x128xbf16>
    %139 = arith.select %137, %138, %129 : vector<32x128xi1>, vector<32x128xbf16>
    %140 = tpu.concatenate %134, %125, %139 in 1 : vector<32x128xbf16>, vector<32x128xbf16>, vector<32x128xbf16> -> vector<32x384xbf16>
    %c0_44 = arith.constant 0 : index
    %c0_45 = arith.constant 0 : index
    %141 = vector.load %arg10[%c0_44, %c0_45] : memref<384x128xbf16, #tpu.memory_space<vmem>>, vector<384x128xbf16>
    %cst_46 = arith.constant dense<0.000000e+00> : vector<32x128xf32>
    %142 = tpu.matmul %140, %141, %cst_46 {dimension_numbers = #tpu.dot_dimension_numbers<[1], [0], [0], [1], [0, 0, 1, 1], [], []>} : vector<32x384xbf16>, vector<384x128xbf16>, vector<32x128xf32> -> vector<32x128xf32>
    %c0_47 = arith.constant 0 : index
    %c0_48 = arith.constant 0 : index
    %143 = vector.load %arg11[%c0_47, %c0_48] : memref<1x128xf32, #tpu.memory_space<vmem>>, vector<1x128xf32>
    %144 = vector.broadcast %143 : vector<1x128xf32> to vector<32x128xf32>
    %145 = arith.addf %142, %144 : vector<32x128xf32>
    %cst_49 = arith.constant dense<0.000000e+00> : vector<32xf32>
    %146 = vector.multi_reduction <add>, %145, %cst_49 [1] : vector<32x128xf32> to vector<32xf32>
    %147 = vector.shape_cast %146 : vector<32xf32> to vector<32x1xf32>
    %148 = arith.mulf %145, %145 : vector<32x128xf32>
    %cst_50 = arith.constant dense<0.000000e+00> : vector<32xf32>
    %149 = vector.multi_reduction <add>, %148, %cst_50 [1] : vector<32x128xf32> to vector<32xf32>
    %150 = vector.shape_cast %149 : vector<32xf32> to vector<32x1xf32>
    %cst_51 = arith.constant 3.125000e-02 : f32
    %151 = vector.broadcast %cst_51 : f32 to vector<32x1xf32>
    %152 = arith.mulf %147, %151 : vector<32x1xf32>
    %cst_52 = arith.constant 3.125000e-02 : f32
    %153 = vector.broadcast %cst_52 : f32 to vector<32x1xf32>
    %154 = arith.mulf %150, %153 : vector<32x1xf32>
    %155 = arith.mulf %152, %152 : vector<32x1xf32>
    %156 = arith.subf %154, %155 : vector<32x1xf32>
    %cst_53 = arith.constant 0.000000e+00 : f32
    %157 = vector.broadcast %cst_53 : f32 to vector<32x1xf32>
    %158 = arith.maximumf %156, %157 : vector<32x1xf32>
    %159 = vector.broadcast %152 : vector<32x1xf32> to vector<32x128xf32>
    %160 = arith.subf %145, %159 : vector<32x128xf32>
    %cst_54 = arith.constant 9.99999974E-6 : f32
    %161 = vector.broadcast %cst_54 : f32 to vector<32x1xf32>
    %162 = arith.addf %158, %161 : vector<32x1xf32>
    %163 = math.rsqrt %162 : vector<32x1xf32>
    %164 = vector.broadcast %163 : vector<32x1xf32> to vector<32x128xf32>
    %165 = arith.mulf %160, %164 : vector<32x128xf32>
    %c0_55 = arith.constant 0 : index
    %c0_56 = arith.constant 0 : index
    %166 = vector.load %arg12[%c0_55, %c0_56] : memref<1x128xf32, #tpu.memory_space<vmem>>, vector<1x128xf32>
    %167 = vector.broadcast %166 : vector<1x128xf32> to vector<32x128xf32>
    %168 = arith.mulf %165, %167 : vector<32x128xf32>
    %c0_57 = arith.constant 0 : index
    %c0_58 = arith.constant 0 : index
    %169 = vector.load %arg13[%c0_57, %c0_58] : memref<1x128xf32, #tpu.memory_space<vmem>>, vector<1x128xf32>
    %170 = vector.broadcast %169 : vector<1x128xf32> to vector<32x128xf32>
    %171 = arith.addf %168, %170 : vector<32x128xf32>
    %172 = arith.addf %171, %124 : vector<32x128xf32>
    %cst_59 = arith.constant 0.000000e+00 : f32
    %173 = vector.broadcast %cst_59 : f32 to vector<32x128xf32>
    %174 = arith.maximumf %172, %173 : vector<32x128xf32>
    %175 = vector.shape_cast %174 : vector<32x128xf32> to vector<2x16x128xf32>
    %c0_60 = arith.constant 0 : index
    %c0_61 = arith.constant 0 : index
    %c0_62 = arith.constant 0 : index
    %176 = vector.load %arg14[%c0_60, %c0_61, %c0_62] : memref<2x16x128xf32, #tpu.memory_space<vmem>>, vector<2x16x128xf32>
    tpu.vector_store %arg14[%c0_60, %c0_61, %c0_62], %175 {strides = array<i32>} : memref<2x16x128xf32, #tpu.memory_space<vmem>>, vector<2x16x128xf32>,
    return
  }
  func.func @transform_0(%arg0: i32) -> (i32, i32, i32) {
    %c0_i32 = arith.constant 0 : i32
    %c0_i32_0 = arith.constant 0 : i32
    %c0_i32_1 = arith.constant 0 : i32
    return %arg0, %c0_i32, %c0_i32_0 : i32, i32, i32
  }
  func.func @transform_1(%arg0: i32) -> (i32, i32) {
    %c0_i32 = arith.constant 0 : i32
    %c0_i32_0 = arith.constant 0 : i32
    %c0_i32_1 = arith.constant 0 : i32
    return %c0_i32, %c0_i32_0 : i32, i32
  }
  func.func @transform_2(%arg0: i32) -> (i32, i32) {
    %c0_i32 = arith.constant 0 : i32
    %c0_i32_0 = arith.constant 0 : i32
    %c0_i32_1 = arith.constant 0 : i32
    return %c0_i32, %c0_i32_0 : i32, i32
  }
  func.func @transform_3(%arg0: i32) -> (i32, i32) {
    %c0_i32 = arith.constant 0 : i32
    %c0_i32_0 = arith.constant 0 : i32
    %c0_i32_1 = arith.constant 0 : i32
    return %c0_i32, %c0_i32_0 : i32, i32
  }
  func.func @transform_4(%arg0: i32) -> (i32, i32) {
    %c0_i32 = arith.constant 0 : i32
    %c0_i32_0 = arith.constant 0 : i32
    %c0_i32_1 = arith.constant 0 : i32
    return %c0_i32, %c0_i32_0 : i32, i32
  }
  func.func @transform_5(%arg0: i32) -> (i32, i32) {
    %c0_i32 = arith.constant 0 : i32
    %c0_i32_0 = arith.constant 0 : i32
    %c0_i32_1 = arith.constant 0 : i32
    return %c0_i32, %c0_i32_0 : i32, i32
  }
  func.func @transform_6(%arg0: i32) -> (i32, i32) {
    %c0_i32 = arith.constant 0 : i32
    %c0_i32_0 = arith.constant 0 : i32
    %c0_i32_1 = arith.constant 0 : i32
    return %c0_i32, %c0_i32_0 : i32, i32
  }
  func.func @transform_7(%arg0: i32) -> (i32, i32) {
    %c0_i32 = arith.constant 0 : i32
    %c0_i32_0 = arith.constant 0 : i32
    %c0_i32_1 = arith.constant 0 : i32
    return %c0_i32, %c0_i32_0 : i32, i32
  }
  func.func @transform_8(%arg0: i32) -> (i32, i32) {
    %c0_i32 = arith.constant 0 : i32
    %c0_i32_0 = arith.constant 0 : i32
    %c0_i32_1 = arith.constant 0 : i32
    return %c0_i32, %c0_i32_0 : i32, i32
  }
  func.func @transform_9(%arg0: i32) -> (i32, i32) {
    %c0_i32 = arith.constant 0 : i32
    %c0_i32_0 = arith.constant 0 : i32
    %c0_i32_1 = arith.constant 0 : i32
    return %c0_i32, %c0_i32_0 : i32, i32
  }
  func.func @transform_10(%arg0: i32) -> (i32, i32) {
    %c0_i32 = arith.constant 0 : i32
    %c0_i32_0 = arith.constant 0 : i32
    %c0_i32_1 = arith.constant 0 : i32
    return %c0_i32, %c0_i32_0 : i32, i32
  }
  func.func @transform_11(%arg0: i32) -> (i32, i32) {
    %c0_i32 = arith.constant 0 : i32
    %c0_i32_0 = arith.constant 0 : i32
    %c0_i32_1 = arith.constant 0 : i32
    return %c0_i32, %c0_i32_0 : i32, i32
  }
  func.func @transform_12(%arg0: i32) -> (i32, i32) {
    %c0_i32 = arith.constant 0 : i32
    %c0_i32_0 = arith.constant 0 : i32
    %c0_i32_1 = arith.constant 0 : i32
    return %c0_i32, %c0_i32_0 : i32, i32
  }
  func.func @transform_13(%arg0: i32) -> (i32, i32, i32) {
    %c0_i32 = arith.constant 0 : i32
    %c0_i32_0 = arith.constant 0 : i32
    %c0_i32_1 = arith.constant 0 : i32
    return %arg0, %c0_i32, %c0_i32_0 : i32, i32, i32
  }
}

module attributes {stable_mosaic.version = 11 : i64} {
  func.func @kernel(%arg0: i32, %arg1: memref<2x16x128xbf16, #tpu.memory_space<vmem>>, %arg2: memref<384x256xbf16, #tpu.memory_space<vmem>>, %arg3: memref<1x256xf32, #tpu.memory_space<vmem>>, %arg4: memref<1x128xf32, #tpu.memory_space<vmem>>, %arg5: memref<1x128xf32, #tpu.memory_space<vmem>>, %arg6: memref<384x128xbf16, #tpu.memory_space<vmem>>, %arg7: memref<1x128xf32, #tpu.memory_space<vmem>>, %arg8: memref<1x128xf32, #tpu.memory_space<vmem>>, %arg9: memref<1x128xf32, #tpu.memory_space<vmem>>, %arg10: memref<384x128xbf16, #tpu.memory_space<vmem>>, %arg11: memref<1x128xf32, #tpu.memory_space<vmem>>, %arg12: memref<1x128xf32, #tpu.memory_space<vmem>>, %arg13: memref<1x128xf32, #tpu.memory_space<vmem>>, %arg14: memref<2x16x128xf32, #tpu.memory_space<vmem>>) attributes {dimension_semantics = [#tpu.dimension_semantics<parallel>], iteration_bounds = array<i64: 1>, scalar_prefetch = 0 : i64, scratch_operands = 0 : i64, tpu.core_type = #tpu.core_type<tc>, window_params = [{transform_indices = @transform_0, window_bounds = array<i64: 2, 16, 128>}, {pipeline_mode = #tpu.pipeline_mode<synchronous>, transform_indices = @transform_1, window_bounds = array<i64: 384, 256>}, {pipeline_mode = #tpu.pipeline_mode<synchronous>, transform_indices = @transform_2, window_bounds = array<i64: 1, 256>}, {pipeline_mode = #tpu.pipeline_mode<synchronous>, transform_indices = @transform_3, window_bounds = array<i64: 1, 128>}, {pipeline_mode = #tpu.pipeline_mode<synchronous>, transform_indices = @transform_4, window_bounds = array<i64: 1, 128>}, {pipeline_mode = #tpu.pipeline_mode<synchronous>, transform_indices = @transform_5, window_bounds = array<i64: 384, 128>}, {pipeline_mode = #tpu.pipeline_mode<synchronous>, transform_indices = @transform_6, window_bounds = array<i64: 1, 128>}, {pipeline_mode = #tpu.pipeline_mode<synchronous>, transform_indices = @transform_7, window_bounds = array<i64: 1, 128>}, {pipeline_mode = #tpu.pipeline_mode<synchronous>, transform_indices = @transform_8, window_bounds = array<i64: 1, 128>}, {pipeline_mode = #tpu.pipeline_mode<synchronous>, transform_indices = @transform_9, window_bounds = array<i64: 384, 128>}, {pipeline_mode = #tpu.pipeline_mode<synchronous>, transform_indices = @transform_10, window_bounds = array<i64: 1, 128>}, {pipeline_mode = #tpu.pipeline_mode<synchronous>, transform_indices = @transform_11, window_bounds = array<i64: 1, 128>}, {pipeline_mode = #tpu.pipeline_mode<synchronous>, transform_indices = @transform_12, window_bounds = array<i64: 1, 128>}, {transform_indices = @transform_13, window_bounds = array<i64: 2, 16, 128>}]} {
    %c0 = arith.constant 0 : index
    %c0_0 = arith.constant 0 : index
    %c0_1 = arith.constant 0 : index
    %0 = vector.load %arg1[%c0, %c0_0, %c0_1] : memref<2x16x128xbf16, #tpu.memory_space<vmem>>, vector<2x16x128xbf16>
    %1 = vector.shape_cast %0 : vector<2x16x128xbf16> to vector<32x128xbf16>
    %2 = tpu.iota {dimensions = array<i32: 0>} : vector<32x1xi32>
    %c16_i32 = arith.constant 16 : i32
    %c0_i32 = arith.constant 0 : i32
    %3 = arith.cmpi eq, %c16_i32, %c0_i32 : i32
    %c1_i32 = arith.constant 1 : i32
    %4 = arith.select %3, %c1_i32, %c16_i32 : i32
    %5 = vector.broadcast %4 : i32 to vector<32x1xi32>
    %6 = arith.remsi %2, %5 : vector<32x1xi32>
    %c0_i32_2 = arith.constant 0 : i32
    %7 = vector.broadcast %c0_i32_2 : i32 to vector<32x1xi32>
    %8 = arith.cmpi ne, %6, %7 : vector<32x1xi32>
    %c0_i32_3 = arith.constant 0 : i32
    %9 = vector.broadcast %c0_i32_3 : i32 to vector<32x1xi32>
    %10 = arith.cmpi slt, %6, %9 : vector<32x1xi32>
    %c0_i32_4 = arith.constant 0 : i32
    %11 = arith.cmpi slt, %4, %c0_i32_4 : i32
    %12 = vector.broadcast %11 : i1 to vector<32x1xi1>
    %13 = vector.broadcast %12 : vector<32x1xi1> to vector<32x1xi1>
    %14 = arith.xori %10, %13 : vector<32x1xi1>
    %15 = arith.andi %14, %8 : vector<32x1xi1>
    %16 = vector.broadcast %4 : i32 to vector<32x1xi32>
    %17 = arith.addi %6, %16 : vector<32x1xi32>
    %18 = arith.select %15, %17, %6 : vector<32x1xi1>, vector<32x1xi32>
    %c0_i32_5 = arith.constant 0 : i32
    %19 = vector.broadcast %c0_i32_5 : i32 to vector<32x1xi32>
    %20 = arith.cmpi eq, %18, %19 : vector<32x1xi32>
    %c15_i32 = arith.constant 15 : i32
    %21 = vector.broadcast %c15_i32 : i32 to vector<32x1xi32>
    %22 = arith.cmpi eq, %18, %21 : vector<32x1xi32>
    %cst = arith.constant 0.000000e+00 : bf16
    %23 = vector.broadcast %cst : bf16 to vector<1x128xbf16>
    %24 = vector.extract_strided_slice %1 {offsets = [0, 0], sizes = [31, 128], strides = [1, 1]} : vector<32x128xbf16> to vector<31x128xbf16>
    %25 = tpu.concatenate %23, %24 in 0 : vector<1x128xbf16>, vector<31x128xbf16> -> vector<32x128xbf16>
    %26 = vector.extract_strided_slice %1 {offsets = [1, 0], sizes = [31, 128], strides = [1, 1]} : vector<32x128xbf16> to vector<31x128xbf16>
    %27 = tpu.concatenate %26, %23 in 0 : vector<31x128xbf16>, vector<1x128xbf16> -> vector<32x128xbf16>
    %c0_i32_6 = arith.constant 0 : i32
    %28 = arith.sitofp %c0_i32_6 : i32 to bf16
    %29 = vector.shape_cast %20 : vector<32x1xi1> to vector<32x1xi1>
    %30 = vector.broadcast %29 : vector<32x1xi1> to vector<32x128xi1>
    %31 = vector.broadcast %28 : bf16 to vector<32x128xbf16>
    %32 = arith.select %30, %31, %25 : vector<32x128xi1>, vector<32x128xbf16>
    %c0_i32_7 = arith.constant 0 : i32
    %33 = arith.sitofp %c0_i32_7 : i32 to bf16
    %34 = vector.shape_cast %22 : vector<32x1xi1> to vector<32x1xi1>
    %35 = vector.broadcast %34 : vector<32x1xi1> to vector<32x128xi1>
    %36 = vector.broadcast %33 : bf16 to vector<32x128xbf16>
    %37 = arith.select %35, %36, %27 : vector<32x128xi1>, vector<32x128xbf16>
    %38 = tpu.concatenate %32, %1, %37 in 1 : vector<32x128xbf16>, vector<32x128xbf16>, vector<32x128xbf16> -> vector<32x384xbf16>
    %c0_8 = arith.constant 0 : index
    %c0_9 = arith.constant 0 : index
    %39 = vector.load %arg2[%c0_8, %c0_9] : memref<384x256xbf16, #tpu.memory_space<vmem>>, vector<384x256xbf16>
    %cst_10 = arith.constant dense<0.000000e+00> : vector<32x256xf32>
    %40 = tpu.matmul %38, %39, %cst_10 {dimension_numbers = #tpu.dot_dimension_numbers<[1], [0], [0], [1], [0, 0, 1, 1], [], []>} : vector<32x384xbf16>, vector<384x256xbf16>, vector<32x256xf32> -> vector<32x256xf32>
    %c0_11 = arith.constant 0 : index
    %c0_12 = arith.constant 0 : index
    %41 = vector.load %arg3[%c0_11, %c0_12] : memref<1x256xf32, #tpu.memory_space<vmem>>, vector<1x256xf32>
    %42 = vector.broadcast %41 : vector<1x256xf32> to vector<32x256xf32>
    %43 = arith.addf %40, %42 : vector<32x256xf32>
    %44 = vector.extract_strided_slice %43 {offsets = [0, 0], sizes = [32, 128], strides = [1, 1]} : vector<32x256xf32> to vector<32x128xf32>
    %45 = vector.extract_strided_slice %43 {offsets = [0, 128], sizes = [32, 128], strides = [1, 1]} : vector<32x256xf32> to vector<32x128xf32>
    %cst_13 = arith.constant dense<0.000000e+00> : vector<32xf32>
    %46 = vector.multi_reduction <add>, %44, %cst_13 [1] : vector<32x128xf32> to vector<32xf32>
    %47 = vector.shape_cast %46 : vector<32xf32> to vector<32x1xf32>
    %48 = arith.mulf %44, %44 : vector<32x128xf32>
    %cst_14 = arith.constant dense<0.000000e+00> : vector<32xf32>
    %49 = vector.multi_reduction <add>, %48, %cst_14 [1] : vector<32x128xf32> to vector<32xf32>
    %50 = vector.shape_cast %49 : vector<32xf32> to vector<32x1xf32>
    %cst_15 = arith.constant 3.125000e-02 : f32
    %51 = vector.broadcast %cst_15 : f32 to vector<32x1xf32>
    %52 = arith.mulf %47, %51 : vector<32x1xf32>
    %cst_16 = arith.constant 3.125000e-02 : f32
    %53 = vector.broadcast %cst_16 : f32 to vector<32x1xf32>
    %54 = arith.mulf %50, %53 : vector<32x1xf32>
    %55 = arith.mulf %52, %52 : vector<32x1xf32>
    %56 = arith.subf %54, %55 : vector<32x1xf32>
    %cst_17 = arith.constant 0.000000e+00 : f32
    %57 = vector.broadcast %cst_17 : f32 to vector<32x1xf32>
    %58 = arith.maximumf %56, %57 : vector<32x1xf32>
    %59 = vector.broadcast %52 : vector<32x1xf32> to vector<32x128xf32>
    %60 = arith.subf %44, %59 : vector<32x128xf32>
    %cst_18 = arith.constant 9.99999974E-6 : f32
    %61 = vector.broadcast %cst_18 : f32 to vector<32x1xf32>
    %62 = arith.addf %58, %61 : vector<32x1xf32>
    %63 = math.rsqrt %62 : vector<32x1xf32>
    %64 = vector.broadcast %63 : vector<32x1xf32> to vector<32x128xf32>
    %65 = arith.mulf %60, %64 : vector<32x128xf32>
    %c0_19 = arith.constant 0 : index
    %c0_20 = arith.constant 0 : index
    %66 = vector.load %arg4[%c0_19, %c0_20] : memref<1x128xf32, #tpu.memory_space<vmem>>, vector<1x128xf32>
    %67 = vector.broadcast %66 : vector<1x128xf32> to vector<32x128xf32>
    %68 = arith.mulf %65, %67 : vector<32x128xf32>
    %c0_21 = arith.constant 0 : index
    %c0_22 = arith.constant 0 : index
    %69 = vector.load %arg5[%c0_21, %c0_22] : memref<1x128xf32, #tpu.memory_space<vmem>>, vector<1x128xf32>
    %70 = vector.broadcast %69 : vector<1x128xf32> to vector<32x128xf32>
    %71 = arith.addf %68, %70 : vector<32x128xf32>
    %72 = arith.addf %71, %45 : vector<32x128xf32>
    %cst_23 = arith.constant 0.000000e+00 : f32
    %73 = vector.broadcast %cst_23 : f32 to vector<32x128xf32>
    %74 = arith.maximumf %72, %73 : vector<32x128xf32>
    %75 = arith.truncf %74 : vector<32x128xf32> to vector<32x128xbf16>
    %76 = vector.extract_strided_slice %75 {offsets = [0, 0], sizes = [31, 128], strides = [1, 1]} : vector<32x128xbf16> to vector<31x128xbf16>
    %77 = tpu.concatenate %23, %76 in 0 : vector<1x128xbf16>, vector<31x128xbf16> -> vector<32x128xbf16>
    %78 = vector.extract_strided_slice %75 {offsets = [1, 0], sizes = [31, 128], strides = [1, 1]} : vector<32x128xbf16> to vector<31x128xbf16>
    %79 = tpu.concatenate %78, %23 in 0 : vector<31x128xbf16>, vector<1x128xbf16> -> vector<32x128xbf16>
    %c0_i32_24 = arith.constant 0 : i32
    %80 = arith.sitofp %c0_i32_24 : i32 to bf16
    %81 = vector.shape_cast %20 : vector<32x1xi1> to vector<32x1xi1>
    %82 = vector.broadcast %81 : vector<32x1xi1> to vector<32x128xi1>
    %83 = vector.broadcast %80 : bf16 to vector<32x128xbf16>
    %84 = arith.select %82, %83, %77 : vector<32x128xi1>, vector<32x128xbf16>
    %c0_i32_25 = arith.constant 0 : i32
    %85 = arith.sitofp %c0_i32_25 : i32 to bf16
    %86 = vector.shape_cast %22 : vector<32x1xi1> to vector<32x1xi1>
    %87 = vector.broadcast %86 : vector<32x1xi1> to vector<32x128xi1>
    %88 = vector.broadcast %85 : bf16 to vector<32x128xbf16>
    %89 = arith.select %87, %88, %79 : vector<32x128xi1>, vector<32x128xbf16>
    %90 = tpu.concatenate %84, %75, %89 in 1 : vector<32x128xbf16>, vector<32x128xbf16>, vector<32x128xbf16> -> vector<32x384xbf16>
    %c0_26 = arith.constant 0 : index
    %c0_27 = arith.constant 0 : index
    %91 = vector.load %arg6[%c0_26, %c0_27] : memref<384x128xbf16, #tpu.memory_space<vmem>>, vector<384x128xbf16>
    %cst_28 = arith.constant dense<0.000000e+00> : vector<32x128xf32>
    %92 = tpu.matmul %90, %91, %cst_28 {dimension_numbers = #tpu.dot_dimension_numbers<[1], [0], [0], [1], [0, 0, 1, 1], [], []>} : vector<32x384xbf16>, vector<384x128xbf16>, vector<32x128xf32> -> vector<32x128xf32>
    %c0_29 = arith.constant 0 : index
    %c0_30 = arith.constant 0 : index
    %93 = vector.load %arg7[%c0_29, %c0_30] : memref<1x128xf32, #tpu.memory_space<vmem>>, vector<1x128xf32>
    %94 = vector.broadcast %93 : vector<1x128xf32> to vector<32x128xf32>
    %95 = arith.addf %92, %94 : vector<32x128xf32>
    %cst_31 = arith.constant dense<0.000000e+00> : vector<32xf32>
    %96 = vector.multi_reduction <add>, %95, %cst_31 [1] : vector<32x128xf32> to vector<32xf32>
    %97 = vector.shape_cast %96 : vector<32xf32> to vector<32x1xf32>
    %98 = arith.mulf %95, %95 : vector<32x128xf32>
    %cst_32 = arith.constant dense<0.000000e+00> : vector<32xf32>
    %99 = vector.multi_reduction <add>, %98, %cst_32 [1] : vector<32x128xf32> to vector<32xf32>
    %100 = vector.shape_cast %99 : vector<32xf32> to vector<32x1xf32>
    %cst_33 = arith.constant 3.125000e-02 : f32
    %101 = vector.broadcast %cst_33 : f32 to vector<32x1xf32>
    %102 = arith.mulf %97, %101 : vector<32x1xf32>
    %cst_34 = arith.constant 3.125000e-02 : f32
    %103 = vector.broadcast %cst_34 : f32 to vector<32x1xf32>
    %104 = arith.mulf %100, %103 : vector<32x1xf32>
    %105 = arith.mulf %102, %102 : vector<32x1xf32>
    %106 = arith.subf %104, %105 : vector<32x1xf32>
    %cst_35 = arith.constant 0.000000e+00 : f32
    %107 = vector.broadcast %cst_35 : f32 to vector<32x1xf32>
    %108 = arith.maximumf %106, %107 : vector<32x1xf32>
    %109 = vector.broadcast %102 : vector<32x1xf32> to vector<32x128xf32>
    %110 = arith.subf %95, %109 : vector<32x128xf32>
    %cst_36 = arith.constant 9.99999974E-6 : f32
    %111 = vector.broadcast %cst_36 : f32 to vector<32x1xf32>
    %112 = arith.addf %108, %111 : vector<32x1xf32>
    %113 = math.rsqrt %112 : vector<32x1xf32>
    %114 = vector.broadcast %113 : vector<32x1xf32> to vector<32x128xf32>
    %115 = arith.mulf %110, %114 : vector<32x128xf32>
    %c0_37 = arith.constant 0 : index
    %c0_38 = arith.constant 0 : index
    %116 = vector.load %arg8[%c0_37, %c0_38] : memref<1x128xf32, #tpu.memory_space<vmem>>, vector<1x128xf32>
    %117 = vector.broadcast %116 : vector<1x128xf32> to vector<32x128xf32>
    %118 = arith.mulf %115, %117 : vector<32x128xf32>
    %c0_39 = arith.constant 0 : index
    %c0_40 = arith.constant 0 : index
    %119 = vector.load %arg9[%c0_39, %c0_40] : memref<1x128xf32, #tpu.memory_space<vmem>>, vector<1x128xf32>
    %120 = vector.broadcast %119 : vector<1x128xf32> to vector<32x128xf32>
    %121 = arith.addf %118, %120 : vector<32x128xf32>
    %122 = arith.addf %121, %74 : vector<32x128xf32>
    %cst_41 = arith.constant 0.000000e+00 : f32
    %123 = vector.broadcast %cst_41 : f32 to vector<32x128xf32>
    %124 = arith.maximumf %122, %123 : vector<32x128xf32>
    %125 = arith.truncf %124 : vector<32x128xf32> to vector<32x128xbf16>
    %126 = vector.extract_strided_slice %125 {offsets = [0, 0], sizes = [31, 128], strides = [1, 1]} : vector<32x128xbf16> to vector<31x128xbf16>
    %127 = tpu.concatenate %23, %126 in 0 : vector<1x128xbf16>, vector<31x128xbf16> -> vector<32x128xbf16>
    %128 = vector.extract_strided_slice %125 {offsets = [1, 0], sizes = [31, 128], strides = [1, 1]} : vector<32x128xbf16> to vector<31x128xbf16>
    %129 = tpu.concatenate %128, %23 in 0 : vector<31x128xbf16>, vector<1x128xbf16> -> vector<32x128xbf16>
    %c0_i32_42 = arith.constant 0 : i32
    %130 = arith.sitofp %c0_i32_42 : i32 to bf16
    %131 = vector.shape_cast %20 : vector<32x1xi1> to vector<32x1xi1>
    %132 = vector.broadcast %131 : vector<32x1xi1> to vector<32x128xi1>
    %133 = vector.broadcast %130 : bf16 to vector<32x128xbf16>
    %134 = arith.select %132, %133, %127 : vector<32x128xi1>, vector<32x128xbf16>
    %c0_i32_43 = arith.constant 0 : i32
    %135 = arith.sitofp %c0_i32_43 : i32 to bf16
    %136 = vector.shape_cast %22 : vector<32x1xi1> to vector<32x1xi1>
    %137 = vector.broadcast %136 : vector<32x1xi1> to vector<32x128xi1>
    %138 = vector.broadcast %135 : bf16 to vector<32x128xbf16>
    %139 = arith.select %137, %138, %129 : vector<32x128xi1>, vector<32x128xbf16>
    %140 = tpu.concatenate %134, %125, %139 in 1 : vector<32x128xbf16>, vector<32x128xbf16>, vector<32x128xbf16> -> vector<32x384xbf16>
    %c0_44 = arith.constant 0 : index
    %c0_45 = arith.constant 0 : index
    %141 = vector.load %arg10[%c0_44, %c0_45] : memref<384x128xbf16, #tpu.memory_space<vmem>>, vector<384x128xbf16>
    %cst_46 = arith.constant dense<0.000000e+00> : vector<32x128xf32>
    %142 = tpu.matmul %140, %141, %cst_46 {dimension_numbers = #tpu.dot_dimension_numbers<[1], [0], [0], [1], [0, 0, 1, 1], [], []>} : vector<32x384xbf16>, vector<384x128xbf16>, vector<32x128xf32> -> vector<32x128xf32>
    %c0_47 = arith.constant 0 : index
    %c0_48 = arith.constant 0 : index
    %143 = vector.load %arg11[%c0_47, %c0_48] : memref<1x128xf32, #tpu.memory_space<vmem>>, vector<1x128xf32>
    %144 = vector.broadcast %143 : vector<1x128xf32> to vector<32x128xf32>
    %145 = arith.addf %142, %144 : vector<32x128xf32>
    %cst_49 = arith.constant dense<0.000000e+00> : vector<32xf32>
    %146 = vector.multi_reduction <add>, %145, %cst_49 [1] : vector<32x128xf32> to vector<32xf32>
    %147 = vector.shape_cast %146 : vector<32xf32> to vector<32x1xf32>
    %148 = arith.mulf %145, %145 : vector<32x128xf32>
    %cst_50 = arith.constant dense<0.000000e+00> : vector<32xf32>
    %149 = vector.multi_reduction <add>, %148, %cst_50 [1] : vector<32x128xf32> to vector<32xf32>
    %150 = vector.shape_cast %149 : vector<32xf32> to vector<32x1xf32>
    %cst_51 = arith.constant 3.125000e-02 : f32
    %151 = vector.broadcast %cst_51 : f32 to vector<32x1xf32>
    %152 = arith.mulf %147, %151 : vector<32x1xf32>
    %cst_52 = arith.constant 3.125000e-02 : f32
    %153 = vector.broadcast %cst_52 : f32 to vector<32x1xf32>
    %154 = arith.mulf %150, %153 : vector<32x1xf32>
    %155 = arith.mulf %152, %152 : vector<32x1xf32>
    %156 = arith.subf %154, %155 : vector<32x1xf32>
    %cst_53 = arith.constant 0.000000e+00 : f32
    %157 = vector.broadcast %cst_53 : f32 to vector<32x1xf32>
    %158 = arith.maximumf %156, %157 : vector<32x1xf32>
    %159 = vector.broadcast %152 : vector<32x1xf32> to vector<32x128xf32>
    %160 = arith.subf %145, %159 : vector<32x128xf32>
    %cst_54 = arith.constant 9.99999974E-6 : f32
    %161 = vector.broadcast %cst_54 : f32 to vector<32x1xf32>
    %162 = arith.addf %158, %161 : vector<32x1xf32>
    %163 = math.rsqrt %162 : vector<32x1xf32>
    %164 = vector.broadcast %163 : vector<32x1xf32> to vector<32x128xf32>
    %165 = arith.mulf %160, %164 : vector<32x128xf32>
    %c0_55 = arith.constant 0 : index
    %c0_56 = arith.constant 0 : index
    %166 = vector.load %arg12[%c0_55, %c0_56] : memref<1x128xf32, #tpu.memory_space<vmem>>, vector<1x128xf32>
    %167 = vector.broadcast %166 : vector<1x128xf32> to vector<32x128xf32>
    %168 = arith.mulf %165, %167 : vector<32x128xf32>
    %c0_57 = arith.constant 0 : index
    %c0_58 = arith.constant 0 : index
    %169 = vector.load %arg13[%c0_57, %c0_58] : memref<1x128xf32, #tpu.memory_space<vmem>>, vector<1x128xf32>
    %170 = vector.broadcast %169 : vector<1x128xf32> to vector<32x128xf32>
    %171 = arith.addf %168, %170 : vector<32x128xf32>
    %172 = arith.addf %171, %124 : vector<32x128xf32>
    %cst_59 = arith.constant 0.000000e+00 : f32
    %173 = vector.broadcast %cst_59 : f32 to vector<32x128xf32>
    %174 = arith.maximumf %172, %173 : vector<32x128xf32>
    %175 = vector.shape_cast %174 : vector<32x128xf32> to vector<2x16x128xf32>
    %c0_60 = arith.constant 0 : index
    %c0_61 = arith.constant 0 : index
    %c0_62 = arith.constant 0 : index
    %176 = vector.load %arg14[%c0_60, %c0_61, %c0_62] : memref<2x16x128xf32, #tpu.memory_space<vmem>>, vector<2x16x128xf32>
    tpu.vector_store %arg14[%c0_60, %c0_61, %c0_62], %175 {strides = array<i32>} : memref<2x16x128xf32, #tpu.memory_space<vmem>>, vector<2x16x128xf32>,
    return
  }
  func.func @transform_0(%arg0: i32) -> (i32, i32, i32) {
    %c0_i32 = arith.constant 0 : i32
    %c0_i32_0 = arith.constant 0 : i32
    %c0_i32_1 = arith.constant 0 : i32
    return %arg0, %c0_i32, %c0_i32_0 : i32, i32, i32
  }
  func.func @transform_1(%arg0: i32) -> (i32, i32) {
    %c0_i32 = arith.constant 0 : i32
    %c0_i32_0 = arith.constant 0 : i32
    %c0_i32_1 = arith.constant 0 : i32
    return %c0_i32, %c0_i32_0 : i32, i32
  }
  func.func @transform_2(%arg0: i32) -> (i32, i32) {
    %c0_i32 = arith.constant 0 : i32
    %c0_i32_0 = arith.constant 0 : i32
    %c0_i32_1 = arith.constant 0 : i32
    return %c0_i32, %c0_i32_0 : i32, i32
  }
  func.func @transform_3(%arg0: i32) -> (i32, i32) {
    %c0_i32 = arith.constant 0 : i32
    %c0_i32_0 = arith.constant 0 : i32
    %c0_i32_1 = arith.constant 0 : i32
    return %c0_i32, %c0_i32_0 : i32, i32
  }
  func.func @transform_4(%arg0: i32) -> (i32, i32) {
    %c0_i32 = arith.constant 0 : i32
    %c0_i32_0 = arith.constant 0 : i32
    %c0_i32_1 = arith.constant 0 : i32
    return %c0_i32, %c0_i32_0 : i32, i32
  }
  func.func @transform_5(%arg0: i32) -> (i32, i32) {
    %c0_i32 = arith.constant 0 : i32
    %c0_i32_0 = arith.constant 0 : i32
    %c0_i32_1 = arith.constant 0 : i32
    return %c0_i32, %c0_i32_0 : i32, i32
  }
  func.func @transform_6(%arg0: i32) -> (i32, i32) {
    %c0_i32 = arith.constant 0 : i32
    %c0_i32_0 = arith.constant 0 : i32
    %c0_i32_1 = arith.constant 0 : i32
    return %c0_i32, %c0_i32_0 : i32, i32
  }
  func.func @transform_7(%arg0: i32) -> (i32, i32) {
    %c0_i32 = arith.constant 0 : i32
    %c0_i32_0 = arith.constant 0 : i32
    %c0_i32_1 = arith.constant 0 : i32
    return %c0_i32, %c0_i32_0 : i32, i32
  }
  func.func @transform_8(%arg0: i32) -> (i32, i32) {
    %c0_i32 = arith.constant 0 : i32
    %c0_i32_0 = arith.constant 0 : i32
    %c0_i32_1 = arith.constant 0 : i32
    return %c0_i32, %c0_i32_0 : i32, i32
  }
  func.func @transform_9(%arg0: i32) -> (i32, i32) {
    %c0_i32 = arith.constant 0 : i32
    %c0_i32_0 = arith.constant 0 : i32
    %c0_i32_1 = arith.constant 0 : i32
    return %c0_i32, %c0_i32_0 : i32, i32
  }
  func.func @transform_10(%arg0: i32) -> (i32, i32) {
    %c0_i32 = arith.constant 0 : i32
    %c0_i32_0 = arith.constant 0 : i32
    %c0_i32_1 = arith.constant 0 : i32
    return %c0_i32, %c0_i32_0 : i32, i32
  }
  func.func @transform_11(%arg0: i32) -> (i32, i32) {
    %c0_i32 = arith.constant 0 : i32
    %c0_i32_0 = arith.constant 0 : i32
    %c0_i32_1 = arith.constant 0 : i32
    return %c0_i32, %c0_i32_0 : i32, i32
  }
  func.func @transform_12(%arg0: i32) -> (i32, i32) {
    %c0_i32 = arith.constant 0 : i32
    %c0_i32_0 = arith.constant 0 : i32
    %c0_i32_1 = arith.constant 0 : i32
    return %c0_i32, %c0_i32_0 : i32, i32
  }
  func.func @transform_13(%arg0: i32) -> (i32, i32, i32) {
    %c0_i32 = arith.constant 0 : i32
    %c0_i32_0 = arith.constant 0 : i32
    %c0_i32_1 = arith.constant 0 : i32
    return %arg0, %c0_i32, %c0_i32_0 : i32, i32, i32
  }
}

</mosaic_0001>

<llo_original>
// kernel: tpu_custom_call.1
$region0: #{tpu_custom_call.1}
  #allocation0 [shape = 'u32[]', space=smem, size = 0x4, offset = 0x4, fixed_abs, tag = 'smem constant byte address 0x4 - core index']
  #allocation1 [shape = 'u32[144,128]{1,0:T(1,128)}', space=vmem, size = 0x12000, scoped, tag = 'internal scratch']
  %s0 = inlined_call_operand.hbm [shape: bf16[2,16,128], index: 0, kind: input, shape index: {}]
  %s1 = inlined_call_operand.hbm [shape: bf16[384,256], index: 1, kind: input, shape index: {}]
  %s2 = inlined_call_operand.vmem [shape: f32[1,256], index: 2, kind: input, shape index: {}]
  %s3 = inlined_call_operand.vmem [shape: f32[1,128], index: 3, kind: input, shape index: {}]
  %s4 = inlined_call_operand.vmem [shape: f32[1,128], index: 4, kind: input, shape index: {}]
  %s5 = inlined_call_operand.hbm [shape: bf16[384,128], index: 5, kind: input, shape index: {}]
  %s6 = inlined_call_operand.vmem [shape: f32[1,128], index: 6, kind: input, shape index: {}]
  %s7 = inlined_call_operand.vmem [shape: f32[1,128], index: 7, kind: input, shape index: {}]
  %s8 = inlined_call_operand.vmem [shape: f32[1,128], index: 8, kind: input, shape index: {}]
  %s9 = inlined_call_operand.hbm [shape: bf16[384,128], index: 9, kind: input, shape index: {}]
  %s10 = inlined_call_operand.vmem [shape: f32[1,128], index: 10, kind: input, shape index: {}]
  %s11 = inlined_call_operand.vmem [shape: f32[1,128], index: 11, kind: input, shape index: {}]
  %s12 = inlined_call_operand.vmem [shape: f32[1,128], index: 12, kind: input, shape index: {}]
  %s13 = inlined_call_operand.hbm [shape: f32[2,16,128], index: 13, kind: output, shape index: {}]
  %s14 = sld [smem:[#allocation0]]
  $region78: #{tpu_custom_call.1} parent=0
    _
  %s16 = ssub.s32 1, %s14
  %s17 = scalar_select 0, %s16, %s14
  $region1: #{tpu_custom_call.1} parent=0
    #allocation2 [shape = 'u8[8192]{0}', space=vmem, size = 0x2000, scoped, tag = 'input window, operand 0, single buffered']
    #allocation3 [shape = 's32[1]{0}', space=sflag, size = 0x4, scoped, tag = 'scoped memory for tpu_custom_call.1']
    #allocation4 [shape = 's32[1]{0}', space=sflag, size = 0x4, scoped, tag = 'scoped memory for tpu_custom_call.1']
    #allocation5 [shape = 'u8[196608]{0}', space=vmem, size = 0x30000, scoped, tag = 'input window, operand 1, single buffered']
    #allocation6 [shape = 's32[1]{0}', space=sflag, size = 0x4, scoped, tag = 'scoped memory for tpu_custom_call.1']
    #allocation7 [shape = 'u8[98304]{0}', space=vmem, size = 0x18000, scoped, tag = 'input window, operand 5, single buffered']
    #allocation8 [shape = 'u8[98304]{0}', space=vmem, size = 0x18000, scoped, tag = 'input window, operand 9, single buffered']
    #allocation9 [shape = 's32[1]{0}', space=sflag, size = 0x4, scoped, tag = 'scoped memory for tpu_custom_call.1']
    #allocation10 [shape = 'u8[16384]{0}', space=vmem, size = 0x4000, scoped, tag = 'output window, operand 0, single buffered']
    %18 = vsyncpa [#allocation3], 0
    %19 = vsyncpa [#allocation6], 0
    %20 = vsyncpa [#allocation9], 0
    %21 = vsyncpa [#allocation4], 0
    // Predicated region
    $region2: #{tpu_custom_call.1} parent=1 // pred_check
      _
    $region3: #{tpu_custom_call.1} parent=1 // pred_check_branch
      %23 = sbr.rel (0) target = $region5
    $region4: #{tpu_custom_call.1} parent=1 // pred_region
      %s25 = ssub.s32 256, 256
      %26 = vsyncadd [#allocation3], %s25
      %s27 = sshll.u32 [#allocation2], 4
      %s28 = int_to_ptr.vmem [resolvable:$true] %s27
      %33 = dma.hbm_to_vmem [thread:$0]  %s0, 256, %s28, [#allocation3], 64, 64, 4
    $region5: #{tpu_custom_call.1} parent=1 // pred_fallthru
      _
    // Predicated region
    $region6: #{tpu_custom_call.1} parent=1 // pred_check
      _
    $region7: #{tpu_custom_call.1} parent=1 // pred_check_branch
      %35 = sbr.rel (0) target = $region9
    $region8: #{tpu_custom_call.1} parent=1 // pred_region
      %s37 = ssub.s32 6144, 6144
      %38 = vsyncadd [#allocation6], %s37
      %s39 = sshll.u32 [#allocation5], 4
      %s40 = int_to_ptr.vmem [resolvable:$true] %s39
      %45 = dma.hbm_to_vmem [thread:$0]  %s1, 6144, %s40, [#allocation6], 128, 128, 8
    $region9: #{tpu_custom_call.1} parent=1 // pred_fallthru
      _
    // Predicated region
    $region10: #{tpu_custom_call.1} parent=1 // pred_check
      _
    $region11: #{tpu_custom_call.1} parent=1 // pred_check_branch
      %47 = sbr.rel (0) target = $region13
    $region12: #{tpu_custom_call.1} parent=1 // pred_region
      _
    $region13: #{tpu_custom_call.1} parent=1 // pred_fallthru
      _
    // Predicated region
    $region14: #{tpu_custom_call.1} parent=1 // pred_check
      _
    $region15: #{tpu_custom_call.1} parent=1 // pred_check_branch
      %49 = sbr.rel (0) target = $region17
    $region16: #{tpu_custom_call.1} parent=1 // pred_region
      _
    $region17: #{tpu_custom_call.1} parent=1 // pred_fallthru
      _
    // Predicated region
    $region18: #{tpu_custom_call.1} parent=1 // pred_check
      _
    $region19: #{tpu_custom_call.1} parent=1 // pred_check_branch
      %51 = sbr.rel (0) target = $region21
    $region20: #{tpu_custom_call.1} parent=1 // pred_region
      _
    $region21: #{tpu_custom_call.1} parent=1 // pred_fallthru
      _
    // Predicated region
    $region22: #{tpu_custom_call.1} parent=1 // pred_check
      _
    $region23: #{tpu_custom_call.1} parent=1 // pred_check_branch
      %53 = sbr.rel (0) target = $region25
    $region24: #{tpu_custom_call.1} parent=1 // pred_region
      %s55 = ssub.s32 3072, 3072
      %56 = vsyncadd [#allocation6], %s55
      %s57 = sshll.u32 [#allocation7], 4
      %s58 = int_to_ptr.vmem [resolvable:$true] %s57
      %63 = dma.hbm_to_vmem [thread:$0]  %s5, 3072, %s58, [#allocation6], 64, 64, 4
    $region25: #{tpu_custom_call.1} parent=1 // pred_fallthru
      _
    // Predicated region
    $region26: #{tpu_custom_call.1} parent=1 // pred_check
      _
    $region27: #{tpu_custom_call.1} parent=1 // pred_check_branch
      %65 = sbr.rel (0) target = $region29
    $region28: #{tpu_custom_call.1} parent=1 // pred_region
      _
    $region29: #{tpu_custom_call.1} parent=1 // pred_fallthru
      _
    // Predicated region
    $region30: #{tpu_custom_call.1} parent=1 // pred_check
      _
    $region31: #{tpu_custom_call.1} parent=1 // pred_check_branch
      %67 = sbr.rel (0) target = $region33
    $region32: #{tpu_custom_call.1} parent=1 // pred_region
      _
    $region33: #{tpu_custom_call.1} parent=1 // pred_fallthru
      _
    // Predicated region
    $region34: #{tpu_custom_call.1} parent=1 // pred_check
      _
    $region35: #{tpu_custom_call.1} parent=1 // pred_check_branch
      %69 = sbr.rel (0) target = $region37
    $region36: #{tpu_custom_call.1} parent=1 // pred_region
      _
    $region37: #{tpu_custom_call.1} parent=1 // pred_fallthru
      _
    // Predicated region
    $region38: #{tpu_custom_call.1} parent=1 // pred_check
      _
    $region39: #{tpu_custom_call.1} parent=1 // pred_check_branch
      %71 = sbr.rel (0) target = $region41
    $region40: #{tpu_custom_call.1} parent=1 // pred_region
      %s73 = ssub.s32 3072, 3072
      %74 = vsyncadd [#allocation9], %s73
      %s75 = sshll.u32 [#allocation8], 4
      %s76 = int_to_ptr.vmem [resolvable:$true] %s75
      %81 = dma.hbm_to_vmem [thread:$0]  %s9, 3072, %s76, [#allocation9], 64, 64, 4
    $region41: #{tpu_custom_call.1} parent=1 // pred_fallthru
      _
    // Predicated region
    $region42: #{tpu_custom_call.1} parent=1 // pred_check
      _
    $region43: #{tpu_custom_call.1} parent=1 // pred_check_branch
      %83 = sbr.rel (0) target = $region45
    $region44: #{tpu_custom_call.1} parent=1 // pred_region
      _
    $region45: #{tpu_custom_call.1} parent=1 // pred_fallthru
      _
    // Predicated region
    $region46: #{tpu_custom_call.1} parent=1 // pred_check
      _
    $region47: #{tpu_custom_call.1} parent=1 // pred_check_branch
      %85 = sbr.rel (0) target = $region49
    $region48: #{tpu_custom_call.1} parent=1 // pred_region
      _
    $region49: #{tpu_custom_call.1} parent=1 // pred_fallthru
      _
    // Predicated region
    $region50: #{tpu_custom_call.1} parent=1 // pred_check
      _
    $region51: #{tpu_custom_call.1} parent=1 // pred_check_branch
      %87 = sbr.rel (0) target = $region53
    $region52: #{tpu_custom_call.1} parent=1 // pred_region
      _
    $region53: #{tpu_custom_call.1} parent=1 // pred_fallthru
      _
    // Predicated region
    $region54: #{tpu_custom_call.1} parent=1 // pred_check
      _
    $region55: #{tpu_custom_call.1} parent=1 // pred_check_branch
      %89 = sbr.rel (0) target = $region57
    $region56: #{tpu_custom_call.1} parent=1 // pred_region
      %90 = dma.done [#allocation3], 256
    $region57: #{tpu_custom_call.1} parent=1 // pred_fallthru
      _
    // Predicated region
    $region58: #{tpu_custom_call.1} parent=1 // pred_check
      _
    $region59: #{tpu_custom_call.1} parent=1 // pred_check_branch
      %92 = sbr.rel (0) target = $region61
    $region60: #{tpu_custom_call.1} parent=1 // pred_region
      %93 = dma.done [#allocation6], 6144
    $region61: #{tpu_custom_call.1} parent=1 // pred_fallthru
      _
    // Predicated region
    $region62: #{tpu_custom_call.1} parent=1 // pred_check
      _
    $region63: #{tpu_custom_call.1} parent=1 // pred_check_branch
      %95 = sbr.rel (0) target = $region65
    $region64: #{tpu_custom_call.1} parent=1 // pred_region
      %96 = dma.done [#allocation6], 3072
    $region65: #{tpu_custom_call.1} parent=1 // pred_fallthru
      _
    // Predicated region
    $region66: #{tpu_custom_call.1} parent=1 // pred_check
      _
    $region67: #{tpu_custom_call.1} parent=1 // pred_check_branch
      %98 = sbr.rel (0) target = $region69
    $region68: #{tpu_custom_call.1} parent=1 // pred_region
      %99 = dma.done [#allocation9], 3072
    $region69: #{tpu_custom_call.1} parent=1 // pred_fallthru
      _
    %v103 = vld [vmem:[#allocation2] sm:$0xf]
    %v104 = vld [vmem:[#allocation2 + $0x4] sm:$0xf]
    %v105 = vld [vmem:[#allocation2 + $0x8] sm:$0xf]
    %v106 = vld [vmem:[#allocation2 + $0xc] sm:$0xf]
    %v107 = vlaneseq
    %v108 = vshrl.u32 %v107, 7
    %v109 = vadd.s32 %v108, 8
    %v110 = vadd.s32 %v108, 16
    %v111 = vadd.s32 %v108, 24
    %vm112 = vcmp.lt.s32.totalorder %v108, 0
    %v113 = vsub.s32 0, %v108
    %v114 = vsel %vm112, %v113, %v108
    %v115 = vshrl.u32 %v114, 4
    %v116 = vand.u32 %v114, 15
    %v117 = vsub.s32 0, %v116
    %v118 = vsel %vm112, %v117, %v116
    %vm119 = vcmp.lt.s32.totalorder %v109, 0
    %v120 = vsub.s32 0, %v109
    %v121 = vsel %vm119, %v120, %v109
    %v122 = vshrl.u32 %v121, 4
    %v123 = vand.u32 %v121, 15
    %v124 = vsub.s32 0, %v123
    %v125 = vsel %vm119, %v124, %v123
    %vm126 = vcmp.lt.s32.totalorder %v110, 0
    %v127 = vsub.s32 0, %v110
    %v128 = vsel %vm126, %v127, %v110
    %v129 = vshrl.u32 %v128, 4
    %v130 = vand.u32 %v128, 15
    %v131 = vsub.s32 0, %v130
    %v132 = vsel %vm126, %v131, %v130
    %vm133 = vcmp.lt.s32.totalorder %v111, 0
    %v134 = vsub.s32 0, %v111
    %v135 = vsel %vm133, %v134, %v111
    %v136 = vshrl.u32 %v135, 4
    %v137 = vand.u32 %v135, 15
    %v138 = vsub.s32 0, %v137
    %v139 = vsel %vm133, %v138, %v137
    %vm140 = vcmp.ne.s32.totalorder %v118, 0
    %vm141 = vcmp.ne.s32.totalorder %v125, 0
    %vm142 = vcmp.ne.s32.totalorder %v132, 0
    %vm143 = vcmp.ne.s32.totalorder %v139, 0
    %vm144 = vcmp.lt.s32.totalorder %v118, 0
    %vm145 = vcmp.lt.s32.totalorder %v125, 0
    %vm146 = vcmp.lt.s32.totalorder %v132, 0
    %vm147 = vcmp.lt.s32.totalorder %v139, 0
    %vm148 = vmand %vm144, %vm140
    %vm149 = vmand %vm145, %vm141
    %vm150 = vmand %vm146, %vm142
    %vm151 = vmand %vm147, %vm143
    %v152 = vadd.s32 %v118, 16
    %v153 = vadd.s32 %v125, 16
    %v154 = vadd.s32 %v132, 16
    %v155 = vadd.s32 %v139, 16
    %v156 = vsel %vm148, %v152, %v118
    %v157 = vsel %vm149, %v153, %v125
    %v158 = vsel %vm150, %v154, %v132
    %v159 = vsel %vm151, %v155, %v139
    %vm160 = vcmp.eq.s32.totalorder %v156, 0
    %vm161 = vcmp.eq.s32.totalorder %v157, 0
    %vm162 = vcmp.eq.s32.totalorder %v158, 0
    %vm163 = vcmp.eq.s32.totalorder %v159, 0
    %vm164 = vcmp.eq.s32.totalorder %v156, 15
    %vm165 = vcmp.eq.s32.totalorder %v157, 15
    %vm166 = vcmp.eq.s32.totalorder %v158, 15
    %vm167 = vcmp.eq.s32.totalorder %v159, 15
    %v172 = vunpack.c.l.b16 %v103
    %v173 = vunpack.c.l.b16 %v104
    %v174 = vunpack.c.l.b16 %v105
    %v175 = vunpack.c.l.b16 %v106
    %v176 = vpack.c.b16 %v173, %v172
    %v177 = vpack.c.b16 %v175, %v174
    %vm178 = vsmask.f32 256
    %v180 = vshrl.u32 %v176, 16
    %v182 = vrot.slane %v180, 7
    %v183 = vshll.u32 %v176, 16
    %v185 = vor.u32 %v182, %v183
    %v187 = vshrl.u32 %v177, 16
    %v189 = vrot.slane %v187, 7
    %v190 = vshll.u32 %v177, 16
    %v192 = vor.u32 %v189, %v190
    %v193 = vsel %vm178, %v182, %v192
    %vm196 = vcmask 1040384
    %vm197 = vmand %vm196, %vm178
    %v198 = vsel %vm197, 0, %v185
    %vm199 = vsmask.f32 7424
    %v200 = vrot.slane %v183, 1
    %v201 = vor.u32 %v180, %v200
    %v202 = vrot.slane %v190, 1
    %v203 = vsel %vm199, %v201, %v202
    %v204 = vor.u32 %v187, %v202
    %vm207 = vcmask 1047552
    %vm208 = vmand %vm207, %vm199
    %v209 = vsel %vm208, %v204, 0
    %v210 = vsel %vm160, 1, 0
    %v211 = vsel %vm161, 1, 0
    %v212 = vsel %vm162, 1, 0
    %v213 = vsel %vm163, 1, 0
    %vm214 = vcmp.eq.s32.totalorder %v210, 1
    %vm215 = vcmp.eq.s32.totalorder %v211, 1
    %vm216 = vcmp.eq.s32.totalorder %v212, 1
    %vm217 = vcmp.eq.s32.totalorder %v213, 1
    %vm218 = vmpackc.low %vm214, %vm214
    %vm219 = vmpackc.low %vm215, %vm215
    %vm220 = vmpackc.low %vm216, %vm216
    %vm221 = vmpackc.low %vm217, %vm217
    %v222 = vsel %vm218, 65537, 0
    %v223 = vsel %vm219, 65537, 0
    %v224 = vsel %vm220, 65537, 0
    %v225 = vsel %vm221, 65537, 0
    %v226 = vunpack.c.l.b16 %v222
    %v227 = vunpack.c.l.b16 %v223
    %v228 = vunpack.c.l.b16 %v224
    %v229 = vunpack.c.l.b16 %v225
    %v230 = vpack.c.b16 %v227, %v226
    %v231 = vpack.c.b16 %v229, %v228
    %vm232 = vcmp.ne.s16.totalorder %v230, 0
    %vm233 = vcmp.ne.s16.totalorder %v231, 0
    %v234 = vsel %vm232, 0, %v198
    %v235 = vsel %vm233, 0, %v193
    %v236 = vsel %vm164, 1, 0
    %v237 = vsel %vm165, 1, 0
    %v238 = vsel %vm166, 1, 0
    %v239 = vsel %vm167, 1, 0
    %vm240 = vcmp.eq.s32.totalorder %v236, 1
    %vm241 = vcmp.eq.s32.totalorder %v237, 1
    %vm242 = vcmp.eq.s32.totalorder %v238, 1
    %vm243 = vcmp.eq.s32.totalorder %v239, 1
    %vm244 = vmpackc.low %vm240, %vm240
    %vm245 = vmpackc.low %vm241, %vm241
    %vm246 = vmpackc.low %vm242, %vm242
    %vm247 = vmpackc.low %vm243, %vm243
    %v248 = vsel %vm244, 65537, 0
    %v249 = vsel %vm245, 65537, 0
    %v250 = vsel %vm246, 65537, 0
    %v251 = vsel %vm247, 65537, 0
    %v252 = vunpack.c.l.b16 %v248
    %v253 = vunpack.c.l.b16 %v249
    %v254 = vunpack.c.l.b16 %v250
    %v255 = vunpack.c.l.b16 %v251
    %v256 = vpack.c.b16 %v253, %v252
    %v257 = vpack.c.b16 %v255, %v254
    %vm258 = vcmp.ne.s16.totalorder %v256, 0
    %vm259 = vcmp.ne.s16.totalorder %v257, 0
    %v260 = vsel %vm258, 0, %v203
    %v261 = vsel %vm259, 0, %v209
    %v264 = vld [vmem:[#allocation5] sm:$0xff]
    %v265 = vld [vmem:[#allocation5 + $0x8] sm:$0xff]
    %v266 = vld [vmem:[#allocation5 + $0x10] sm:$0xff]
    %v267 = vld [vmem:[#allocation5 + $0x18] sm:$0xff]
    %v268 = vld [vmem:[#allocation5 + $0x20] sm:$0xff]
    %v269 = vld [vmem:[#allocation5 + $0x28] sm:$0xff]
    %v270 = vld [vmem:[#allocation5 + $0x30] sm:$0xff]
    %v271 = vld [vmem:[#allocation5 + $0x38] sm:$0xff]
    %v272 = vld [vmem:[#allocation5 + $0x40] sm:$0xff]
    %v273 = vld [vmem:[#allocation5 + $0x48] sm:$0xff]
    %v274 = vld [vmem:[#allocation5 + $0x50] sm:$0xff]
    %v275 = vld [vmem:[#allocation5 + $0x58] sm:$0xff]
    %v276 = vld [vmem:[#allocation5 + $0x60] sm:$0xff]
    %v277 = vld [vmem:[#allocation5 + $0x68] sm:$0xff]
    %v278 = vld [vmem:[#allocation5 + $0x70] sm:$0xff]
    %v279 = vld [vmem:[#allocation5 + $0x78] sm:$0xff]
    %v280 = vld [vmem:[#allocation5 + $0x80] sm:$0xff]
    %v281 = vld [vmem:[#allocation5 + $0x88] sm:$0xff]
    %v282 = vld [vmem:[#allocation5 + $0x90] sm:$0xff]
    %v283 = vld [vmem:[#allocation5 + $0x98] sm:$0xff]
    %v284 = vld [vmem:[#allocation5 + $0xa0] sm:$0xff]
    %v285 = vld [vmem:[#allocation5 + $0xa8] sm:$0xff]
    %v286 = vld [vmem:[#allocation5 + $0xb0] sm:$0xff]
    %v287 = vld [vmem:[#allocation5 + $0xb8] sm:$0xff]
    %v288 = vld [vmem:[#allocation5 + $0xc0] sm:$0xff]
    %v289 = vld [vmem:[#allocation5 + $0xc8] sm:$0xff]
    %v290 = vld [vmem:[#allocation5 + $0xd0] sm:$0xff]
    %v291 = vld [vmem:[#allocation5 + $0xd8] sm:$0xff]
    %v292 = vld [vmem:[#allocation5 + $0xe0] sm:$0xff]
    %v293 = vld [vmem:[#allocation5 + $0xe8] sm:$0xff]
    %v294 = vld [vmem:[#allocation5 + $0xf0] sm:$0xff]
    %v295 = vld [vmem:[#allocation5 + $0xf8] sm:$0xff]
    %v296 = vld [vmem:[#allocation5 + $0x100] sm:$0xff]
    %v297 = vld [vmem:[#allocation5 + $0x108] sm:$0xff]
    %v298 = vld [vmem:[#allocation5 + $0x110] sm:$0xff]
    %v299 = vld [vmem:[#allocation5 + $0x118] sm:$0xff]
    %v300 = vld [vmem:[#allocation5 + $0x120] sm:$0xff]
    %v301 = vld [vmem:[#allocation5 + $0x128] sm:$0xff]
    %v302 = vld [vmem:[#allocation5 + $0x130] sm:$0xff]
    %v303 = vld [vmem:[#allocation5 + $0x138] sm:$0xff]
    %v304 = vld [vmem:[#allocation5 + $0x140] sm:$0xff]
    %v305 = vld [vmem:[#allocation5 + $0x148] sm:$0xff]
    %v306 = vld [vmem:[#allocation5 + $0x150] sm:$0xff]
    %v307 = vld [vmem:[#allocation5 + $0x158] sm:$0xff]
    %v308 = vld [vmem:[#allocation5 + $0x160] sm:$0xff]
    %v309 = vld [vmem:[#allocation5 + $0x168] sm:$0xff]
    %v310 = vld [vmem:[#allocation5 + $0x170] sm:$0xff]
    %v311 = vld [vmem:[#allocation5 + $0x178] sm:$0xff]
    %v312 = vld [vmem:[%s2] sm:$0x3]
    %v314 = vlaneseq
    %v315 = vshrl.u32 %v314, 7
    %v316 = vsub.s32 0, %v315
    %v317 = vrot.slane %v312, %v316
    %v318 = vlaneseq
    %v319 = vshrl.u32 %v318, 7
    %v320 = vsub.s32 1, %v319
    %v321 = vrot.slane %v312, %v320
    %v372 = vunpack.c.l.b16 %v264
    %v373 = vunpack.c.h.b16 %v264
    %v374 = vunpack.c.l.b16 %v265
    %v375 = vunpack.c.h.b16 %v265
    %v376 = vunpack.c.l.b16 %v266
    %v377 = vunpack.c.h.b16 %v266
    %v378 = vunpack.c.l.b16 %v267
    %v379 = vunpack.c.h.b16 %v267
    %v380 = vunpack.c.l.b16 %v268
    %v381 = vunpack.c.h.b16 %v268
    %v382 = vunpack.c.l.b16 %v269
    %v383 = vunpack.c.h.b16 %v269
    %v384 = vunpack.c.l.b16 %v270
    %v385 = vunpack.c.h.b16 %v270
    %v386 = vunpack.c.l.b16 %v271
    %v387 = vunpack.c.h.b16 %v271
    %v388 = vunpack.c.l.b16 %v272
    %v389 = vunpack.c.h.b16 %v272
    %v390 = vunpack.c.l.b16 %v273
    %v391 = vunpack.c.h.b16 %v273
    %v392 = vunpack.c.l.b16 %v274
    %v393 = vunpack.c.h.b16 %v274
    %v394 = vunpack.c.l.b16 %v275
    %v395 = vunpack.c.h.b16 %v275
    %v396 = vunpack.c.l.b16 %v276
    %v397 = vunpack.c.h.b16 %v276
    %v398 = vunpack.c.l.b16 %v277
    %v399 = vunpack.c.h.b16 %v277
    %v400 = vunpack.c.l.b16 %v278
    %v401 = vunpack.c.h.b16 %v278
    %v402 = vunpack.c.l.b16 %v279
    %v403 = vunpack.c.h.b16 %v279
    %v404 = vunpack.c.l.b16 %v280
    %v405 = vunpack.c.h.b16 %v280
    %v406 = vunpack.c.l.b16 %v281
    %v407 = vunpack.c.h.b16 %v281
    %v408 = vunpack.c.l.b16 %v282
    %v409 = vunpack.c.h.b16 %v282
    %v410 = vunpack.c.l.b16 %v283
    %v411 = vunpack.c.h.b16 %v283
    %v412 = vunpack.c.l.b16 %v284
    %v413 = vunpack.c.h.b16 %v284
    %v414 = vunpack.c.l.b16 %v285
    %v415 = vunpack.c.h.b16 %v285
    %v416 = vunpack.c.l.b16 %v286
    %v417 = vunpack.c.h.b16 %v286
    %v418 = vunpack.c.l.b16 %v287
    %v419 = vunpack.c.h.b16 %v287
    %v420 = vunpack.c.l.b16 %v288
    %v421 = vunpack.c.h.b16 %v288
    %v422 = vunpack.c.l.b16 %v289
    %v423 = vunpack.c.h.b16 %v289
    %v424 = vunpack.c.l.b16 %v290
    %v425 = vunpack.c.h.b16 %v290
    %v426 = vunpack.c.l.b16 %v291
    %v427 = vunpack.c.h.b16 %v291
    %v428 = vunpack.c.l.b16 %v292
    %v429 = vunpack.c.h.b16 %v292
    %v430 = vunpack.c.l.b16 %v293
    %v431 = vunpack.c.h.b16 %v293
    %v432 = vunpack.c.l.b16 %v294
    %v433 = vunpack.c.h.b16 %v294
    %v434 = vunpack.c.l.b16 %v295
    %v435 = vunpack.c.h.b16 %v295
    %v436 = vunpack.c.l.b16 %v296
    %v437 = vunpack.c.h.b16 %v296
    %v438 = vunpack.c.l.b16 %v297
    %v439 = vunpack.c.h.b16 %v297
    %v440 = vunpack.c.l.b16 %v298
    %v441 = vunpack.c.h.b16 %v298
    %v442 = vunpack.c.l.b16 %v299
    %v443 = vunpack.c.h.b16 %v299
    %v444 = vunpack.c.l.b16 %v300
    %v445 = vunpack.c.h.b16 %v300
    %v446 = vunpack.c.l.b16 %v301
    %v447 = vunpack.c.h.b16 %v301
    %v448 = vunpack.c.l.b16 %v302
    %v449 = vunpack.c.h.b16 %v302
    %v450 = vunpack.c.l.b16 %v303
    %v451 = vunpack.c.h.b16 %v303
    %v452 = vunpack.c.l.b16 %v304
    %v453 = vunpack.c.h.b16 %v304
    %v454 = vunpack.c.l.b16 %v305
    %v455 = vunpack.c.h.b16 %v305
    %v456 = vunpack.c.l.b16 %v306
    %v457 = vunpack.c.h.b16 %v306
    %v458 = vunpack.c.l.b16 %v307
    %v459 = vunpack.c.h.b16 %v307
    %v460 = vunpack.c.l.b16 %v308
    %v461 = vunpack.c.h.b16 %v308
    %v462 = vunpack.c.l.b16 %v309
    %v463 = vunpack.c.h.b16 %v309
    %v464 = vunpack.c.l.b16 %v310
    %v465 = vunpack.c.h.b16 %v310
    %v466 = vunpack.c.l.b16 %v311
    %v467 = vunpack.c.h.b16 %v311
    %v468 = vpack.c.b16 %v374, %v372
    %v469 = vpack.c.b16 %v375, %v373
    %v470 = vpack.c.b16 %v378, %v376
    %v471 = vpack.c.b16 %v379, %v377
    %v472 = vpack.c.b16 %v382, %v380
    %v473 = vpack.c.b16 %v383, %v381
    %v474 = vpack.c.b16 %v386, %v384
    %v475 = vpack.c.b16 %v387, %v385
    %v476 = vpack.c.b16 %v390, %v388
    %v477 = vpack.c.b16 %v391, %v389
    %v478 = vpack.c.b16 %v394, %v392
    %v479 = vpack.c.b16 %v395, %v393
    %v480 = vpack.c.b16 %v398, %v396
    %v481 = vpack.c.b16 %v399, %v397
    %v482 = vpack.c.b16 %v402, %v400
    %v483 = vpack.c.b16 %v403, %v401
    %v484 = vpack.c.b16 %v406, %v404
    %v485 = vpack.c.b16 %v407, %v405
    %v486 = vpack.c.b16 %v410, %v408
    %v487 = vpack.c.b16 %v411, %v409
    %v488 = vpack.c.b16 %v414, %v412
    %v489 = vpack.c.b16 %v415, %v413
    %v490 = vpack.c.b16 %v418, %v416
    %v491 = vpack.c.b16 %v419, %v417
    %v492 = vpack.c.b16 %v422, %v420
    %v493 = vpack.c.b16 %v423, %v421
    %v494 = vpack.c.b16 %v426, %v424
    %v495 = vpack.c.b16 %v427, %v425
    %v496 = vpack.c.b16 %v430, %v428
    %v497 = vpack.c.b16 %v431, %v429
    %v498 = vpack.c.b16 %v434, %v432
    %v499 = vpack.c.b16 %v435, %v433
    %v500 = vpack.c.b16 %v438, %v436
    %v501 = vpack.c.b16 %v439, %v437
    %v502 = vpack.c.b16 %v442, %v440
    %v503 = vpack.c.b16 %v443, %v441
    %v504 = vpack.c.b16 %v446, %v444
    %v505 = vpack.c.b16 %v447, %v445
    %v506 = vpack.c.b16 %v450, %v448
    %v507 = vpack.c.b16 %v451, %v449
    %v508 = vpack.c.b16 %v454, %v452
    %v509 = vpack.c.b16 %v455, %v453
    %v510 = vpack.c.b16 %v458, %v456
    %v511 = vpack.c.b16 %v459, %v457
    %v512 = vpack.c.b16 %v462, %v460
    %v513 = vpack.c.b16 %v463, %v461
    %v514 = vpack.c.b16 %v466, %v464
    %v515 = vpack.c.b16 %v467, %v465
    %564 = vmatprep.subr.bf16.mxu0 %v469
    %565 = vmatpush1.bf16.msra.mxu0 %v468
    %566 = vmatprep.subr.bf16.mxu0 %v471
    %567 = vmatpush1.bf16.msra.mxu0 %v470
    %568 = vmatprep.subr.bf16.mxu0 %v473
    %569 = vmatpush1.bf16.msra.mxu0 %v472
    %570 = vmatprep.subr.bf16.mxu0 %v475
    %571 = vmatpush1.bf16.msra.mxu0 %v474
    %572 = vmatprep.subr.bf16.mxu0 %v477
    %573 = vmatpush1.bf16.msra.mxu0 %v476
    %574 = vmatprep.subr.bf16.mxu0 %v479
    %575 = vmatpush1.bf16.msra.mxu0 %v478
    %576 = vmatprep.subr.bf16.mxu0 %v481
    %577 = vmatpush1.bf16.msra.mxu0 %v480
    %578 = vmatprep.subr.bf16.mxu0 %v483
    %579 = vmatpush1.bf16.msra.mxu0 %v482
    %580 = vmatprep.subr.bf16.mxu0 %v485
    %581 = vmatpush1.bf16.msra.mxu0 %v484
    %582 = vmatprep.subr.bf16.mxu0 %v487
    %583 = vmatpush1.bf16.msra.mxu0 %v486
    %584 = vmatprep.subr.bf16.mxu0 %v489
    %585 = vmatpush1.bf16.msra.mxu0 %v488
    %586 = vmatprep.subr.bf16.mxu0 %v491
    %587 = vmatpush1.bf16.msra.mxu0 %v490
    %588 = vmatprep.subr.bf16.mxu0 %v493
    %589 = vmatpush1.bf16.msra.mxu0 %v492
    %590 = vmatprep.subr.bf16.mxu0 %v495
    %591 = vmatpush1.bf16.msra.mxu0 %v494
    %592 = vmatprep.subr.bf16.mxu0 %v497
    %593 = vmatpush1.bf16.msra.mxu0 %v496
    %594 = vmatprep.subr.bf16.mxu0 %v499
    %595 = vmatpush1.bf16.msra.mxu0 %v498
    %596 = vmatprep.mubr.bf16.mxu0 %v176
    %597 = vmatmul.mubr.bf16.gmra.mrb[0].mxu0 %v234
    %v598 = vpop.f32.mrb[0].mxu0
    %v599 = vadd.f32 %v317, %v598
    %v600 = vpop.f32.mrb[0].mxu0
    %v601 = vadd.f32 %v321, %v600
    %v602 = vpop.f32.mrb[0].mxu0
    %v603 = vadd.f32 %v317, %v602
    %v604 = vpop.f32.mrb[0].mxu0
    %v605 = vadd.f32 %v321, %v604
    %606 = vmatprep.mubr.bf16.mxu0 %v177
    %607 = vmatmul.mubr.bf16.gmra.mrb[0].mxu0 %v235
    %v608 = vpop.f32.mrb[0].mxu0
    %v609 = vadd.f32 %v317, %v608
    %v610 = vpop.f32.mrb[0].mxu0
    %v611 = vadd.f32 %v321, %v610
    %v612 = vpop.f32.mrb[0].mxu0
    %v613 = vadd.f32 %v317, %v612
    %v614 = vpop.f32.mrb[0].mxu0
    %v615 = vadd.f32 %v321, %v614
    %616 = vdwg.mxu0
    %617 = vmatprep.subr.bf16.mxu0 %v501
    %618 = vmatpush1.bf16.msra.mxu0 %v500
    %619 = vmatprep.subr.bf16.mxu0 %v503
    %620 = vmatpush1.bf16.msra.mxu0 %v502
    %621 = vmatprep.subr.bf16.mxu0 %v505
    %622 = vmatpush1.bf16.msra.mxu0 %v504
    %623 = vmatprep.subr.bf16.mxu0 %v507
    %624 = vmatpush1.bf16.msra.mxu0 %v506
    %625 = vmatprep.subr.bf16.mxu0 %v509
    %626 = vmatpush1.bf16.msra.mxu0 %v508
    %627 = vmatprep.subr.bf16.mxu0 %v511
    %628 = vmatpush1.bf16.msra.mxu0 %v510
    %629 = vmatprep.subr.bf16.mxu0 %v513
    %630 = vmatpush1.bf16.msra.mxu0 %v512
    %631 = vmatprep.subr.bf16.mxu0 %v515
    %632 = vmatpush1.bf16.msra.mxu0 %v514
    %633 = vmatprep.subr.bf16.mxu0 0
    %634 = vmatpush1.bf16.msra.mxu0 0
    %635 = vmatprep.subr.bf16.mxu0 0
    %636 = vmatpush1.bf16.msra.mxu0 0
    %637 = vmatprep.subr.bf16.mxu0 0
    %638 = vmatpush1.bf16.msra.mxu0 0
    %639 = vmatprep.subr.bf16.mxu0 0
    %640 = vmatpush1.bf16.msra.mxu0 0
    %641 = vmatprep.subr.bf16.mxu0 0
    %642 = vmatpush1.bf16.msra.mxu0 0
    %643 = vmatprep.subr.bf16.mxu0 0
    %644 = vmatpush1.bf16.msra.mxu0 0
    %645 = vmatprep.subr.bf16.mxu0 0
    %646 = vmatpush1.bf16.msra.mxu0 0
    %647 = vmatprep.subr.bf16.mxu0 0
    %648 = vmatpush1.bf16.msra.mxu0 0
    %649 = vmatprep.mubr.bf16.mxu0 0
    %650 = vmatmul.mubr.bf16.gmra.mrb[0].mxu0 %v260
    %v651 = vpop.f32.mrb[0].mxu0
    %v652 = vadd.f32 %v599, %v651
    %v653 = vpop.f32.mrb[0].mxu0
    %v654 = vadd.f32 %v601, %v653
    %v655 = vpop.f32.mrb[0].mxu0
    %v656 = vadd.f32 %v603, %v655
    %v657 = vpop.f32.mrb[0].mxu0
    %v658 = vadd.f32 %v605, %v657
    %659 = vmatprep.mubr.bf16.mxu0 0
    %660 = vmatmul.mubr.bf16.gmra.mrb[0].mxu0 %v261
    %v661 = vpop.f32.mrb[0].mxu0
    %v662 = vadd.f32 %v609, %v661
    %v663 = vpop.f32.mrb[0].mxu0
    %v664 = vadd.f32 %v611, %v663
    %v665 = vpop.f32.mrb[0].mxu0
    %v666 = vadd.f32 %v613, %v665
    %v667 = vpop.f32.mrb[0].mxu0
    %v668 = vadd.f32 %v615, %v667
    %669 = vdwg.mxu0
    %670 = vadd.xlane.f32.xlu0 %v652
    %v671 = vpop.xlane.xlu0 %670
    %672 = vadd.xlane.f32.xlu0 %v656
    %v673 = vpop.xlane.xlu0 %672
    %674 = vadd.xlane.f32.xlu0 %v662
    %v675 = vpop.xlane.xlu0 %674
    %676 = vadd.xlane.f32.xlu0 %v666
    %v677 = vpop.xlane.xlu0 %676
    %v678 = vmul.f32 %v652, %v652
    %v679 = vmul.f32 %v656, %v656
    %v680 = vmul.f32 %v662, %v662
    %v681 = vmul.f32 %v666, %v666
    %682 = vadd.xlane.f32.xlu0 %v678
    %v683 = vpop.xlane.xlu0 %682
    %684 = vadd.xlane.f32.xlu0 %v679
    %v685 = vpop.xlane.xlu0 %684
    %686 = vadd.xlane.f32.xlu0 %v680
    %v687 = vpop.xlane.xlu0 %686
    %688 = vadd.xlane.f32.xlu0 %v681
    %v689 = vpop.xlane.xlu0 %688
    %v690 = vmul.f32 %v671, 0.03125
    %v691 = vmul.f32 %v673, 0.03125
    %v692 = vmul.f32 %v675, 0.03125
    %v693 = vmul.f32 %v677, 0.03125
    %v694 = vmul.f32 %v683, 0.03125
    %v695 = vmul.f32 %v685, 0.03125
    %v696 = vmul.f32 %v687, 0.03125
    %v697 = vmul.f32 %v689, 0.03125
    %v698 = vmul.f32 %v690, %v690
    %v699 = vmul.f32 %v691, %v691
    %v700 = vmul.f32 %v692, %v692
    %v701 = vmul.f32 %v693, %v693
    %v702 = vsub.f32 %v694, %v698
    %v703 = vsub.f32 %v695, %v699
    %v704 = vsub.f32 %v696, %v700
    %v705 = vsub.f32 %v697, %v701
    %v706 = vmax.f32 %v702, 0.0
    %v707 = vmax.f32 %v703, 0.0
    %v708 = vmax.f32 %v704, 0.0
    %v709 = vmax.f32 %v705, 0.0
    %v710 = vsub.f32 %v652, %v690
    %v711 = vsub.f32 %v656, %v691
    %v712 = vsub.f32 %v662, %v692
    %v713 = vsub.f32 %v666, %v693
    %v714 = vadd.f32 %v706, 1e-05
    %v715 = vadd.f32 %v707, 1e-05
    %v716 = vadd.f32 %v708, 1e-05
    %v717 = vadd.f32 %v709, 1e-05
    %v718 = vrsqrt.pop %v714
    %v719 = vrsqrt.pop %v715
    %v720 = vrsqrt.pop %v716
    %v721 = vrsqrt.pop %v717
    %v722 = vmul.f32 %v710, %v718
    %v723 = vmul.f32 %v711, %v719
    %v724 = vmul.f32 %v712, %v720
    %v725 = vmul.f32 %v713, %v721
    %v726 = vld [vmem:[%s3] sm:$0x1]
    %v728 = vlaneseq
    %v729 = vshrl.u32 %v728, 7
    %v730 = vsub.s32 0, %v729
    %v731 = vrot.slane %v726, %v730
    %v733 = vmul.f32 %v722, %v731
    %v734 = vmul.f32 %v723, %v731
    %v735 = vmul.f32 %v724, %v731
    %v736 = vmul.f32 %v725, %v731
    %v737 = vld [vmem:[%s4] sm:$0x1]
    %v739 = vlaneseq
    %v740 = vshrl.u32 %v739, 7
    %v741 = vsub.s32 0, %v740
    %v742 = vrot.slane %v737, %v741
    %v744 = vadd.f32 %v733, %v742
    %v745 = vadd.f32 %v734, %v742
    %v746 = vadd.f32 %v735, %v742
    %v747 = vadd.f32 %v736, %v742
    %v748 = vadd.f32 %v744, %v654
    %v749 = vadd.f32 %v745, %v658
    %v750 = vadd.f32 %v746, %v664
    %v751 = vadd.f32 %v747, %v668
    %v752 = vmax.f32 %v748, 0.0
    %v753 = vmax.f32 %v749, 0.0
    %v754 = vmax.f32 %v750, 0.0
    %v755 = vmax.f32 %v751, 0.0
    %v756 = vpack.c.bf16 %v753, %v752
    %v757 = vpack.c.bf16 %v755, %v754
    %v759 = vshrl.u32 %v756, 16
    %v761 = vrot.slane %v759, 7
    %v762 = vshll.u32 %v756, 16
    %v764 = vor.u32 %v761, %v762
    %v766 = vshrl.u32 %v757, 16
    %v768 = vrot.slane %v766, 7
    %v769 = vshll.u32 %v757, 16
    %v771 = vor.u32 %v768, %v769
    %v772 = vsel %vm178, %v761, %v771
    %v775 = vsel %vm197, 0, %v764
    %v776 = vrot.slane %v762, 1
    %v777 = vor.u32 %v759, %v776
    %v778 = vrot.slane %v769, 1
    %v779 = vsel %vm199, %v777, %v778
    %v780 = vor.u32 %v766, %v778
    %v783 = vsel %vm208, %v780, 0
    %v784 = vsel %vm232, 0, %v775
    %v785 = vsel %vm233, 0, %v772
    %v786 = vsel %vm258, 0, %v779
    %v787 = vsel %vm259, 0, %v783
    %v788 = vld [vmem:[#allocation7] sm:$0xf]
    %v789 = vld [vmem:[#allocation7 + $0x4] sm:$0xf]
    %v790 = vld [vmem:[#allocation7 + $0x8] sm:$0xf]
    %v791 = vld [vmem:[#allocation7 + $0xc] sm:$0xf]
    %v792 = vld [vmem:[#allocation7 + $0x10] sm:$0xf]
    %v793 = vld [vmem:[#allocation7 + $0x14] sm:$0xf]
    %v794 = vld [vmem:[#allocation7 + $0x18] sm:$0xf]
    %v795 = vld [vmem:[#allocation7 + $0x1c] sm:$0xf]
    %v796 = vld [vmem:[#allocation7 + $0x20] sm:$0xf]
    %v797 = vld [vmem:[#allocation7 + $0x24] sm:$0xf]
    %v798 = vld [vmem:[#allocation7 + $0x28] sm:$0xf]
    %v799 = vld [vmem:[#allocation7 + $0x2c] sm:$0xf]
    %v800 = vld [vmem:[#allocation7 + $0x30] sm:$0xf]
    %v801 = vld [vmem:[#allocation7 + $0x34] sm:$0xf]
    %v802 = vld [vmem:[#allocation7 + $0x38] sm:$0xf]
    %v803 = vld [vmem:[#allocation7 + $0x3c] sm:$0xf]
    %v804 = vld [vmem:[#allocation7 + $0x40] sm:$0xf]
    %v805 = vld [vmem:[#allocation7 + $0x44] sm:$0xf]
    %v806 = vld [vmem:[#allocation7 + $0x48] sm:$0xf]
    %v807 = vld [vmem:[#allocation7 + $0x4c] sm:$0xf]
    %v808 = vld [vmem:[#allocation7 + $0x50] sm:$0xf]
    %v809 = vld [vmem:[#allocation7 + $0x54] sm:$0xf]
    %v810 = vld [vmem:[#allocation7 + $0x58] sm:$0xf]
    %v811 = vld [vmem:[#allocation7 + $0x5c] sm:$0xf]
    %v812 = vld [vmem:[#allocation7 + $0x60] sm:$0xf]
    %v813 = vld [vmem:[#allocation7 + $0x64] sm:$0xf]
    %v814 = vld [vmem:[#allocation7 + $0x68] sm:$0xf]
    %v815 = vld [vmem:[#allocation7 + $0x6c] sm:$0xf]
    %v816 = vld [vmem:[#allocation7 + $0x70] sm:$0xf]
    %v817 = vld [vmem:[#allocation7 + $0x74] sm:$0xf]
    %v818 = vld [vmem:[#allocation7 + $0x78] sm:$0xf]
    %v819 = vld [vmem:[#allocation7 + $0x7c] sm:$0xf]
    %v820 = vld [vmem:[#allocation7 + $0x80] sm:$0xf]
    %v821 = vld [vmem:[#allocation7 + $0x84] sm:$0xf]
    %v822 = vld [vmem:[#allocation7 + $0x88] sm:$0xf]
    %v823 = vld [vmem:[#allocation7 + $0x8c] sm:$0xf]
    %v824 = vld [vmem:[#allocation7 + $0x90] sm:$0xf]
    %v825 = vld [vmem:[#allocation7 + $0x94] sm:$0xf]
    %v826 = vld [vmem:[#allocation7 + $0x98] sm:$0xf]
    %v827 = vld [vmem:[#allocation7 + $0x9c] sm:$0xf]
    %v828 = vld [vmem:[#allocation7 + $0xa0] sm:$0xf]
    %v829 = vld [vmem:[#allocation7 + $0xa4] sm:$0xf]
    %v830 = vld [vmem:[#allocation7 + $0xa8] sm:$0xf]
    %v831 = vld [vmem:[#allocation7 + $0xac] sm:$0xf]
    %v832 = vld [vmem:[#allocation7 + $0xb0] sm:$0xf]
    %v833 = vld [vmem:[#allocation7 + $0xb4] sm:$0xf]
    %v834 = vld [vmem:[#allocation7 + $0xb8] sm:$0xf]
    %v835 = vld [vmem:[#allocation7 + $0xbc] sm:$0xf]
    %v836 = vld [vmem:[%s6] sm:$0x1]
    %v838 = vlaneseq
    %v839 = vshrl.u32 %v838, 7
    %v840 = vsub.s32 0, %v839
    %v841 = vrot.slane %v836, %v840
    %v891 = vunpack.c.l.b16 %v788
    %v892 = vunpack.c.l.b16 %v789
    %v893 = vunpack.c.l.b16 %v790
    %v894 = vunpack.c.l.b16 %v791
    %v895 = vunpack.c.l.b16 %v792
    %v896 = vunpack.c.l.b16 %v793
    %v897 = vunpack.c.l.b16 %v794
    %v898 = vunpack.c.l.b16 %v795
    %v899 = vunpack.c.l.b16 %v796
    %v900 = vunpack.c.l.b16 %v797
    %v901 = vunpack.c.l.b16 %v798
    %v902 = vunpack.c.l.b16 %v799
    %v903 = vunpack.c.l.b16 %v800
    %v904 = vunpack.c.l.b16 %v801
    %v905 = vunpack.c.l.b16 %v802
    %v906 = vunpack.c.l.b16 %v803
    %v907 = vunpack.c.l.b16 %v804
    %v908 = vunpack.c.l.b16 %v805
    %v909 = vunpack.c.l.b16 %v806
    %v910 = vunpack.c.l.b16 %v807
    %v911 = vunpack.c.l.b16 %v808
    %v912 = vunpack.c.l.b16 %v809
    %v913 = vunpack.c.l.b16 %v810
    %v914 = vunpack.c.l.b16 %v811
    %v915 = vunpack.c.l.b16 %v812
    %v916 = vunpack.c.l.b16 %v813
    %v917 = vunpack.c.l.b16 %v814
    %v918 = vunpack.c.l.b16 %v815
    %v919 = vunpack.c.l.b16 %v816
    %v920 = vunpack.c.l.b16 %v817
    %v921 = vunpack.c.l.b16 %v818
    %v922 = vunpack.c.l.b16 %v819
    %v923 = vunpack.c.l.b16 %v820
    %v924 = vunpack.c.l.b16 %v821
    %v925 = vunpack.c.l.b16 %v822
    %v926 = vunpack.c.l.b16 %v823
    %v927 = vunpack.c.l.b16 %v824
    %v928 = vunpack.c.l.b16 %v825
    %v929 = vunpack.c.l.b16 %v826
    %v930 = vunpack.c.l.b16 %v827
    %v931 = vunpack.c.l.b16 %v828
    %v932 = vunpack.c.l.b16 %v829
    %v933 = vunpack.c.l.b16 %v830
    %v934 = vunpack.c.l.b16 %v831
    %v935 = vunpack.c.l.b16 %v832
    %v936 = vunpack.c.l.b16 %v833
    %v937 = vunpack.c.l.b16 %v834
    %v938 = vunpack.c.l.b16 %v835
    %v939 = vpack.c.b16 %v892, %v891
    %v940 = vpack.c.b16 %v894, %v893
    %v941 = vpack.c.b16 %v896, %v895
    %v942 = vpack.c.b16 %v898, %v897
    %v943 = vpack.c.b16 %v900, %v899
    %v944 = vpack.c.b16 %v902, %v901
    %v945 = vpack.c.b16 %v904, %v903
    %v946 = vpack.c.b16 %v906, %v905
    %v947 = vpack.c.b16 %v908, %v907
    %v948 = vpack.c.b16 %v910, %v909
    %v949 = vpack.c.b16 %v912, %v911
    %v950 = vpack.c.b16 %v914, %v913
    %v951 = vpack.c.b16 %v916, %v915
    %v952 = vpack.c.b16 %v918, %v917
    %v953 = vpack.c.b16 %v920, %v919
    %v954 = vpack.c.b16 %v922, %v921
    %v955 = vpack.c.b16 %v924, %v923
    %v956 = vpack.c.b16 %v926, %v925
    %v957 = vpack.c.b16 %v928, %v927
    %v958 = vpack.c.b16 %v930, %v929
    %v959 = vpack.c.b16 %v932, %v931
    %v960 = vpack.c.b16 %v934, %v933
    %v961 = vpack.c.b16 %v936, %v935
    %v962 = vpack.c.b16 %v938, %v937
    %987 = vmatprep.subr.bf16.mxu0 0
    %988 = vmatpush1.bf16.msra.mxu0 %v939
    %989 = vmatprep.subr.bf16.mxu0 0
    %990 = vmatpush1.bf16.msra.mxu0 %v940
    %991 = vmatprep.subr.bf16.mxu0 0
    %992 = vmatpush1.bf16.msra.mxu0 %v941
    %993 = vmatprep.subr.bf16.mxu0 0
    %994 = vmatpush1.bf16.msra.mxu0 %v942
    %995 = vmatprep.subr.bf16.mxu0 0
    %996 = vmatpush1.bf16.msra.mxu0 %v943
    %997 = vmatprep.subr.bf16.mxu0 0
    %998 = vmatpush1.bf16.msra.mxu0 %v944
    %999 = vmatprep.subr.bf16.mxu0 0
    %1000 = vmatpush1.bf16.msra.mxu0 %v945
    %1001 = vmatprep.subr.bf16.mxu0 0
    %1002 = vmatpush1.bf16.msra.mxu0 %v946
    %1003 = vmatprep.subr.bf16.mxu0 0
    %1004 = vmatpush1.bf16.msra.mxu0 %v947
    %1005 = vmatprep.subr.bf16.mxu0 0
    %1006 = vmatpush1.bf16.msra.mxu0 %v948
    %1007 = vmatprep.subr.bf16.mxu0 0
    %1008 = vmatpush1.bf16.msra.mxu0 %v949
    %1009 = vmatprep.subr.bf16.mxu0 0
    %1010 = vmatpush1.bf16.msra.mxu0 %v950
    %1011 = vmatprep.subr.bf16.mxu0 0
    %1012 = vmatpush1.bf16.msra.mxu0 %v951
    %1013 = vmatprep.subr.bf16.mxu0 0
    %1014 = vmatpush1.bf16.msra.mxu0 %v952
    %1015 = vmatprep.subr.bf16.mxu0 0
    %1016 = vmatpush1.bf16.msra.mxu0 %v953
    %1017 = vmatprep.subr.bf16.mxu0 0
    %1018 = vmatpush1.bf16.msra.mxu0 %v954
    %1019 = vmatprep.mubr.bf16.mxu0 %v756
    %1020 = vmatmul.mubr.bf16.gmra.mrb[0].mxu0 %v784
    %v1021 = vpop.f32.mrb[0].mxu0
    %v1022 = vadd.f32 %v841, %v1021
    %v1023 = vpop.f32.mrb[0].mxu0
    %v1024 = vpop.f32.mrb[0].mxu0
    %v1025 = vadd.f32 %v841, %v1024
    %v1026 = vpop.f32.mrb[0].mxu0
    %1027 = vmatprep.mubr.bf16.mxu0 %v757
    %1028 = vmatmul.mubr.bf16.gmra.mrb[0].mxu0 %v785
    %v1029 = vpop.f32.mrb[0].mxu0
    %v1030 = vadd.f32 %v841, %v1029
    %v1031 = vpop.f32.mrb[0].mxu0
    %v1032 = vpop.f32.mrb[0].mxu0
    %v1033 = vadd.f32 %v841, %v1032
    %v1034 = vpop.f32.mrb[0].mxu0
    %1035 = vdwg.mxu0
    %1036 = vmatprep.subr.bf16.mxu0 0
    %1037 = vmatpush1.bf16.msra.mxu0 %v955
    %1038 = vmatprep.subr.bf16.mxu0 0
    %1039 = vmatpush1.bf16.msra.mxu0 %v956
    %1040 = vmatprep.subr.bf16.mxu0 0
    %1041 = vmatpush1.bf16.msra.mxu0 %v957
    %1042 = vmatprep.subr.bf16.mxu0 0
    %1043 = vmatpush1.bf16.msra.mxu0 %v958
    %1044 = vmatprep.subr.bf16.mxu0 0
    %1045 = vmatpush1.bf16.msra.mxu0 %v959
    %1046 = vmatprep.subr.bf16.mxu0 0
    %1047 = vmatpush1.bf16.msra.mxu0 %v960
    %1048 = vmatprep.subr.bf16.mxu0 0
    %1049 = vmatpush1.bf16.msra.mxu0 %v961
    %1050 = vmatprep.subr.bf16.mxu0 0
    %1051 = vmatpush1.bf16.msra.mxu0 %v962
    %1052 = vmatprep.subr.bf16.mxu0 0
    %1053 = vmatpush1.bf16.msra.mxu0 0
    %1054 = vmatprep.subr.bf16.mxu0 0
    %1055 = vmatpush1.bf16.msra.mxu0 0
    %1056 = vmatprep.subr.bf16.mxu0 0
    %1057 = vmatpush1.bf16.msra.mxu0 0
    %1058 = vmatprep.subr.bf16.mxu0 0
    %1059 = vmatpush1.bf16.msra.mxu0 0
    %1060 = vmatprep.subr.bf16.mxu0 0
    %1061 = vmatpush1.bf16.msra.mxu0 0
    %1062 = vmatprep.subr.bf16.mxu0 0
    %1063 = vmatpush1.bf16.msra.mxu0 0
    %1064 = vmatprep.subr.bf16.mxu0 0
    %1065 = vmatpush1.bf16.msra.mxu0 0
    %1066 = vmatprep.subr.bf16.mxu0 0
    %1067 = vmatpush1.bf16.msra.mxu0 0
    %1068 = vmatprep.mubr.bf16.mxu0 0
    %1069 = vmatmul.mubr.bf16.gmra.mrb[0].mxu0 %v786
    %v1070 = vpop.f32.mrb[0].mxu0
    %v1071 = vadd.f32 %v1022, %v1070
    %v1072 = vpop.f32.mrb[0].mxu0
    %v1073 = vpop.f32.mrb[0].mxu0
    %v1074 = vadd.f32 %v1025, %v1073
    %v1075 = vpop.f32.mrb[0].mxu0
    %1076 = vmatprep.mubr.bf16.mxu0 0
    %1077 = vmatmul.mubr.bf16.gmra.mrb[0].mxu0 %v787
    %v1078 = vpop.f32.mrb[0].mxu0
    %v1079 = vadd.f32 %v1030, %v1078
    %v1080 = vpop.f32.mrb[0].mxu0
    %v1081 = vpop.f32.mrb[0].mxu0
    %v1082 = vadd.f32 %v1033, %v1081
    %v1083 = vpop.f32.mrb[0].mxu0
    %1084 = vdwg.mxu0
    %1085 = vadd.xlane.f32.xlu0 %v1071
    %v1086 = vpop.xlane.xlu0 %1085
    %1087 = vadd.xlane.f32.xlu0 %v1074
    %v1088 = vpop.xlane.xlu0 %1087
    %1089 = vadd.xlane.f32.xlu0 %v1079
    %v1090 = vpop.xlane.xlu0 %1089
    %1091 = vadd.xlane.f32.xlu0 %v1082
    %v1092 = vpop.xlane.xlu0 %1091
    %v1093 = vmul.f32 %v1071, %v1071
    %v1094 = vmul.f32 %v1074, %v1074
    %v1095 = vmul.f32 %v1079, %v1079
    %v1096 = vmul.f32 %v1082, %v1082
    %1097 = vadd.xlane.f32.xlu0 %v1093
    %v1098 = vpop.xlane.xlu0 %1097
    %1099 = vadd.xlane.f32.xlu0 %v1094
    %v1100 = vpop.xlane.xlu0 %1099
    %1101 = vadd.xlane.f32.xlu0 %v1095
    %v1102 = vpop.xlane.xlu0 %1101
    %1103 = vadd.xlane.f32.xlu0 %v1096
    %v1104 = vpop.xlane.xlu0 %1103
    %v1105 = vmul.f32 %v1086, 0.03125
    %v1106 = vmul.f32 %v1088, 0.03125
    %v1107 = vmul.f32 %v1090, 0.03125
    %v1108 = vmul.f32 %v1092, 0.03125
    %v1109 = vmul.f32 %v1098, 0.03125
    %v1110 = vmul.f32 %v1100, 0.03125
    %v1111 = vmul.f32 %v1102, 0.03125
    %v1112 = vmul.f32 %v1104, 0.03125
    %v1113 = vmul.f32 %v1105, %v1105
    %v1114 = vmul.f32 %v1106, %v1106
    %v1115 = vmul.f32 %v1107, %v1107
    %v1116 = vmul.f32 %v1108, %v1108
    %v1117 = vsub.f32 %v1109, %v1113
    %v1118 = vsub.f32 %v1110, %v1114
    %v1119 = vsub.f32 %v1111, %v1115
    %v1120 = vsub.f32 %v1112, %v1116
    %v1121 = vmax.f32 %v1117, 0.0
    %v1122 = vmax.f32 %v1118, 0.0
    %v1123 = vmax.f32 %v1119, 0.0
    %v1124 = vmax.f32 %v1120, 0.0
    %v1125 = vsub.f32 %v1071, %v1105
    %v1126 = vsub.f32 %v1074, %v1106
    %v1127 = vsub.f32 %v1079, %v1107
    %v1128 = vsub.f32 %v1082, %v1108
    %v1129 = vadd.f32 %v1121, 1e-05
    %v1130 = vadd.f32 %v1122, 1e-05
    %v1131 = vadd.f32 %v1123, 1e-05
    %v1132 = vadd.f32 %v1124, 1e-05
    %v1133 = vrsqrt.pop %v1129
    %v1134 = vrsqrt.pop %v1130
    %v1135 = vrsqrt.pop %v1131
    %v1136 = vrsqrt.pop %v1132
    %v1137 = vmul.f32 %v1125, %v1133
    %v1138 = vmul.f32 %v1126, %v1134
    %v1139 = vmul.f32 %v1127, %v1135
    %v1140 = vmul.f32 %v1128, %v1136
    %v1141 = vld [vmem:[%s7] sm:$0x1]
    %v1143 = vlaneseq
    %v1144 = vshrl.u32 %v1143, 7
    %v1145 = vsub.s32 0, %v1144
    %v1146 = vrot.slane %v1141, %v1145
    %v1148 = vmul.f32 %v1137, %v1146
    %v1149 = vmul.f32 %v1138, %v1146
    %v1150 = vmul.f32 %v1139, %v1146
    %v1151 = vmul.f32 %v1140, %v1146
    %v1152 = vld [vmem:[%s8] sm:$0x1]
    %v1154 = vlaneseq
    %v1155 = vshrl.u32 %v1154, 7
    %v1156 = vsub.s32 0, %v1155
    %v1157 = vrot.slane %v1152, %v1156
    %v1159 = vadd.f32 %v1148, %v1157
    %v1160 = vadd.f32 %v1149, %v1157
    %v1161 = vadd.f32 %v1150, %v1157
    %v1162 = vadd.f32 %v1151, %v1157
    %v1163 = vadd.f32 %v1159, %v752
    %v1164 = vadd.f32 %v1160, %v753
    %v1165 = vadd.f32 %v1161, %v754
    %v1166 = vadd.f32 %v1162, %v755
    %v1167 = vmax.f32 %v1163, 0.0
    %v1168 = vmax.f32 %v1164, 0.0
    %v1169 = vmax.f32 %v1165, 0.0
    %v1170 = vmax.f32 %v1166, 0.0
    %v1171 = vpack.c.bf16 %v1168, %v1167
    %v1172 = vpack.c.bf16 %v1170, %v1169
    %v1174 = vshrl.u32 %v1171, 16
    %v1176 = vrot.slane %v1174, 7
    %v1177 = vshll.u32 %v1171, 16
    %v1179 = vor.u32 %v1176, %v1177
    %v1181 = vshrl.u32 %v1172, 16
    %v1183 = vrot.slane %v1181, 7
    %v1184 = vshll.u32 %v1172, 16
    %v1186 = vor.u32 %v1183, %v1184
    %v1187 = vsel %vm178, %v1176, %v1186
    %v1190 = vsel %vm197, 0, %v1179
    %v1191 = vrot.slane %v1177, 1
    %v1192 = vor.u32 %v1174, %v1191
    %v1193 = vrot.slane %v1184, 1
    %v1194 = vsel %vm199, %v1192, %v1193
    %v1195 = vor.u32 %v1181, %v1193
    %v1198 = vsel %vm208, %v1195, 0
    %v1199 = vsel %vm232, 0, %v1190
    %v1200 = vsel %vm233, 0, %v1187
    %v1201 = vsel %vm258, 0, %v1194
    %v1202 = vsel %vm259, 0, %v1198
    %v1203 = vld [vmem:[#allocation8] sm:$0xf]
    %v1204 = vld [vmem:[#allocation8 + $0x4] sm:$0xf]
    %v1205 = vld [vmem:[#allocation8 + $0x8] sm:$0xf]
    %v1206 = vld [vmem:[#allocation8 + $0xc] sm:$0xf]
    %v1207 = vld [vmem:[#allocation8 + $0x10] sm:$0xf]
    %v1208 = vld [vmem:[#allocation8 + $0x14] sm:$0xf]
    %v1209 = vld [vmem:[#allocation8 + $0x18] sm:$0xf]
    %v1210 = vld [vmem:[#allocation8 + $0x1c] sm:$0xf]
    %v1211 = vld [vmem:[#allocation8 + $0x20] sm:$0xf]
    %v1212 = vld [vmem:[#allocation8 + $0x24] sm:$0xf]
    %v1213 = vld [vmem:[#allocation8 + $0x28] sm:$0xf]
    %v1214 = vld [vmem:[#allocation8 + $0x2c] sm:$0xf]
    %v1215 = vld [vmem:[#allocation8 + $0x30] sm:$0xf]
    %v1216 = vld [vmem:[#allocation8 + $0x34] sm:$0xf]
    %v1217 = vld [vmem:[#allocation8 + $0x38] sm:$0xf]
    %v1218 = vld [vmem:[#allocation8 + $0x3c] sm:$0xf]
    %v1219 = vld [vmem:[#allocation8 + $0x40] sm:$0xf]
    %v1220 = vld [vmem:[#allocation8 + $0x44] sm:$0xf]
    %v1221 = vld [vmem:[#allocation8 + $0x48] sm:$0xf]
    %v1222 = vld [vmem:[#allocation8 + $0x4c] sm:$0xf]
    %v1223 = vld [vmem:[#allocation8 + $0x50] sm:$0xf]
    %v1224 = vld [vmem:[#allocation8 + $0x54] sm:$0xf]
    %v1225 = vld [vmem:[#allocation8 + $0x58] sm:$0xf]
    %v1226 = vld [vmem:[#allocation8 + $0x5c] sm:$0xf]
    %v1227 = vld [vmem:[#allocation8 + $0x60] sm:$0xf]
    %v1228 = vld [vmem:[#allocation8 + $0x64] sm:$0xf]
    %v1229 = vld [vmem:[#allocation8 + $0x68] sm:$0xf]
    %v1230 = vld [vmem:[#allocation8 + $0x6c] sm:$0xf]
    %v1231 = vld [vmem:[#allocation8 + $0x70] sm:$0xf]
    %v1232 = vld [vmem:[#allocation8 + $0x74] sm:$0xf]
    %v1233 = vld [vmem:[#allocation8 + $0x78] sm:$0xf]
    %v1234 = vld [vmem:[#allocation8 + $0x7c] sm:$0xf]
    %v1235 = vld [vmem:[#allocation8 + $0x80] sm:$0xf]
    %v1236 = vld [vmem:[#allocation8 + $0x84] sm:$0xf]
    %v1237 = vld [vmem:[#allocation8 + $0x88] sm:$0xf]
    %v1238 = vld [vmem:[#allocation8 + $0x8c] sm:$0xf]
    %v1239 = vld [vmem:[#allocation8 + $0x90] sm:$0xf]
    %v1240 = vld [vmem:[#allocation8 + $0x94] sm:$0xf]
    %v1241 = vld [vmem:[#allocation8 + $0x98] sm:$0xf]
    %v1242 = vld [vmem:[#allocation8 + $0x9c] sm:$0xf]
    %v1243 = vld [vmem:[#allocation8 + $0xa0] sm:$0xf]
    %v1244 = vld [vmem:[#allocation8 + $0xa4] sm:$0xf]
    %v1245 = vld [vmem:[#allocation8 + $0xa8] sm:$0xf]
    %v1246 = vld [vmem:[#allocation8 + $0xac] sm:$0xf]
    %v1247 = vld [vmem:[#allocation8 + $0xb0] sm:$0xf]
    %v1248 = vld [vmem:[#allocation8 + $0xb4] sm:$0xf]
    %v1249 = vld [vmem:[#allocation8 + $0xb8] sm:$0xf]
    %v1250 = vld [vmem:[#allocation8 + $0xbc] sm:$0xf]
    %v1251 = vld [vmem:[%s10] sm:$0x1]
    %v1253 = vlaneseq
    %v1254 = vshrl.u32 %v1253, 7
    %v1255 = vsub.s32 0, %v1254
    %v1256 = vrot.slane %v1251, %v1255
    %v1306 = vunpack.c.l.b16 %v1203
    %v1307 = vunpack.c.l.b16 %v1204
    %v1308 = vunpack.c.l.b16 %v1205
    %v1309 = vunpack.c.l.b16 %v1206
    %v1310 = vunpack.c.l.b16 %v1207
    %v1311 = vunpack.c.l.b16 %v1208
    %v1312 = vunpack.c.l.b16 %v1209
    %v1313 = vunpack.c.l.b16 %v1210
    %v1314 = vunpack.c.l.b16 %v1211
    %v1315 = vunpack.c.l.b16 %v1212
    %v1316 = vunpack.c.l.b16 %v1213
    %v1317 = vunpack.c.l.b16 %v1214
    %v1318 = vunpack.c.l.b16 %v1215
    %v1319 = vunpack.c.l.b16 %v1216
    %v1320 = vunpack.c.l.b16 %v1217
    %v1321 = vunpack.c.l.b16 %v1218
    %v1322 = vunpack.c.l.b16 %v1219
    %v1323 = vunpack.c.l.b16 %v1220
    %v1324 = vunpack.c.l.b16 %v1221
    %v1325 = vunpack.c.l.b16 %v1222
    %v1326 = vunpack.c.l.b16 %v1223
    %v1327 = vunpack.c.l.b16 %v1224
    %v1328 = vunpack.c.l.b16 %v1225
    %v1329 = vunpack.c.l.b16 %v1226
    %v1330 = vunpack.c.l.b16 %v1227
    %v1331 = vunpack.c.l.b16 %v1228
    %v1332 = vunpack.c.l.b16 %v1229
    %v1333 = vunpack.c.l.b16 %v1230
    %v1334 = vunpack.c.l.b16 %v1231
    %v1335 = vunpack.c.l.b16 %v1232
    %v1336 = vunpack.c.l.b16 %v1233
    %v1337 = vunpack.c.l.b16 %v1234
    %v1338 = vunpack.c.l.b16 %v1235
    %v1339 = vunpack.c.l.b16 %v1236
    %v1340 = vunpack.c.l.b16 %v1237
    %v1341 = vunpack.c.l.b16 %v1238
    %v1342 = vunpack.c.l.b16 %v1239
    %v1343 = vunpack.c.l.b16 %v1240
    %v1344 = vunpack.c.l.b16 %v1241
    %v1345 = vunpack.c.l.b16 %v1242
    %v1346 = vunpack.c.l.b16 %v1243
    %v1347 = vunpack.c.l.b16 %v1244
    %v1348 = vunpack.c.l.b16 %v1245
    %v1349 = vunpack.c.l.b16 %v1246
    %v1350 = vunpack.c.l.b16 %v1247
    %v1351 = vunpack.c.l.b16 %v1248
    %v1352 = vunpack.c.l.b16 %v1249
    %v1353 = vunpack.c.l.b16 %v1250
    %v1354 = vpack.c.b16 %v1307, %v1306
    %v1355 = vpack.c.b16 %v1309, %v1308
    %v1356 = vpack.c.b16 %v1311, %v1310
    %v1357 = vpack.c.b16 %v1313, %v1312
    %v1358 = vpack.c.b16 %v1315, %v1314
    %v1359 = vpack.c.b16 %v1317, %v1316
    %v1360 = vpack.c.b16 %v1319, %v1318
    %v1361 = vpack.c.b16 %v1321, %v1320
    %v1362 = vpack.c.b16 %v1323, %v1322
    %v1363 = vpack.c.b16 %v1325, %v1324
    %v1364 = vpack.c.b16 %v1327, %v1326
    %v1365 = vpack.c.b16 %v1329, %v1328
    %v1366 = vpack.c.b16 %v1331, %v1330
    %v1367 = vpack.c.b16 %v1333, %v1332
    %v1368 = vpack.c.b16 %v1335, %v1334
    %v1369 = vpack.c.b16 %v1337, %v1336
    %v1370 = vpack.c.b16 %v1339, %v1338
    %v1371 = vpack.c.b16 %v1341, %v1340
    %v1372 = vpack.c.b16 %v1343, %v1342
    %v1373 = vpack.c.b16 %v1345, %v1344
    %v1374 = vpack.c.b16 %v1347, %v1346
    %v1375 = vpack.c.b16 %v1349, %v1348
    %v1376 = vpack.c.b16 %v1351, %v1350
    %v1377 = vpack.c.b16 %v1353, %v1352
    %1402 = vmatprep.subr.bf16.mxu0 0
    %1403 = vmatpush1.bf16.msra.mxu0 %v1354
    %1404 = vmatprep.subr.bf16.mxu0 0
    %1405 = vmatpush1.bf16.msra.mxu0 %v1355
    %1406 = vmatprep.subr.bf16.mxu0 0
    %1407 = vmatpush1.bf16.msra.mxu0 %v1356
    %1408 = vmatprep.subr.bf16.mxu0 0
    %1409 = vmatpush1.bf16.msra.mxu0 %v1357
    %1410 = vmatprep.subr.bf16.mxu0 0
    %1411 = vmatpush1.bf16.msra.mxu0 %v1358
    %1412 = vmatprep.subr.bf16.mxu0 0
    %1413 = vmatpush1.bf16.msra.mxu0 %v1359
    %1414 = vmatprep.subr.bf16.mxu0 0
    %1415 = vmatpush1.bf16.msra.mxu0 %v1360
    %1416 = vmatprep.subr.bf16.mxu0 0
    %1417 = vmatpush1.bf16.msra.mxu0 %v1361
    %1418 = vmatprep.subr.bf16.mxu0 0
    %1419 = vmatpush1.bf16.msra.mxu0 %v1362
    %1420 = vmatprep.subr.bf16.mxu0 0
    %1421 = vmatpush1.bf16.msra.mxu0 %v1363
    %1422 = vmatprep.subr.bf16.mxu0 0
    %1423 = vmatpush1.bf16.msra.mxu0 %v1364
    %1424 = vmatprep.subr.bf16.mxu0 0
    %1425 = vmatpush1.bf16.msra.mxu0 %v1365
    %1426 = vmatprep.subr.bf16.mxu0 0
    %1427 = vmatpush1.bf16.msra.mxu0 %v1366
    %1428 = vmatprep.subr.bf16.mxu0 0
    %1429 = vmatpush1.bf16.msra.mxu0 %v1367
    %1430 = vmatprep.subr.bf16.mxu0 0
    %1431 = vmatpush1.bf16.msra.mxu0 %v1368
    %1432 = vmatprep.subr.bf16.mxu0 0
    %1433 = vmatpush1.bf16.msra.mxu0 %v1369
    %1434 = vmatprep.mubr.bf16.mxu0 %v1171
    %1435 = vmatmul.mubr.bf16.gmra.mrb[0].mxu0 %v1199
    %v1436 = vpop.f32.mrb[0].mxu0
    %v1437 = vadd.f32 %v1256, %v1436
    %v1438 = vpop.f32.mrb[0].mxu0
    %v1439 = vpop.f32.mrb[0].mxu0
    %v1440 = vadd.f32 %v1256, %v1439
    %v1441 = vpop.f32.mrb[0].mxu0
    %1442 = vmatprep.mubr.bf16.mxu0 %v1172
    %1443 = vmatmul.mubr.bf16.gmra.mrb[0].mxu0 %v1200
    %v1444 = vpop.f32.mrb[0].mxu0
    %v1445 = vadd.f32 %v1256, %v1444
    %v1446 = vpop.f32.mrb[0].mxu0
    %v1447 = vpop.f32.mrb[0].mxu0
    %v1448 = vadd.f32 %v1256, %v1447
    %v1449 = vpop.f32.mrb[0].mxu0
    %1450 = vdwg.mxu0
    %1451 = vmatprep.subr.bf16.mxu0 0
    %1452 = vmatpush1.bf16.msra.mxu0 %v1370
    %1453 = vmatprep.subr.bf16.mxu0 0
    %1454 = vmatpush1.bf16.msra.mxu0 %v1371
    %1455 = vmatprep.subr.bf16.mxu0 0
    %1456 = vmatpush1.bf16.msra.mxu0 %v1372
    %1457 = vmatprep.subr.bf16.mxu0 0
    %1458 = vmatpush1.bf16.msra.mxu0 %v1373
    %1459 = vmatprep.subr.bf16.mxu0 0
    %1460 = vmatpush1.bf16.msra.mxu0 %v1374
    %1461 = vmatprep.subr.bf16.mxu0 0
    %1462 = vmatpush1.bf16.msra.mxu0 %v1375
    %1463 = vmatprep.subr.bf16.mxu0 0
    %1464 = vmatpush1.bf16.msra.mxu0 %v1376
    %1465 = vmatprep.subr.bf16.mxu0 0
    %1466 = vmatpush1.bf16.msra.mxu0 %v1377
    %1467 = vmatprep.subr.bf16.mxu0 0
    %1468 = vmatpush1.bf16.msra.mxu0 0
    %1469 = vmatprep.subr.bf16.mxu0 0
    %1470 = vmatpush1.bf16.msra.mxu0 0
    %1471 = vmatprep.subr.bf16.mxu0 0
    %1472 = vmatpush1.bf16.msra.mxu0 0
    %1473 = vmatprep.subr.bf16.mxu0 0
    %1474 = vmatpush1.bf16.msra.mxu0 0
    %1475 = vmatprep.subr.bf16.mxu0 0
    %1476 = vmatpush1.bf16.msra.mxu0 0
    %1477 = vmatprep.subr.bf16.mxu0 0
    %1478 = vmatpush1.bf16.msra.mxu0 0
    %1479 = vmatprep.subr.bf16.mxu0 0
    %1480 = vmatpush1.bf16.msra.mxu0 0
    %1481 = vmatprep.subr.bf16.mxu0 0
    %1482 = vmatpush1.bf16.msra.mxu0 0
    %1483 = vmatprep.mubr.bf16.mxu0 0
    %1484 = vmatmul.mubr.bf16.gmra.mrb[0].mxu0 %v1201
    %v1485 = vpop.f32.mrb[0].mxu0
    %v1486 = vadd.f32 %v1437, %v1485
    %v1487 = vpop.f32.mrb[0].mxu0
    %v1488 = vpop.f32.mrb[0].mxu0
    %v1489 = vadd.f32 %v1440, %v1488
    %v1490 = vpop.f32.mrb[0].mxu0
    %1491 = vmatprep.mubr.bf16.mxu0 0
    %1492 = vmatmul.mubr.bf16.gmra.mrb[0].mxu0 %v1202
    %v1493 = vpop.f32.mrb[0].mxu0
    %v1494 = vadd.f32 %v1445, %v1493
    %v1495 = vpop.f32.mrb[0].mxu0
    %v1496 = vpop.f32.mrb[0].mxu0
    %v1497 = vadd.f32 %v1448, %v1496
    %v1498 = vpop.f32.mrb[0].mxu0
    %1499 = vdwg.mxu0
    %1500 = vadd.xlane.f32.xlu0 %v1486
    %v1501 = vpop.xlane.xlu0 %1500
    %1502 = vadd.xlane.f32.xlu0 %v1489
    %v1503 = vpop.xlane.xlu0 %1502
    %1504 = vadd.xlane.f32.xlu0 %v1494
    %v1505 = vpop.xlane.xlu0 %1504
    %1506 = vadd.xlane.f32.xlu0 %v1497
    %v1507 = vpop.xlane.xlu0 %1506
    %v1508 = vmul.f32 %v1486, %v1486
    %v1509 = vmul.f32 %v1489, %v1489
    %v1510 = vmul.f32 %v1494, %v1494
    %v1511 = vmul.f32 %v1497, %v1497
    %1512 = vadd.xlane.f32.xlu0 %v1508
    %v1513 = vpop.xlane.xlu0 %1512
    %1514 = vadd.xlane.f32.xlu0 %v1509
    %v1515 = vpop.xlane.xlu0 %1514
    %1516 = vadd.xlane.f32.xlu0 %v1510
    %v1517 = vpop.xlane.xlu0 %1516
    %1518 = vadd.xlane.f32.xlu0 %v1511
    %v1519 = vpop.xlane.xlu0 %1518
    %v1520 = vmul.f32 %v1501, 0.03125
    %v1521 = vmul.f32 %v1503, 0.03125
    %v1522 = vmul.f32 %v1505, 0.03125
    %v1523 = vmul.f32 %v1507, 0.03125
    %v1524 = vmul.f32 %v1513, 0.03125
    %v1525 = vmul.f32 %v1515, 0.03125
    %v1526 = vmul.f32 %v1517, 0.03125
    %v1527 = vmul.f32 %v1519, 0.03125
    %v1528 = vmul.f32 %v1520, %v1520
    %v1529 = vmul.f32 %v1521, %v1521
    %v1530 = vmul.f32 %v1522, %v1522
    %v1531 = vmul.f32 %v1523, %v1523
    %v1532 = vsub.f32 %v1524, %v1528
    %v1533 = vsub.f32 %v1525, %v1529
    %v1534 = vsub.f32 %v1526, %v1530
    %v1535 = vsub.f32 %v1527, %v1531
    %v1536 = vmax.f32 %v1532, 0.0
    %v1537 = vmax.f32 %v1533, 0.0
    %v1538 = vmax.f32 %v1534, 0.0
    %v1539 = vmax.f32 %v1535, 0.0
    %v1540 = vsub.f32 %v1486, %v1520
    %v1541 = vsub.f32 %v1489, %v1521
    %v1542 = vsub.f32 %v1494, %v1522
    %v1543 = vsub.f32 %v1497, %v1523
    %v1544 = vadd.f32 %v1536, 1e-05
    %v1545 = vadd.f32 %v1537, 1e-05
    %v1546 = vadd.f32 %v1538, 1e-05
    %v1547 = vadd.f32 %v1539, 1e-05
    %v1548 = vrsqrt.pop %v1544
    %v1549 = vrsqrt.pop %v1545
    %v1550 = vrsqrt.pop %v1546
    %v1551 = vrsqrt.pop %v1547
    %v1552 = vmul.f32 %v1540, %v1548
    %v1553 = vmul.f32 %v1541, %v1549
    %v1554 = vmul.f32 %v1542, %v1550
    %v1555 = vmul.f32 %v1543, %v1551
    %v1556 = vld [vmem:[%s11] sm:$0x1]
    %v1558 = vlaneseq
    %v1559 = vshrl.u32 %v1558, 7
    %v1560 = vsub.s32 0, %v1559
    %v1561 = vrot.slane %v1556, %v1560
    %v1563 = vmul.f32 %v1552, %v1561
    %v1564 = vmul.f32 %v1553, %v1561
    %v1565 = vmul.f32 %v1554, %v1561
    %v1566 = vmul.f32 %v1555, %v1561
    %v1567 = vld [vmem:[%s12] sm:$0x1]
    %v1569 = vlaneseq
    %v1570 = vshrl.u32 %v1569, 7
    %v1571 = vsub.s32 0, %v1570
    %v1572 = vrot.slane %v1567, %v1571
    %v1574 = vadd.f32 %v1563, %v1572
    %v1575 = vadd.f32 %v1564, %v1572
    %v1576 = vadd.f32 %v1565, %v1572
    %v1577 = vadd.f32 %v1566, %v1572
    %v1578 = vadd.f32 %v1574, %v1167
    %v1579 = vadd.f32 %v1575, %v1168
    %v1580 = vadd.f32 %v1576, %v1169
    %v1581 = vadd.f32 %v1577, %v1170
    %v1582 = vmax.f32 %v1578, 0.0
    %v1583 = vmax.f32 %v1579, 0.0
    %v1584 = vmax.f32 %v1580, 0.0
    %v1585 = vmax.f32 %v1581, 0.0
    %1586 = vst [vmem:[#allocation10] sm:$0xff] %v1582
    %1587 = vst [vmem:[#allocation10 + $0x8] sm:$0xff] %v1583
    %1588 = vst [vmem:[#allocation10 + $0x10] sm:$0xff] %v1584
    %1589 = vst [vmem:[#allocation10 + $0x18] sm:$0xff] %v1585
    // Predicated region
    $region70: #{tpu_custom_call.1} parent=1 // pred_check
      _
    $region71: #{tpu_custom_call.1} parent=1 // pred_check_branch
      %1591 = sbr.rel (0) target = $region73
    $region72: #{tpu_custom_call.1} parent=1 // pred_region
      %s1593 = ssub.s32 512, 512
      %1594 = vsyncadd [#allocation4], %s1593
      %s1595 = sshll.u32 [#allocation10], 4
      %s1596 = int_to_ptr.vmem [resolvable:$true] %s1595
      %1601 = dma.vmem_to_hbm [thread:$0]  %s1596, 512, %s13, [#allocation4], 128, 128, 8
    $region73: #{tpu_custom_call.1} parent=1 // pred_fallthru
      _
    // Predicated region
    $region74: #{tpu_custom_call.1} parent=1 // pred_check
      _
    $region75: #{tpu_custom_call.1} parent=1 // pred_check_branch
      %1603 = sbr.rel (0) target = $region77
    $region76: #{tpu_custom_call.1} parent=1 // pred_region
      %1604 = dma.done [#allocation4], 512
    $region77: #{tpu_custom_call.1} parent=1 // pred_fallthru
      _
    %1605 = vsyncpa [#allocation3], 1
    %1606 = vsyncpa [#allocation6], 1
    %1607 = vsyncpa [#allocation9], 1
    %1608 = vsyncpa [#allocation4], 1

// kernel: tpu_custom_call.1
$region0: #{tpu_custom_call.1}
  #allocation0 [shape = 'u32[]', space=smem, size = 0x4, offset = 0x4, fixed_abs, tag = 'smem constant byte address 0x4 - core index']
  #allocation1 [shape = 'u32[144,128]{1,0:T(1,128)}', space=vmem, size = 0x12000, scoped, tag = 'internal scratch']
  %s0 = inlined_call_operand.hbm [shape: bf16[2,16,128], index: 0, kind: input, shape index: {}]
  %s1 = inlined_call_operand.hbm [shape: bf16[384,256], index: 1, kind: input, shape index: {}]
  %s2 = inlined_call_operand.vmem [shape: f32[1,256], index: 2, kind: input, shape index: {}]
  %s3 = inlined_call_operand.vmem [shape: f32[1,128], index: 3, kind: input, shape index: {}]
  %s4 = inlined_call_operand.vmem [shape: f32[1,128], index: 4, kind: input, shape index: {}]
  %s5 = inlined_call_operand.hbm [shape: bf16[384,128], index: 5, kind: input, shape index: {}]
  %s6 = inlined_call_operand.vmem [shape: f32[1,128], index: 6, kind: input, shape index: {}]
  %s7 = inlined_call_operand.vmem [shape: f32[1,128], index: 7, kind: input, shape index: {}]
  %s8 = inlined_call_operand.vmem [shape: f32[1,128], index: 8, kind: input, shape index: {}]
  %s9 = inlined_call_operand.hbm [shape: bf16[384,128], index: 9, kind: input, shape index: {}]
  %s10 = inlined_call_operand.vmem [shape: f32[1,128], index: 10, kind: input, shape index: {}]
  %s11 = inlined_call_operand.vmem [shape: f32[1,128], index: 11, kind: input, shape index: {}]
  %s12 = inlined_call_operand.vmem [shape: f32[1,128], index: 12, kind: input, shape index: {}]
  %s13 = inlined_call_operand.hbm [shape: f32[2,16,128], index: 13, kind: output, shape index: {}]
  %s14 = sld [smem:[#allocation0]]
  $region78: #{tpu_custom_call.1} parent=0
    _
  %s16 = ssub.s32 1, %s14
  %s17 = scalar_select 0, %s16, %s14
  $region1: #{tpu_custom_call.1} parent=0
    #allocation2 [shape = 'u8[8192]{0}', space=vmem, size = 0x2000, scoped, tag = 'input window, operand 0, single buffered']
    #allocation3 [shape = 's32[1]{0}', space=sflag, size = 0x4, scoped, tag = 'scoped memory for tpu_custom_call.1']
    #allocation4 [shape = 's32[1]{0}', space=sflag, size = 0x4, scoped, tag = 'scoped memory for tpu_custom_call.1']
    #allocation5 [shape = 'u8[196608]{0}', space=vmem, size = 0x30000, scoped, tag = 'input window, operand 1, single buffered']
    #allocation6 [shape = 's32[1]{0}', space=sflag, size = 0x4, scoped, tag = 'scoped memory for tpu_custom_call.1']
    #allocation7 [shape = 'u8[98304]{0}', space=vmem, size = 0x18000, scoped, tag = 'input window, operand 5, single buffered']
    #allocation8 [shape = 'u8[98304]{0}', space=vmem, size = 0x18000, scoped, tag = 'input window, operand 9, single buffered']
    #allocation9 [shape = 's32[1]{0}', space=sflag, size = 0x4, scoped, tag = 'scoped memory for tpu_custom_call.1']
    #allocation10 [shape = 'u8[16384]{0}', space=vmem, size = 0x4000, scoped, tag = 'output window, operand 0, single buffered']
    %18 = vsyncpa [#allocation3], 0
    %19 = vsyncpa [#allocation6], 0
    %20 = vsyncpa [#allocation9], 0
    %21 = vsyncpa [#allocation4], 0
    // Predicated region
    $region2: #{tpu_custom_call.1} parent=1 // pred_check
      _
    $region3: #{tpu_custom_call.1} parent=1 // pred_check_branch
      %23 = sbr.rel (0) target = $region5
    $region4: #{tpu_custom_call.1} parent=1 // pred_region
      %s25 = ssub.s32 256, 256
      %26 = vsyncadd [#allocation3], %s25
      %s27 = sshll.u32 [#allocation2], 4
      %s28 = int_to_ptr.vmem [resolvable:$true] %s27
      %33 = dma.hbm_to_vmem [thread:$0]  %s0, 256, %s28, [#allocation3], 64, 64, 4
    $region5: #{tpu_custom_call.1} parent=1 // pred_fallthru
      _
    // Predicated region
    $region6: #{tpu_custom_call.1} parent=1 // pred_check
      _
    $region7: #{tpu_custom_call.1} parent=1 // pred_check_branch
      %35 = sbr.rel (0) target = $region9
    $region8: #{tpu_custom_call.1} parent=1 // pred_region
      %s37 = ssub.s32 6144, 6144
      %38 = vsyncadd [#allocation6], %s37
      %s39 = sshll.u32 [#allocation5], 4
      %s40 = int_to_ptr.vmem [resolvable:$true] %s39
      %45 = dma.hbm_to_vmem [thread:$0]  %s1, 6144, %s40, [#allocation6], 128, 128, 8
    $region9: #{tpu_custom_call.1} parent=1 // pred_fallthru
      _
    // Predicated region
    $region10: #{tpu_custom_call.1} parent=1 // pred_check
      _
    $region11: #{tpu_custom_call.1} parent=1 // pred_check_branch
      %47 = sbr.rel (0) target = $region13
    $region12: #{tpu_custom_call.1} parent=1 // pred_region
      _
    $region13: #{tpu_custom_call.1} parent=1 // pred_fallthru
      _
    // Predicated region
    $region14: #{tpu_custom_call.1} parent=1 // pred_check
      _
    $region15: #{tpu_custom_call.1} parent=1 // pred_check_branch
      %49 = sbr.rel (0) target = $region17
    $region16: #{tpu_custom_call.1} parent=1 // pred_region
      _
    $region17: #{tpu_custom_call.1} parent=1 // pred_fallthru
      _
    // Predicated region
    $region18: #{tpu_custom_call.1} parent=1 // pred_check
      _
    $region19: #{tpu_custom_call.1} parent=1 // pred_check_branch
      %51 = sbr.rel (0) target = $region21
    $region20: #{tpu_custom_call.1} parent=1 // pred_region
      _
    $region21: #{tpu_custom_call.1} parent=1 // pred_fallthru
      _
    // Predicated region
    $region22: #{tpu_custom_call.1} parent=1 // pred_check
      _
    $region23: #{tpu_custom_call.1} parent=1 // pred_check_branch
      %53 = sbr.rel (0) target = $region25
    $region24: #{tpu_custom_call.1} parent=1 // pred_region
      %s55 = ssub.s32 3072, 3072
      %56 = vsyncadd [#allocation6], %s55
      %s57 = sshll.u32 [#allocation7], 4
      %s58 = int_to_ptr.vmem [resolvable:$true] %s57
      %63 = dma.hbm_to_vmem [thread:$0]  %s5, 3072, %s58, [#allocation6], 64, 64, 4
    $region25: #{tpu_custom_call.1} parent=1 // pred_fallthru
      _
    // Predicated region
    $region26: #{tpu_custom_call.1} parent=1 // pred_check
      _
    $region27: #{tpu_custom_call.1} parent=1 // pred_check_branch
      %65 = sbr.rel (0) target = $region29
    $region28: #{tpu_custom_call.1} parent=1 // pred_region
      _
    $region29: #{tpu_custom_call.1} parent=1 // pred_fallthru
      _
    // Predicated region
    $region30: #{tpu_custom_call.1} parent=1 // pred_check
      _
    $region31: #{tpu_custom_call.1} parent=1 // pred_check_branch
      %67 = sbr.rel (0) target = $region33
    $region32: #{tpu_custom_call.1} parent=1 // pred_region
      _
    $region33: #{tpu_custom_call.1} parent=1 // pred_fallthru
      _
    // Predicated region
    $region34: #{tpu_custom_call.1} parent=1 // pred_check
      _
    $region35: #{tpu_custom_call.1} parent=1 // pred_check_branch
      %69 = sbr.rel (0) target = $region37
    $region36: #{tpu_custom_call.1} parent=1 // pred_region
      _
    $region37: #{tpu_custom_call.1} parent=1 // pred_fallthru
      _
    // Predicated region
    $region38: #{tpu_custom_call.1} parent=1 // pred_check
      _
    $region39: #{tpu_custom_call.1} parent=1 // pred_check_branch
      %71 = sbr.rel (0) target = $region41
    $region40: #{tpu_custom_call.1} parent=1 // pred_region
      %s73 = ssub.s32 3072, 3072
      %74 = vsyncadd [#allocation9], %s73
      %s75 = sshll.u32 [#allocation8], 4
      %s76 = int_to_ptr.vmem [resolvable:$true] %s75
      %81 = dma.hbm_to_vmem [thread:$0]  %s9, 3072, %s76, [#allocation9], 64, 64, 4
    $region41: #{tpu_custom_call.1} parent=1 // pred_fallthru
      _
    // Predicated region
    $region42: #{tpu_custom_call.1} parent=1 // pred_check
      _
    $region43: #{tpu_custom_call.1} parent=1 // pred_check_branch
      %83 = sbr.rel (0) target = $region45
    $region44: #{tpu_custom_call.1} parent=1 // pred_region
      _
    $region45: #{tpu_custom_call.1} parent=1 // pred_fallthru
      _
    // Predicated region
    $region46: #{tpu_custom_call.1} parent=1 // pred_check
      _
    $region47: #{tpu_custom_call.1} parent=1 // pred_check_branch
      %85 = sbr.rel (0) target = $region49
    $region48: #{tpu_custom_call.1} parent=1 // pred_region
      _
    $region49: #{tpu_custom_call.1} parent=1 // pred_fallthru
      _
    // Predicated region
    $region50: #{tpu_custom_call.1} parent=1 // pred_check
      _
    $region51: #{tpu_custom_call.1} parent=1 // pred_check_branch
      %87 = sbr.rel (0) target = $region53
    $region52: #{tpu_custom_call.1} parent=1 // pred_region
      _
    $region53: #{tpu_custom_call.1} parent=1 // pred_fallthru
      _
    // Predicated region
    $region54: #{tpu_custom_call.1} parent=1 // pred_check
      _
    $region55: #{tpu_custom_call.1} parent=1 // pred_check_branch
      %89 = sbr.rel (0) target = $region57
    $region56: #{tpu_custom_call.1} parent=1 // pred_region
      %90 = dma.done [#allocation3], 256
    $region57: #{tpu_custom_call.1} parent=1 // pred_fallthru
      _
    // Predicated region
    $region58: #{tpu_custom_call.1} parent=1 // pred_check
      _
    $region59: #{tpu_custom_call.1} parent=1 // pred_check_branch
      %92 = sbr.rel (0) target = $region61
    $region60: #{tpu_custom_call.1} parent=1 // pred_region
      %93 = dma.done [#allocation6], 6144
    $region61: #{tpu_custom_call.1} parent=1 // pred_fallthru
      _
    // Predicated region
    $region62: #{tpu_custom_call.1} parent=1 // pred_check
      _
    $region63: #{tpu_custom_call.1} parent=1 // pred_check_branch
      %95 = sbr.rel (0) target = $region65
    $region64: #{tpu_custom_call.1} parent=1 // pred_region
      %96 = dma.done [#allocation6], 3072
    $region65: #{tpu_custom_call.1} parent=1 // pred_fallthru
      _
    // Predicated region
    $region66: #{tpu_custom_call.1} parent=1 // pred_check
      _
    $region67: #{tpu_custom_call.1} parent=1 // pred_check_branch
      %98 = sbr.rel (0) target = $region69
    $region68: #{tpu_custom_call.1} parent=1 // pred_region
      %99 = dma.done [#allocation9], 3072
    $region69: #{tpu_custom_call.1} parent=1 // pred_fallthru
      _
    %v103 = vld [vmem:[#allocation2] sm:$0xf]
    %v104 = vld [vmem:[#allocation2 + $0x4] sm:$0xf]
    %v105 = vld [vmem:[#allocation2 + $0x8] sm:$0xf]
    %v106 = vld [vmem:[#allocation2 + $0xc] sm:$0xf]
    %v107 = vlaneseq
    %v108 = vshrl.u32 %v107, 7
    %v109 = vadd.s32 %v108, 8
    %v110 = vadd.s32 %v108, 16
    %v111 = vadd.s32 %v108, 24
    %vm112 = vcmp.lt.s32.totalorder %v108, 0
    %v113 = vsub.s32 0, %v108
    %v114 = vsel %vm112, %v113, %v108
    %v115 = vshrl.u32 %v114, 4
    %v116 = vand.u32 %v114, 15
    %v117 = vsub.s32 0, %v116
    %v118 = vsel %vm112, %v117, %v116
    %vm119 = vcmp.lt.s32.totalorder %v109, 0
    %v120 = vsub.s32 0, %v109
    %v121 = vsel %vm119, %v120, %v109
    %v122 = vshrl.u32 %v121, 4
    %v123 = vand.u32 %v121, 15
    %v124 = vsub.s32 0, %v123
    %v125 = vsel %vm119, %v124, %v123
    %vm126 = vcmp.lt.s32.totalorder %v110, 0
    %v127 = vsub.s32 0, %v110
    %v128 = vsel %vm126, %v127, %v110
    %v129 = vshrl.u32 %v128, 4
    %v130 = vand.u32 %v128, 15
    %v131 = vsub.s32 0, %v130
    %v132 = vsel %vm126, %v131, %v130
    %vm133 = vcmp.lt.s32.totalorder %v111, 0
    %v134 = vsub.s32 0, %v111
    %v135 = vsel %vm133, %v134, %v111
    %v136 = vshrl.u32 %v135, 4
    %v137 = vand.u32 %v135, 15
    %v138 = vsub.s32 0, %v137
    %v139 = vsel %vm133, %v138, %v137
    %vm140 = vcmp.ne.s32.totalorder %v118, 0
    %vm141 = vcmp.ne.s32.totalorder %v125, 0
    %vm142 = vcmp.ne.s32.totalorder %v132, 0
    %vm143 = vcmp.ne.s32.totalorder %v139, 0
    %vm144 = vcmp.lt.s32.totalorder %v118, 0
    %vm145 = vcmp.lt.s32.totalorder %v125, 0
    %vm146 = vcmp.lt.s32.totalorder %v132, 0
    %vm147 = vcmp.lt.s32.totalorder %v139, 0
    %vm148 = vmand %vm144, %vm140
    %vm149 = vmand %vm145, %vm141
    %vm150 = vmand %vm146, %vm142
    %vm151 = vmand %vm147, %vm143
    %v152 = vadd.s32 %v118, 16
    %v153 = vadd.s32 %v125, 16
    %v154 = vadd.s32 %v132, 16
    %v155 = vadd.s32 %v139, 16
    %v156 = vsel %vm148, %v152, %v118
    %v157 = vsel %vm149, %v153, %v125
    %v158 = vsel %vm150, %v154, %v132
    %v159 = vsel %vm151, %v155, %v139
    %vm160 = vcmp.eq.s32.totalorder %v156, 0
    %vm161 = vcmp.eq.s32.totalorder %v157, 0
    %vm162 = vcmp.eq.s32.totalorder %v158, 0
    %vm163 = vcmp.eq.s32.totalorder %v159, 0
    %vm164 = vcmp.eq.s32.totalorder %v156, 15
    %vm165 = vcmp.eq.s32.totalorder %v157, 15
    %vm166 = vcmp.eq.s32.totalorder %v158, 15
    %vm167 = vcmp.eq.s32.totalorder %v159, 15
    %v172 = vunpack.c.l.b16 %v103
    %v173 = vunpack.c.l.b16 %v104
    %v174 = vunpack.c.l.b16 %v105
    %v175 = vunpack.c.l.b16 %v106
    %v176 = vpack.c.b16 %v173, %v172
    %v177 = vpack.c.b16 %v175, %v174
    %vm178 = vsmask.f32 256
    %v180 = vshrl.u32 %v176, 16
    %v182 = vrot.slane %v180, 7
    %v183 = vshll.u32 %v176, 16
    %v185 = vor.u32 %v182, %v183
    %v187 = vshrl.u32 %v177, 16
    %v189 = vrot.slane %v187, 7
    %v190 = vshll.u32 %v177, 16
    %v192 = vor.u32 %v189, %v190
    %v193 = vsel %vm178, %v182, %v192
    %vm196 = vcmask 1040384
    %vm197 = vmand %vm196, %vm178
    %v198 = vsel %vm197, 0, %v185
    %vm199 = vsmask.f32 7424
    %v200 = vrot.slane %v183, 1
    %v201 = vor.u32 %v180, %v200
    %v202 = vrot.slane %v190, 1
    %v203 = vsel %vm199, %v201, %v202
    %v204 = vor.u32 %v187, %v202
    %vm207 = vcmask 1047552
    %vm208 = vmand %vm207, %vm199
    %v209 = vsel %vm208, %v204, 0
    %v210 = vsel %vm160, 1, 0
    %v211 = vsel %vm161, 1, 0
    %v212 = vsel %vm162, 1, 0
    %v213 = vsel %vm163, 1, 0
    %vm214 = vcmp.eq.s32.totalorder %v210, 1
    %vm215 = vcmp.eq.s32.totalorder %v211, 1
    %vm216 = vcmp.eq.s32.totalorder %v212, 1
    %vm217 = vcmp.eq.s32.totalorder %v213, 1
    %vm218 = vmpackc.low %vm214, %vm214
    %vm219 = vmpackc.low %vm215, %vm215
    %vm220 = vmpackc.low %vm216, %vm216
    %vm221 = vmpackc.low %vm217, %vm217
    %v222 = vsel %vm218, 65537, 0
    %v223 = vsel %vm219, 65537, 0
    %v224 = vsel %vm220, 65537, 0
    %v225 = vsel %vm221, 65537, 0
    %v226 = vunpack.c.l.b16 %v222
    %v227 = vunpack.c.l.b16 %v223
    %v228 = vunpack.c.l.b16 %v224
    %v229 = vunpack.c.l.b16 %v225
    %v230 = vpack.c.b16 %v227, %v226
    %v231 = vpack.c.b16 %v229, %v228
    %vm232 = vcmp.ne.s16.totalorder %v230, 0
    %vm233 = vcmp.ne.s16.totalorder %v231, 0
    %v234 = vsel %vm232, 0, %v198
    %v235 = vsel %vm233, 0, %v193
    %v236 = vsel %vm164, 1, 0
    %v237 = vsel %vm165, 1, 0
    %v238 = vsel %vm166, 1, 0
    %v239 = vsel %vm167, 1, 0
    %vm240 = vcmp.eq.s32.totalorder %v236, 1
    %vm241 = vcmp.eq.s32.totalorder %v237, 1
    %vm242 = vcmp.eq.s32.totalorder %v238, 1
    %vm243 = vcmp.eq.s32.totalorder %v239, 1
    %vm244 = vmpackc.low %vm240, %vm240
    %vm245 = vmpackc.low %vm241, %vm241
    %vm246 = vmpackc.low %vm242, %vm242
    %vm247 = vmpackc.low %vm243, %vm243
    %v248 = vsel %vm244, 65537, 0
    %v249 = vsel %vm245, 65537, 0
    %v250 = vsel %vm246, 65537, 0
    %v251 = vsel %vm247, 65537, 0
    %v252 = vunpack.c.l.b16 %v248
    %v253 = vunpack.c.l.b16 %v249
    %v254 = vunpack.c.l.b16 %v250
    %v255 = vunpack.c.l.b16 %v251
    %v256 = vpack.c.b16 %v253, %v252
    %v257 = vpack.c.b16 %v255, %v254
    %vm258 = vcmp.ne.s16.totalorder %v256, 0
    %vm259 = vcmp.ne.s16.totalorder %v257, 0
    %v260 = vsel %vm258, 0, %v203
    %v261 = vsel %vm259, 0, %v209
    %v264 = vld [vmem:[#allocation5] sm:$0xff]
    %v265 = vld [vmem:[#allocation5 + $0x8] sm:$0xff]
    %v266 = vld [vmem:[#allocation5 + $0x10] sm:$0xff]
    %v267 = vld [vmem:[#allocation5 + $0x18] sm:$0xff]
    %v268 = vld [vmem:[#allocation5 + $0x20] sm:$0xff]
    %v269 = vld [vmem:[#allocation5 + $0x28] sm:$0xff]
    %v270 = vld [vmem:[#allocation5 + $0x30] sm:$0xff]
    %v271 = vld [vmem:[#allocation5 + $0x38] sm:$0xff]
    %v272 = vld [vmem:[#allocation5 + $0x40] sm:$0xff]
    %v273 = vld [vmem:[#allocation5 + $0x48] sm:$0xff]
    %v274 = vld [vmem:[#allocation5 + $0x50] sm:$0xff]
    %v275 = vld [vmem:[#allocation5 + $0x58] sm:$0xff]
    %v276 = vld [vmem:[#allocation5 + $0x60] sm:$0xff]
    %v277 = vld [vmem:[#allocation5 + $0x68] sm:$0xff]
    %v278 = vld [vmem:[#allocation5 + $0x70] sm:$0xff]
    %v279 = vld [vmem:[#allocation5 + $0x78] sm:$0xff]
    %v280 = vld [vmem:[#allocation5 + $0x80] sm:$0xff]
    %v281 = vld [vmem:[#allocation5 + $0x88] sm:$0xff]
    %v282 = vld [vmem:[#allocation5 + $0x90] sm:$0xff]
    %v283 = vld [vmem:[#allocation5 + $0x98] sm:$0xff]
    %v284 = vld [vmem:[#allocation5 + $0xa0] sm:$0xff]
    %v285 = vld [vmem:[#allocation5 + $0xa8] sm:$0xff]
    %v286 = vld [vmem:[#allocation5 + $0xb0] sm:$0xff]
    %v287 = vld [vmem:[#allocation5 + $0xb8] sm:$0xff]
    %v288 = vld [vmem:[#allocation5 + $0xc0] sm:$0xff]
    %v289 = vld [vmem:[#allocation5 + $0xc8] sm:$0xff]
    %v290 = vld [vmem:[#allocation5 + $0xd0] sm:$0xff]
    %v291 = vld [vmem:[#allocation5 + $0xd8] sm:$0xff]
    %v292 = vld [vmem:[#allocation5 + $0xe0] sm:$0xff]
    %v293 = vld [vmem:[#allocation5 + $0xe8] sm:$0xff]
    %v294 = vld [vmem:[#allocation5 + $0xf0] sm:$0xff]
    %v295 = vld [vmem:[#allocation5 + $0xf8] sm:$0xff]
    %v296 = vld [vmem:[#allocation5 + $0x100] sm:$0xff]
    %v297 = vld [vmem:[#allocation5 + $0x108] sm:$0xff]
    %v298 = vld [vmem:[#allocation5 + $0x110] sm:$0xff]
    %v299 = vld [vmem:[#allocation5 + $0x118] sm:$0xff]
    %v300 = vld [vmem:[#allocation5 + $0x120] sm:$0xff]
    %v301 = vld [vmem:[#allocation5 + $0x128] sm:$0xff]
    %v302 = vld [vmem:[#allocation5 + $0x130] sm:$0xff]
    %v303 = vld [vmem:[#allocation5 + $0x138] sm:$0xff]
    %v304 = vld [vmem:[#allocation5 + $0x140] sm:$0xff]
    %v305 = vld [vmem:[#allocation5 + $0x148] sm:$0xff]
    %v306 = vld [vmem:[#allocation5 + $0x150] sm:$0xff]
    %v307 = vld [vmem:[#allocation5 + $0x158] sm:$0xff]
    %v308 = vld [vmem:[#allocation5 + $0x160] sm:$0xff]
    %v309 = vld [vmem:[#allocation5 + $0x168] sm:$0xff]
    %v310 = vld [vmem:[#allocation5 + $0x170] sm:$0xff]
    %v311 = vld [vmem:[#allocation5 + $0x178] sm:$0xff]
    %v312 = vld [vmem:[%s2] sm:$0x3]
    %v314 = vlaneseq
    %v315 = vshrl.u32 %v314, 7
    %v316 = vsub.s32 0, %v315
    %v317 = vrot.slane %v312, %v316
    %v318 = vlaneseq
    %v319 = vshrl.u32 %v318, 7
    %v320 = vsub.s32 1, %v319
    %v321 = vrot.slane %v312, %v320
    %v372 = vunpack.c.l.b16 %v264
    %v373 = vunpack.c.h.b16 %v264
    %v374 = vunpack.c.l.b16 %v265
    %v375 = vunpack.c.h.b16 %v265
    %v376 = vunpack.c.l.b16 %v266
    %v377 = vunpack.c.h.b16 %v266
    %v378 = vunpack.c.l.b16 %v267
    %v379 = vunpack.c.h.b16 %v267
    %v380 = vunpack.c.l.b16 %v268
    %v381 = vunpack.c.h.b16 %v268
    %v382 = vunpack.c.l.b16 %v269
    %v383 = vunpack.c.h.b16 %v269
    %v384 = vunpack.c.l.b16 %v270
    %v385 = vunpack.c.h.b16 %v270
    %v386 = vunpack.c.l.b16 %v271
    %v387 = vunpack.c.h.b16 %v271
    %v388 = vunpack.c.l.b16 %v272
    %v389 = vunpack.c.h.b16 %v272
    %v390 = vunpack.c.l.b16 %v273
    %v391 = vunpack.c.h.b16 %v273
    %v392 = vunpack.c.l.b16 %v274
    %v393 = vunpack.c.h.b16 %v274
    %v394 = vunpack.c.l.b16 %v275
    %v395 = vunpack.c.h.b16 %v275
    %v396 = vunpack.c.l.b16 %v276
    %v397 = vunpack.c.h.b16 %v276
    %v398 = vunpack.c.l.b16 %v277
    %v399 = vunpack.c.h.b16 %v277
    %v400 = vunpack.c.l.b16 %v278
    %v401 = vunpack.c.h.b16 %v278
    %v402 = vunpack.c.l.b16 %v279
    %v403 = vunpack.c.h.b16 %v279
    %v404 = vunpack.c.l.b16 %v280
    %v405 = vunpack.c.h.b16 %v280
    %v406 = vunpack.c.l.b16 %v281
    %v407 = vunpack.c.h.b16 %v281
    %v408 = vunpack.c.l.b16 %v282
    %v409 = vunpack.c.h.b16 %v282
    %v410 = vunpack.c.l.b16 %v283
    %v411 = vunpack.c.h.b16 %v283
    %v412 = vunpack.c.l.b16 %v284
    %v413 = vunpack.c.h.b16 %v284
    %v414 = vunpack.c.l.b16 %v285
    %v415 = vunpack.c.h.b16 %v285
    %v416 = vunpack.c.l.b16 %v286
    %v417 = vunpack.c.h.b16 %v286
    %v418 = vunpack.c.l.b16 %v287
    %v419 = vunpack.c.h.b16 %v287
    %v420 = vunpack.c.l.b16 %v288
    %v421 = vunpack.c.h.b16 %v288
    %v422 = vunpack.c.l.b16 %v289
    %v423 = vunpack.c.h.b16 %v289
    %v424 = vunpack.c.l.b16 %v290
    %v425 = vunpack.c.h.b16 %v290
    %v426 = vunpack.c.l.b16 %v291
    %v427 = vunpack.c.h.b16 %v291
    %v428 = vunpack.c.l.b16 %v292
    %v429 = vunpack.c.h.b16 %v292
    %v430 = vunpack.c.l.b16 %v293
    %v431 = vunpack.c.h.b16 %v293
    %v432 = vunpack.c.l.b16 %v294
    %v433 = vunpack.c.h.b16 %v294
    %v434 = vunpack.c.l.b16 %v295
    %v435 = vunpack.c.h.b16 %v295
    %v436 = vunpack.c.l.b16 %v296
    %v437 = vunpack.c.h.b16 %v296
    %v438 = vunpack.c.l.b16 %v297
    %v439 = vunpack.c.h.b16 %v297
    %v440 = vunpack.c.l.b16 %v298
    %v441 = vunpack.c.h.b16 %v298
    %v442 = vunpack.c.l.b16 %v299
    %v443 = vunpack.c.h.b16 %v299
    %v444 = vunpack.c.l.b16 %v300
    %v445 = vunpack.c.h.b16 %v300
    %v446 = vunpack.c.l.b16 %v301
    %v447 = vunpack.c.h.b16 %v301
    %v448 = vunpack.c.l.b16 %v302
    %v449 = vunpack.c.h.b16 %v302
    %v450 = vunpack.c.l.b16 %v303
    %v451 = vunpack.c.h.b16 %v303
    %v452 = vunpack.c.l.b16 %v304
    %v453 = vunpack.c.h.b16 %v304
    %v454 = vunpack.c.l.b16 %v305
    %v455 = vunpack.c.h.b16 %v305
    %v456 = vunpack.c.l.b16 %v306
    %v457 = vunpack.c.h.b16 %v306
    %v458 = vunpack.c.l.b16 %v307
    %v459 = vunpack.c.h.b16 %v307
    %v460 = vunpack.c.l.b16 %v308
    %v461 = vunpack.c.h.b16 %v308
    %v462 = vunpack.c.l.b16 %v309
    %v463 = vunpack.c.h.b16 %v309
    %v464 = vunpack.c.l.b16 %v310
    %v465 = vunpack.c.h.b16 %v310
    %v466 = vunpack.c.l.b16 %v311
    %v467 = vunpack.c.h.b16 %v311
    %v468 = vpack.c.b16 %v374, %v372
    %v469 = vpack.c.b16 %v375, %v373
    %v470 = vpack.c.b16 %v378, %v376
    %v471 = vpack.c.b16 %v379, %v377
    %v472 = vpack.c.b16 %v382, %v380
    %v473 = vpack.c.b16 %v383, %v381
    %v474 = vpack.c.b16 %v386, %v384
    %v475 = vpack.c.b16 %v387, %v385
    %v476 = vpack.c.b16 %v390, %v388
    %v477 = vpack.c.b16 %v391, %v389
    %v478 = vpack.c.b16 %v394, %v392
    %v479 = vpack.c.b16 %v395, %v393
    %v480 = vpack.c.b16 %v398, %v396
    %v481 = vpack.c.b16 %v399, %v397
    %v482 = vpack.c.b16 %v402, %v400
    %v483 = vpack.c.b16 %v403, %v401
    %v484 = vpack.c.b16 %v406, %v404
    %v485 = vpack.c.b16 %v407, %v405
    %v486 = vpack.c.b16 %v410, %v408
    %v487 = vpack.c.b16 %v411, %v409
    %v488 = vpack.c.b16 %v414, %v412
    %v489 = vpack.c.b16 %v415, %v413
    %v490 = vpack.c.b16 %v418, %v416
    %v491 = vpack.c.b16 %v419, %v417
    %v492 = vpack.c.b16 %v422, %v420
    %v493 = vpack.c.b16 %v423, %v421
    %v494 = vpack.c.b16 %v426, %v424
    %v495 = vpack.c.b16 %v427, %v425
    %v496 = vpack.c.b16 %v430, %v428
    %v497 = vpack.c.b16 %v431, %v429
    %v498 = vpack.c.b16 %v434, %v432
    %v499 = vpack.c.b16 %v435, %v433
    %v500 = vpack.c.b16 %v438, %v436
    %v501 = vpack.c.b16 %v439, %v437
    %v502 = vpack.c.b16 %v442, %v440
    %v503 = vpack.c.b16 %v443, %v441
    %v504 = vpack.c.b16 %v446, %v444
    %v505 = vpack.c.b16 %v447, %v445
    %v506 = vpack.c.b16 %v450, %v448
    %v507 = vpack.c.b16 %v451, %v449
    %v508 = vpack.c.b16 %v454, %v452
    %v509 = vpack.c.b16 %v455, %v453
    %v510 = vpack.c.b16 %v458, %v456
    %v511 = vpack.c.b16 %v459, %v457
    %v512 = vpack.c.b16 %v462, %v460
    %v513 = vpack.c.b16 %v463, %v461
    %v514 = vpack.c.b16 %v466, %v464
    %v515 = vpack.c.b16 %v467, %v465
    %564 = vmatprep.subr.bf16.mxu0 %v469
    %565 = vmatpush1.bf16.msra.mxu0 %v468
    %566 = vmatprep.subr.bf16.mxu0 %v471
    %567 = vmatpush1.bf16.msra.mxu0 %v470
    %568 = vmatprep.subr.bf16.mxu0 %v473
    %569 = vmatpush1.bf16.msra.mxu0 %v472
    %570 = vmatprep.subr.bf16.mxu0 %v475
    %571 = vmatpush1.bf16.msra.mxu0 %v474
    %572 = vmatprep.subr.bf16.mxu0 %v477
    %573 = vmatpush1.bf16.msra.mxu0 %v476
    %574 = vmatprep.subr.bf16.mxu0 %v479
    %575 = vmatpush1.bf16.msra.mxu0 %v478
    %576 = vmatprep.subr.bf16.mxu0 %v481
    %577 = vmatpush1.bf16.msra.mxu0 %v480
    %578 = vmatprep.subr.bf16.mxu0 %v483
    %579 = vmatpush1.bf16.msra.mxu0 %v482
    %580 = vmatprep.subr.bf16.mxu0 %v485
    %581 = vmatpush1.bf16.msra.mxu0 %v484
    %582 = vmatprep.subr.bf16.mxu0 %v487
    %583 = vmatpush1.bf16.msra.mxu0 %v486
    %584 = vmatprep.subr.bf16.mxu0 %v489
    %585 = vmatpush1.bf16.msra.mxu0 %v488
    %586 = vmatprep.subr.bf16.mxu0 %v491
    %587 = vmatpush1.bf16.msra.mxu0 %v490
    %588 = vmatprep.subr.bf16.mxu0 %v493
    %589 = vmatpush1.bf16.msra.mxu0 %v492
    %590 = vmatprep.subr.bf16.mxu0 %v495
    %591 = vmatpush1.bf16.msra.mxu0 %v494
    %592 = vmatprep.subr.bf16.mxu0 %v497
    %593 = vmatpush1.bf16.msra.mxu0 %v496
    %594 = vmatprep.subr.bf16.mxu0 %v499
    %595 = vmatpush1.bf16.msra.mxu0 %v498
    %596 = vmatprep.mubr.bf16.mxu0 %v176
    %597 = vmatmul.mubr.bf16.gmra.mrb[0].mxu0 %v234
    %v598 = vpop.f32.mrb[0].mxu0
    %v599 = vadd.f32 %v317, %v598
    %v600 = vpop.f32.mrb[0].mxu0
    %v601 = vadd.f32 %v321, %v600
    %v602 = vpop.f32.mrb[0].mxu0
    %v603 = vadd.f32 %v317, %v602
    %v604 = vpop.f32.mrb[0].mxu0
    %v605 = vadd.f32 %v321, %v604
    %606 = vmatprep.mubr.bf16.mxu0 %v177
    %607 = vmatmul.mubr.bf16.gmra.mrb[0].mxu0 %v235
    %v608 = vpop.f32.mrb[0].mxu0
    %v609 = vadd.f32 %v317, %v608
    %v610 = vpop.f32.mrb[0].mxu0
    %v611 = vadd.f32 %v321, %v610
    %v612 = vpop.f32.mrb[0].mxu0
    %v613 = vadd.f32 %v317, %v612
    %v614 = vpop.f32.mrb[0].mxu0
    %v615 = vadd.f32 %v321, %v614
    %616 = vdwg.mxu0
    %617 = vmatprep.subr.bf16.mxu0 %v501
    %618 = vmatpush1.bf16.msra.mxu0 %v500
    %619 = vmatprep.subr.bf16.mxu0 %v503
    %620 = vmatpush1.bf16.msra.mxu0 %v502
    %621 = vmatprep.subr.bf16.mxu0 %v505
    %622 = vmatpush1.bf16.msra.mxu0 %v504
    %623 = vmatprep.subr.bf16.mxu0 %v507
    %624 = vmatpush1.bf16.msra.mxu0 %v506
    %625 = vmatprep.subr.bf16.mxu0 %v509
    %626 = vmatpush1.bf16.msra.mxu0 %v508
    %627 = vmatprep.subr.bf16.mxu0 %v511
    %628 = vmatpush1.bf16.msra.mxu0 %v510
    %629 = vmatprep.subr.bf16.mxu0 %v513
    %630 = vmatpush1.bf16.msra.mxu0 %v512
    %631 = vmatprep.subr.bf16.mxu0 %v515
    %632 = vmatpush1.bf16.msra.mxu0 %v514
    %633 = vmatprep.subr.bf16.mxu0 0
    %634 = vmatpush1.bf16.msra.mxu0 0
    %635 = vmatprep.subr.bf16.mxu0 0
    %636 = vmatpush1.bf16.msra.mxu0 0
    %637 = vmatprep.subr.bf16.mxu0 0
    %638 = vmatpush1.bf16.msra.mxu0 0
    %639 = vmatprep.subr.bf16.mxu0 0
    %640 = vmatpush1.bf16.msra.mxu0 0
    %641 = vmatprep.subr.bf16.mxu0 0
    %642 = vmatpush1.bf16.msra.mxu0 0
    %643 = vmatprep.subr.bf16.mxu0 0
    %644 = vmatpush1.bf16.msra.mxu0 0
    %645 = vmatprep.subr.bf16.mxu0 0
    %646 = vmatpush1.bf16.msra.mxu0 0
    %647 = vmatprep.subr.bf16.mxu0 0
    %648 = vmatpush1.bf16.msra.mxu0 0
    %649 = vmatprep.mubr.bf16.mxu0 0
    %650 = vmatmul.mubr.bf16.gmra.mrb[0].mxu0 %v260
    %v651 = vpop.f32.mrb[0].mxu0
    %v652 = vadd.f32 %v599, %v651
    %v653 = vpop.f32.mrb[0].mxu0
    %v654 = vadd.f32 %v601, %v653
    %v655 = vpop.f32.mrb[0].mxu0
    %v656 = vadd.f32 %v603, %v655
    %v657 = vpop.f32.mrb[0].mxu0
    %v658 = vadd.f32 %v605, %v657
    %659 = vmatprep.mubr.bf16.mxu0 0
    %660 = vmatmul.mubr.bf16.gmra.mrb[0].mxu0 %v261
    %v661 = vpop.f32.mrb[0].mxu0
    %v662 = vadd.f32 %v609, %v661
    %v663 = vpop.f32.mrb[0].mxu0
    %v664 = vadd.f32 %v611, %v663
    %v665 = vpop.f32.mrb[0].mxu0
    %v666 = vadd.f32 %v613, %v665
    %v667 = vpop.f32.mrb[0].mxu0
    %v668 = vadd.f32 %v615, %v667
    %669 = vdwg.mxu0
    %670 = vadd.xlane.f32.xlu0 %v652
    %v671 = vpop.xlane.xlu0 %670
    %672 = vadd.xlane.f32.xlu0 %v656
    %v673 = vpop.xlane.xlu0 %672
    %674 = vadd.xlane.f32.xlu0 %v662
    %v675 = vpop.xlane.xlu0 %674
    %676 = vadd.xlane.f32.xlu0 %v666
    %v677 = vpop.xlane.xlu0 %676
    %v678 = vmul.f32 %v652, %v652
    %v679 = vmul.f32 %v656, %v656
    %v680 = vmul.f32 %v662, %v662
    %v681 = vmul.f32 %v666, %v666
    %682 = vadd.xlane.f32.xlu0 %v678
    %v683 = vpop.xlane.xlu0 %682
    %684 = vadd.xlane.f32.xlu0 %v679
    %v685 = vpop.xlane.xlu0 %684
    %686 = vadd.xlane.f32.xlu0 %v680
    %v687 = vpop.xlane.xlu0 %686
    %688 = vadd.xlane.f32.xlu0 %v681
    %v689 = vpop.xlane.xlu0 %688
    %v690 = vmul.f32 %v671, 0.03125
    %v691 = vmul.f32 %v673, 0.03125
    %v692 = vmul.f32 %v675, 0.03125
    %v693 = vmul.f32 %v677, 0.03125
    %v694 = vmul.f32 %v683, 0.03125
    %v695 = vmul.f32 %v685, 0.03125
    %v696 = vmul.f32 %v687, 0.03125
    %v697 = vmul.f32 %v689, 0.03125
    %v698 = vmul.f32 %v690, %v690
    %v699 = vmul.f32 %v691, %v691
    %v700 = vmul.f32 %v692, %v692
    %v701 = vmul.f32 %v693, %v693
    %v702 = vsub.f32 %v694, %v698
    %v703 = vsub.f32 %v695, %v699
    %v704 = vsub.f32 %v696, %v700
    %v705 = vsub.f32 %v697, %v701
    %v706 = vmax.f32 %v702, 0.0
    %v707 = vmax.f32 %v703, 0.0
    %v708 = vmax.f32 %v704, 0.0
    %v709 = vmax.f32 %v705, 0.0
    %v710 = vsub.f32 %v652, %v690
    %v711 = vsub.f32 %v656, %v691
    %v712 = vsub.f32 %v662, %v692
    %v713 = vsub.f32 %v666, %v693
    %v714 = vadd.f32 %v706, 1e-05
    %v715 = vadd.f32 %v707, 1e-05
    %v716 = vadd.f32 %v708, 1e-05
    %v717 = vadd.f32 %v709, 1e-05
    %v718 = vrsqrt.pop %v714
    %v719 = vrsqrt.pop %v715
    %v720 = vrsqrt.pop %v716
    %v721 = vrsqrt.pop %v717
    %v722 = vmul.f32 %v710, %v718
    %v723 = vmul.f32 %v711, %v719
    %v724 = vmul.f32 %v712, %v720
    %v725 = vmul.f32 %v713, %v721
    %v726 = vld [vmem:[%s3] sm:$0x1]
    %v728 = vlaneseq
    %v729 = vshrl.u32 %v728, 7
    %v730 = vsub.s32 0, %v729
    %v731 = vrot.slane %v726, %v730
    %v733 = vmul.f32 %v722, %v731
    %v734 = vmul.f32 %v723, %v731
    %v735 = vmul.f32 %v724, %v731
    %v736 = vmul.f32 %v725, %v731
    %v737 = vld [vmem:[%s4] sm:$0x1]
    %v739 = vlaneseq
    %v740 = vshrl.u32 %v739, 7
    %v741 = vsub.s32 0, %v740
    %v742 = vrot.slane %v737, %v741
    %v744 = vadd.f32 %v733, %v742
    %v745 = vadd.f32 %v734, %v742
    %v746 = vadd.f32 %v735, %v742
    %v747 = vadd.f32 %v736, %v742
    %v748 = vadd.f32 %v744, %v654
    %v749 = vadd.f32 %v745, %v658
    %v750 = vadd.f32 %v746, %v664
    %v751 = vadd.f32 %v747, %v668
    %v752 = vmax.f32 %v748, 0.0
    %v753 = vmax.f32 %v749, 0.0
    %v754 = vmax.f32 %v750, 0.0
    %v755 = vmax.f32 %v751, 0.0
    %v756 = vpack.c.bf16 %v753, %v752
    %v757 = vpack.c.bf16 %v755, %v754
    %v759 = vshrl.u32 %v756, 16
    %v761 = vrot.slane %v759, 7
    %v762 = vshll.u32 %v756, 16
    %v764 = vor.u32 %v761, %v762
    %v766 = vshrl.u32 %v757, 16
    %v768 = vrot.slane %v766, 7
    %v769 = vshll.u32 %v757, 16
    %v771 = vor.u32 %v768, %v769
    %v772 = vsel %vm178, %v761, %v771
    %v775 = vsel %vm197, 0, %v764
    %v776 = vrot.slane %v762, 1
    %v777 = vor.u32 %v759, %v776
    %v778 = vrot.slane %v769, 1
    %v779 = vsel %vm199, %v777, %v778
    %v780 = vor.u32 %v766, %v778
    %v783 = vsel %vm208, %v780, 0
    %v784 = vsel %vm232, 0, %v775
    %v785 = vsel %vm233, 0, %v772
    %v786 = vsel %vm258, 0, %v779
    %v787 = vsel %vm259, 0, %v783
    %v788 = vld [vmem:[#allocation7] sm:$0xf]
    %v789 = vld [vmem:[#allocation7 + $0x4] sm:$0xf]
    %v790 = vld [vmem:[#allocation7 + $0x8] sm:$0xf]
    %v791 = vld [vmem:[#allocation7 + $0xc] sm:$0xf]
    %v792 = vld [vmem:[#allocation7 + $0x10] sm:$0xf]
    %v793 = vld [vmem:[#allocation7 + $0x14] sm:$0xf]
    %v794 = vld [vmem:[#allocation7 + $0x18] sm:$0xf]
    %v795 = vld [vmem:[#allocation7 + $0x1c] sm:$0xf]
    %v796 = vld [vmem:[#allocation7 + $0x20] sm:$0xf]
    %v797 = vld [vmem:[#allocation7 + $0x24] sm:$0xf]
    %v798 = vld [vmem:[#allocation7 + $0x28] sm:$0xf]
    %v799 = vld [vmem:[#allocation7 + $0x2c] sm:$0xf]
    %v800 = vld [vmem:[#allocation7 + $0x30] sm:$0xf]
    %v801 = vld [vmem:[#allocation7 + $0x34] sm:$0xf]
    %v802 = vld [vmem:[#allocation7 + $0x38] sm:$0xf]
    %v803 = vld [vmem:[#allocation7 + $0x3c] sm:$0xf]
    %v804 = vld [vmem:[#allocation7 + $0x40] sm:$0xf]
    %v805 = vld [vmem:[#allocation7 + $0x44] sm:$0xf]
    %v806 = vld [vmem:[#allocation7 + $0x48] sm:$0xf]
    %v807 = vld [vmem:[#allocation7 + $0x4c] sm:$0xf]
    %v808 = vld [vmem:[#allocation7 + $0x50] sm:$0xf]
    %v809 = vld [vmem:[#allocation7 + $0x54] sm:$0xf]
    %v810 = vld [vmem:[#allocation7 + $0x58] sm:$0xf]
    %v811 = vld [vmem:[#allocation7 + $0x5c] sm:$0xf]
    %v812 = vld [vmem:[#allocation7 + $0x60] sm:$0xf]
    %v813 = vld [vmem:[#allocation7 + $0x64] sm:$0xf]
    %v814 = vld [vmem:[#allocation7 + $0x68] sm:$0xf]
    %v815 = vld [vmem:[#allocation7 + $0x6c] sm:$0xf]
    %v816 = vld [vmem:[#allocation7 + $0x70] sm:$0xf]
    %v817 = vld [vmem:[#allocation7 + $0x74] sm:$0xf]
    %v818 = vld [vmem:[#allocation7 + $0x78] sm:$0xf]
    %v819 = vld [vmem:[#allocation7 + $0x7c] sm:$0xf]
    %v820 = vld [vmem:[#allocation7 + $0x80] sm:$0xf]
    %v821 = vld [vmem:[#allocation7 + $0x84] sm:$0xf]
    %v822 = vld [vmem:[#allocation7 + $0x88] sm:$0xf]
    %v823 = vld [vmem:[#allocation7 + $0x8c] sm:$0xf]
    %v824 = vld [vmem:[#allocation7 + $0x90] sm:$0xf]
    %v825 = vld [vmem:[#allocation7 + $0x94] sm:$0xf]
    %v826 = vld [vmem:[#allocation7 + $0x98] sm:$0xf]
    %v827 = vld [vmem:[#allocation7 + $0x9c] sm:$0xf]
    %v828 = vld [vmem:[#allocation7 + $0xa0] sm:$0xf]
    %v829 = vld [vmem:[#allocation7 + $0xa4] sm:$0xf]
    %v830 = vld [vmem:[#allocation7 + $0xa8] sm:$0xf]
    %v831 = vld [vmem:[#allocation7 + $0xac] sm:$0xf]
    %v832 = vld [vmem:[#allocation7 + $0xb0] sm:$0xf]
    %v833 = vld [vmem:[#allocation7 + $0xb4] sm:$0xf]
    %v834 = vld [vmem:[#allocation7 + $0xb8] sm:$0xf]
    %v835 = vld [vmem:[#allocation7 + $0xbc] sm:$0xf]
    %v836 = vld [vmem:[%s6] sm:$0x1]
    %v838 = vlaneseq
    %v839 = vshrl.u32 %v838, 7
    %v840 = vsub.s32 0, %v839
    %v841 = vrot.slane %v836, %v840
    %v891 = vunpack.c.l.b16 %v788
    %v892 = vunpack.c.l.b16 %v789
    %v893 = vunpack.c.l.b16 %v790
    %v894 = vunpack.c.l.b16 %v791
    %v895 = vunpack.c.l.b16 %v792
    %v896 = vunpack.c.l.b16 %v793
    %v897 = vunpack.c.l.b16 %v794
    %v898 = vunpack.c.l.b16 %v795
    %v899 = vunpack.c.l.b16 %v796
    %v900 = vunpack.c.l.b16 %v797
    %v901 = vunpack.c.l.b16 %v798
    %v902 = vunpack.c.l.b16 %v799
    %v903 = vunpack.c.l.b16 %v800
    %v904 = vunpack.c.l.b16 %v801
    %v905 = vunpack.c.l.b16 %v802
    %v906 = vunpack.c.l.b16 %v803
    %v907 = vunpack.c.l.b16 %v804
    %v908 = vunpack.c.l.b16 %v805
    %v909 = vunpack.c.l.b16 %v806
    %v910 = vunpack.c.l.b16 %v807
    %v911 = vunpack.c.l.b16 %v808
    %v912 = vunpack.c.l.b16 %v809
    %v913 = vunpack.c.l.b16 %v810
    %v914 = vunpack.c.l.b16 %v811
    %v915 = vunpack.c.l.b16 %v812
    %v916 = vunpack.c.l.b16 %v813
    %v917 = vunpack.c.l.b16 %v814
    %v918 = vunpack.c.l.b16 %v815
    %v919 = vunpack.c.l.b16 %v816
    %v920 = vunpack.c.l.b16 %v817
    %v921 = vunpack.c.l.b16 %v818
    %v922 = vunpack.c.l.b16 %v819
    %v923 = vunpack.c.l.b16 %v820
    %v924 = vunpack.c.l.b16 %v821
    %v925 = vunpack.c.l.b16 %v822
    %v926 = vunpack.c.l.b16 %v823
    %v927 = vunpack.c.l.b16 %v824
    %v928 = vunpack.c.l.b16 %v825
    %v929 = vunpack.c.l.b16 %v826
    %v930 = vunpack.c.l.b16 %v827
    %v931 = vunpack.c.l.b16 %v828
    %v932 = vunpack.c.l.b16 %v829
    %v933 = vunpack.c.l.b16 %v830
    %v934 = vunpack.c.l.b16 %v831
    %v935 = vunpack.c.l.b16 %v832
    %v936 = vunpack.c.l.b16 %v833
    %v937 = vunpack.c.l.b16 %v834
    %v938 = vunpack.c.l.b16 %v835
    %v939 = vpack.c.b16 %v892, %v891
    %v940 = vpack.c.b16 %v894, %v893
    %v941 = vpack.c.b16 %v896, %v895
    %v942 = vpack.c.b16 %v898, %v897
    %v943 = vpack.c.b16 %v900, %v899
    %v944 = vpack.c.b16 %v902, %v901
    %v945 = vpack.c.b16 %v904, %v903
    %v946 = vpack.c.b16 %v906, %v905
    %v947 = vpack.c.b16 %v908, %v907
    %v948 = vpack.c.b16 %v910, %v909
    %v949 = vpack.c.b16 %v912, %v911
    %v950 = vpack.c.b16 %v914, %v913
    %v951 = vpack.c.b16 %v916, %v915
    %v952 = vpack.c.b16 %v918, %v917
    %v953 = vpack.c.b16 %v920, %v919
    %v954 = vpack.c.b16 %v922, %v921
    %v955 = vpack.c.b16 %v924, %v923
    %v956 = vpack.c.b16 %v926, %v925
    %v957 = vpack.c.b16 %v928, %v927
    %v958 = vpack.c.b16 %v930, %v929
    %v959 = vpack.c.b16 %v932, %v931
    %v960 = vpack.c.b16 %v934, %v933
    %v961 = vpack.c.b16 %v936, %v935
    %v962 = vpack.c.b16 %v938, %v937
    %987 = vmatprep.subr.bf16.mxu0 0
    %988 = vmatpush1.bf16.msra.mxu0 %v939
    %989 = vmatprep.subr.bf16.mxu0 0
    %990 = vmatpush1.bf16.msra.mxu0 %v940
    %991 = vmatprep.subr.bf16.mxu0 0
    %992 = vmatpush1.bf16.msra.mxu0 %v941
    %993 = vmatprep.subr.bf16.mxu0 0
    %994 = vmatpush1.bf16.msra.mxu0 %v942
    %995 = vmatprep.subr.bf16.mxu0 0
    %996 = vmatpush1.bf16.msra.mxu0 %v943
    %997 = vmatprep.subr.bf16.mxu0 0
    %998 = vmatpush1.bf16.msra.mxu0 %v944
    %999 = vmatprep.subr.bf16.mxu0 0
    %1000 = vmatpush1.bf16.msra.mxu0 %v945
    %1001 = vmatprep.subr.bf16.mxu0 0
    %1002 = vmatpush1.bf16.msra.mxu0 %v946
    %1003 = vmatprep.subr.bf16.mxu0 0
    %1004 = vmatpush1.bf16.msra.mxu0 %v947
    %1005 = vmatprep.subr.bf16.mxu0 0
    %1006 = vmatpush1.bf16.msra.mxu0 %v948
    %1007 = vmatprep.subr.bf16.mxu0 0
    %1008 = vmatpush1.bf16.msra.mxu0 %v949
    %1009 = vmatprep.subr.bf16.mxu0 0
    %1010 = vmatpush1.bf16.msra.mxu0 %v950
    %1011 = vmatprep.subr.bf16.mxu0 0
    %1012 = vmatpush1.bf16.msra.mxu0 %v951
    %1013 = vmatprep.subr.bf16.mxu0 0
    %1014 = vmatpush1.bf16.msra.mxu0 %v952
    %1015 = vmatprep.subr.bf16.mxu0 0
    %1016 = vmatpush1.bf16.msra.mxu0 %v953
    %1017 = vmatprep.subr.bf16.mxu0 0
    %1018 = vmatpush1.bf16.msra.mxu0 %v954
    %1019 = vmatprep.mubr.bf16.mxu0 %v756
    %1020 = vmatmul.mubr.bf16.gmra.mrb[0].mxu0 %v784
    %v1021 = vpop.f32.mrb[0].mxu0
    %v1022 = vadd.f32 %v841, %v1021
    %v1023 = vpop.f32.mrb[0].mxu0
    %v1024 = vpop.f32.mrb[0].mxu0
    %v1025 = vadd.f32 %v841, %v1024
    %v1026 = vpop.f32.mrb[0].mxu0
    %1027 = vmatprep.mubr.bf16.mxu0 %v757
    %1028 = vmatmul.mubr.bf16.gmra.mrb[0].mxu0 %v785
    %v1029 = vpop.f32.mrb[0].mxu0
    %v1030 = vadd.f32 %v841, %v1029
    %v1031 = vpop.f32.mrb[0].mxu0
    %v1032 = vpop.f32.mrb[0].mxu0
    %v1033 = vadd.f32 %v841, %v1032
    %v1034 = vpop.f32.mrb[0].mxu0
    %1035 = vdwg.mxu0
    %1036 = vmatprep.subr.bf16.mxu0 0
    %1037 = vmatpush1.bf16.msra.mxu0 %v955
    %1038 = vmatprep.subr.bf16.mxu0 0
    %1039 = vmatpush1.bf16.msra.mxu0 %v956
    %1040 = vmatprep.subr.bf16.mxu0 0
    %1041 = vmatpush1.bf16.msra.mxu0 %v957
    %1042 = vmatprep.subr.bf16.mxu0 0
    %1043 = vmatpush1.bf16.msra.mxu0 %v958
    %1044 = vmatprep.subr.bf16.mxu0 0
    %1045 = vmatpush1.bf16.msra.mxu0 %v959
    %1046 = vmatprep.subr.bf16.mxu0 0
    %1047 = vmatpush1.bf16.msra.mxu0 %v960
    %1048 = vmatprep.subr.bf16.mxu0 0
    %1049 = vmatpush1.bf16.msra.mxu0 %v961
    %1050 = vmatprep.subr.bf16.mxu0 0
    %1051 = vmatpush1.bf16.msra.mxu0 %v962
    %1052 = vmatprep.subr.bf16.mxu0 0
    %1053 = vmatpush1.bf16.msra.mxu0 0
    %1054 = vmatprep.subr.bf16.mxu0 0
    %1055 = vmatpush1.bf16.msra.mxu0 0
    %1056 = vmatprep.subr.bf16.mxu0 0
    %1057 = vmatpush1.bf16.msra.mxu0 0
    %1058 = vmatprep.subr.bf16.mxu0 0
    %1059 = vmatpush1.bf16.msra.mxu0 0
    %1060 = vmatprep.subr.bf16.mxu0 0
    %1061 = vmatpush1.bf16.msra.mxu0 0
    %1062 = vmatprep.subr.bf16.mxu0 0
    %1063 = vmatpush1.bf16.msra.mxu0 0
    %1064 = vmatprep.subr.bf16.mxu0 0
    %1065 = vmatpush1.bf16.msra.mxu0 0
    %1066 = vmatprep.subr.bf16.mxu0 0
    %1067 = vmatpush1.bf16.msra.mxu0 0
    %1068 = vmatprep.mubr.bf16.mxu0 0
    %1069 = vmatmul.mubr.bf16.gmra.mrb[0].mxu0 %v786
    %v1070 = vpop.f32.mrb[0].mxu0
    %v1071 = vadd.f32 %v1022, %v1070
    %v1072 = vpop.f32.mrb[0].mxu0
    %v1073 = vpop.f32.mrb[0].mxu0
    %v1074 = vadd.f32 %v1025, %v1073
    %v1075 = vpop.f32.mrb[0].mxu0
    %1076 = vmatprep.mubr.bf16.mxu0 0
    %1077 = vmatmul.mubr.bf16.gmra.mrb[0].mxu0 %v787
    %v1078 = vpop.f32.mrb[0].mxu0
    %v1079 = vadd.f32 %v1030, %v1078
    %v1080 = vpop.f32.mrb[0].mxu0
    %v1081 = vpop.f32.mrb[0].mxu0
    %v1082 = vadd.f32 %v1033, %v1081
    %v1083 = vpop.f32.mrb[0].mxu0
    %1084 = vdwg.mxu0
    %1085 = vadd.xlane.f32.xlu0 %v1071
    %v1086 = vpop.xlane.xlu0 %1085
    %1087 = vadd.xlane.f32.xlu0 %v1074
    %v1088 = vpop.xlane.xlu0 %1087
    %1089 = vadd.xlane.f32.xlu0 %v1079
    %v1090 = vpop.xlane.xlu0 %1089
    %1091 = vadd.xlane.f32.xlu0 %v1082
    %v1092 = vpop.xlane.xlu0 %1091
    %v1093 = vmul.f32 %v1071, %v1071
    %v1094 = vmul.f32 %v1074, %v1074
    %v1095 = vmul.f32 %v1079, %v1079
    %v1096 = vmul.f32 %v1082, %v1082
    %1097 = vadd.xlane.f32.xlu0 %v1093
    %v1098 = vpop.xlane.xlu0 %1097
    %1099 = vadd.xlane.f32.xlu0 %v1094
    %v1100 = vpop.xlane.xlu0 %1099
    %1101 = vadd.xlane.f32.xlu0 %v1095
    %v1102 = vpop.xlane.xlu0 %1101
    %1103 = vadd.xlane.f32.xlu0 %v1096
    %v1104 = vpop.xlane.xlu0 %1103
    %v1105 = vmul.f32 %v1086, 0.03125
    %v1106 = vmul.f32 %v1088, 0.03125
    %v1107 = vmul.f32 %v1090, 0.03125
    %v1108 = vmul.f32 %v1092, 0.03125
    %v1109 = vmul.f32 %v1098, 0.03125
    %v1110 = vmul.f32 %v1100, 0.03125
    %v1111 = vmul.f32 %v1102, 0.03125
    %v1112 = vmul.f32 %v1104, 0.03125
    %v1113 = vmul.f32 %v1105, %v1105
    %v1114 = vmul.f32 %v1106, %v1106
    %v1115 = vmul.f32 %v1107, %v1107
    %v1116 = vmul.f32 %v1108, %v1108
    %v1117 = vsub.f32 %v1109, %v1113
    %v1118 = vsub.f32 %v1110, %v1114
    %v1119 = vsub.f32 %v1111, %v1115
    %v1120 = vsub.f32 %v1112, %v1116
    %v1121 = vmax.f32 %v1117, 0.0
    %v1122 = vmax.f32 %v1118, 0.0
    %v1123 = vmax.f32 %v1119, 0.0
    %v1124 = vmax.f32 %v1120, 0.0
    %v1125 = vsub.f32 %v1071, %v1105
    %v1126 = vsub.f32 %v1074, %v1106
    %v1127 = vsub.f32 %v1079, %v1107
    %v1128 = vsub.f32 %v1082, %v1108
    %v1129 = vadd.f32 %v1121, 1e-05
    %v1130 = vadd.f32 %v1122, 1e-05
    %v1131 = vadd.f32 %v1123, 1e-05
    %v1132 = vadd.f32 %v1124, 1e-05
    %v1133 = vrsqrt.pop %v1129
    %v1134 = vrsqrt.pop %v1130
    %v1135 = vrsqrt.pop %v1131
    %v1136 = vrsqrt.pop %v1132
    %v1137 = vmul.f32 %v1125, %v1133
    %v1138 = vmul.f32 %v1126, %v1134
    %v1139 = vmul.f32 %v1127, %v1135
    %v1140 = vmul.f32 %v1128, %v1136
    %v1141 = vld [vmem:[%s7] sm:$0x1]
    %v1143 = vlaneseq
    %v1144 = vshrl.u32 %v1143, 7
    %v1145 = vsub.s32 0, %v1144
    %v1146 = vrot.slane %v1141, %v1145
    %v1148 = vmul.f32 %v1137, %v1146
    %v1149 = vmul.f32 %v1138, %v1146
    %v1150 = vmul.f32 %v1139, %v1146
    %v1151 = vmul.f32 %v1140, %v1146
    %v1152 = vld [vmem:[%s8] sm:$0x1]
    %v1154 = vlaneseq
    %v1155 = vshrl.u32 %v1154, 7
    %v1156 = vsub.s32 0, %v1155
    %v1157 = vrot.slane %v1152, %v1156
    %v1159 = vadd.f32 %v1148, %v1157
    %v1160 = vadd.f32 %v1149, %v1157
    %v1161 = vadd.f32 %v1150, %v1157
    %v1162 = vadd.f32 %v1151, %v1157
    %v1163 = vadd.f32 %v1159, %v752
    %v1164 = vadd.f32 %v1160, %v753
    %v1165 = vadd.f32 %v1161, %v754
    %v1166 = vadd.f32 %v1162, %v755
    %v1167 = vmax.f32 %v1163, 0.0
    %v1168 = vmax.f32 %v1164, 0.0
    %v1169 = vmax.f32 %v1165, 0.0
    %v1170 = vmax.f32 %v1166, 0.0
    %v1171 = vpack.c.bf16 %v1168, %v1167
    %v1172 = vpack.c.bf16 %v1170, %v1169
    %v1174 = vshrl.u32 %v1171, 16
    %v1176 = vrot.slane %v1174, 7
    %v1177 = vshll.u32 %v1171, 16
    %v1179 = vor.u32 %v1176, %v1177
    %v1181 = vshrl.u32 %v1172, 16
    %v1183 = vrot.slane %v1181, 7
    %v1184 = vshll.u32 %v1172, 16
    %v1186 = vor.u32 %v1183, %v1184
    %v1187 = vsel %vm178, %v1176, %v1186
    %v1190 = vsel %vm197, 0, %v1179
    %v1191 = vrot.slane %v1177, 1
    %v1192 = vor.u32 %v1174, %v1191
    %v1193 = vrot.slane %v1184, 1
    %v1194 = vsel %vm199, %v1192, %v1193
    %v1195 = vor.u32 %v1181, %v1193
    %v1198 = vsel %vm208, %v1195, 0
    %v1199 = vsel %vm232, 0, %v1190
    %v1200 = vsel %vm233, 0, %v1187
    %v1201 = vsel %vm258, 0, %v1194
    %v1202 = vsel %vm259, 0, %v1198
    %v1203 = vld [vmem:[#allocation8] sm:$0xf]
    %v1204 = vld [vmem:[#allocation8 + $0x4] sm:$0xf]
    %v1205 = vld [vmem:[#allocation8 + $0x8] sm:$0xf]
    %v1206 = vld [vmem:[#allocation8 + $0xc] sm:$0xf]
    %v1207 = vld [vmem:[#allocation8 + $0x10] sm:$0xf]
    %v1208 = vld [vmem:[#allocation8 + $0x14] sm:$0xf]
    %v1209 = vld [vmem:[#allocation8 + $0x18] sm:$0xf]
    %v1210 = vld [vmem:[#allocation8 + $0x1c] sm:$0xf]
    %v1211 = vld [vmem:[#allocation8 + $0x20] sm:$0xf]
    %v1212 = vld [vmem:[#allocation8 + $0x24] sm:$0xf]
    %v1213 = vld [vmem:[#allocation8 + $0x28] sm:$0xf]
    %v1214 = vld [vmem:[#allocation8 + $0x2c] sm:$0xf]
    %v1215 = vld [vmem:[#allocation8 + $0x30] sm:$0xf]
    %v1216 = vld [vmem:[#allocation8 + $0x34] sm:$0xf]
    %v1217 = vld [vmem:[#allocation8 + $0x38] sm:$0xf]
    %v1218 = vld [vmem:[#allocation8 + $0x3c] sm:$0xf]
    %v1219 = vld [vmem:[#allocation8 + $0x40] sm:$0xf]
    %v1220 = vld [vmem:[#allocation8 + $0x44] sm:$0xf]
    %v1221 = vld [vmem:[#allocation8 + $0x48] sm:$0xf]
    %v1222 = vld [vmem:[#allocation8 + $0x4c] sm:$0xf]
    %v1223 = vld [vmem:[#allocation8 + $0x50] sm:$0xf]
    %v1224 = vld [vmem:[#allocation8 + $0x54] sm:$0xf]
    %v1225 = vld [vmem:[#allocation8 + $0x58] sm:$0xf]
    %v1226 = vld [vmem:[#allocation8 + $0x5c] sm:$0xf]
    %v1227 = vld [vmem:[#allocation8 + $0x60] sm:$0xf]
    %v1228 = vld [vmem:[#allocation8 + $0x64] sm:$0xf]
    %v1229 = vld [vmem:[#allocation8 + $0x68] sm:$0xf]
    %v1230 = vld [vmem:[#allocation8 + $0x6c] sm:$0xf]
    %v1231 = vld [vmem:[#allocation8 + $0x70] sm:$0xf]
    %v1232 = vld [vmem:[#allocation8 + $0x74] sm:$0xf]
    %v1233 = vld [vmem:[#allocation8 + $0x78] sm:$0xf]
    %v1234 = vld [vmem:[#allocation8 + $0x7c] sm:$0xf]
    %v1235 = vld [vmem:[#allocation8 + $0x80] sm:$0xf]
    %v1236 = vld [vmem:[#allocation8 + $0x84] sm:$0xf]
    %v1237 = vld [vmem:[#allocation8 + $0x88] sm:$0xf]
    %v1238 = vld [vmem:[#allocation8 + $0x8c] sm:$0xf]
    %v1239 = vld [vmem:[#allocation8 + $0x90] sm:$0xf]
    %v1240 = vld [vmem:[#allocation8 + $0x94] sm:$0xf]
    %v1241 = vld [vmem:[#allocation8 + $0x98] sm:$0xf]
    %v1242 = vld [vmem:[#allocation8 + $0x9c] sm:$0xf]
    %v1243 = vld [vmem:[#allocation8 + $0xa0] sm:$0xf]
    %v1244 = vld [vmem:[#allocation8 + $0xa4] sm:$0xf]
    %v1245 = vld [vmem:[#allocation8 + $0xa8] sm:$0xf]
    %v1246 = vld [vmem:[#allocation8 + $0xac] sm:$0xf]
    %v1247 = vld [vmem:[#allocation8 + $0xb0] sm:$0xf]
    %v1248 = vld [vmem:[#allocation8 + $0xb4] sm:$0xf]
    %v1249 = vld [vmem:[#allocation8 + $0xb8] sm:$0xf]
    %v1250 = vld [vmem:[#allocation8 + $0xbc] sm:$0xf]
    %v1251 = vld [vmem:[%s10] sm:$0x1]
    %v1253 = vlaneseq
    %v1254 = vshrl.u32 %v1253, 7
    %v1255 = vsub.s32 0, %v1254
    %v1256 = vrot.slane %v1251, %v1255
    %v1306 = vunpack.c.l.b16 %v1203
    %v1307 = vunpack.c.l.b16 %v1204
    %v1308 = vunpack.c.l.b16 %v1205
    %v1309 = vunpack.c.l.b16 %v1206
    %v1310 = vunpack.c.l.b16 %v1207
    %v1311 = vunpack.c.l.b16 %v1208
    %v1312 = vunpack.c.l.b16 %v1209
    %v1313 = vunpack.c.l.b16 %v1210
    %v1314 = vunpack.c.l.b16 %v1211
    %v1315 = vunpack.c.l.b16 %v1212
    %v1316 = vunpack.c.l.b16 %v1213
    %v1317 = vunpack.c.l.b16 %v1214
    %v1318 = vunpack.c.l.b16 %v1215
    %v1319 = vunpack.c.l.b16 %v1216
    %v1320 = vunpack.c.l.b16 %v1217
    %v1321 = vunpack.c.l.b16 %v1218
    %v1322 = vunpack.c.l.b16 %v1219
    %v1323 = vunpack.c.l.b16 %v1220
    %v1324 = vunpack.c.l.b16 %v1221
    %v1325 = vunpack.c.l.b16 %v1222
    %v1326 = vunpack.c.l.b16 %v1223
    %v1327 = vunpack.c.l.b16 %v1224
    %v1328 = vunpack.c.l.b16 %v1225
    %v1329 = vunpack.c.l.b16 %v1226
    %v1330 = vunpack.c.l.b16 %v1227
    %v1331 = vunpack.c.l.b16 %v1228
    %v1332 = vunpack.c.l.b16 %v1229
    %v1333 = vunpack.c.l.b16 %v1230
    %v1334 = vunpack.c.l.b16 %v1231
    %v1335 = vunpack.c.l.b16 %v1232
    %v1336 = vunpack.c.l.b16 %v1233
    %v1337 = vunpack.c.l.b16 %v1234
    %v1338 = vunpack.c.l.b16 %v1235
    %v1339 = vunpack.c.l.b16 %v1236
    %v1340 = vunpack.c.l.b16 %v1237
    %v1341 = vunpack.c.l.b16 %v1238
    %v1342 = vunpack.c.l.b16 %v1239
    %v1343 = vunpack.c.l.b16 %v1240
    %v1344 = vunpack.c.l.b16 %v1241
    %v1345 = vunpack.c.l.b16 %v1242
    %v1346 = vunpack.c.l.b16 %v1243
    %v1347 = vunpack.c.l.b16 %v1244
    %v1348 = vunpack.c.l.b16 %v1245
    %v1349 = vunpack.c.l.b16 %v1246
    %v1350 = vunpack.c.l.b16 %v1247
    %v1351 = vunpack.c.l.b16 %v1248
    %v1352 = vunpack.c.l.b16 %v1249
    %v1353 = vunpack.c.l.b16 %v1250
    %v1354 = vpack.c.b16 %v1307, %v1306
    %v1355 = vpack.c.b16 %v1309, %v1308
    %v1356 = vpack.c.b16 %v1311, %v1310
    %v1357 = vpack.c.b16 %v1313, %v1312
    %v1358 = vpack.c.b16 %v1315, %v1314
    %v1359 = vpack.c.b16 %v1317, %v1316
    %v1360 = vpack.c.b16 %v1319, %v1318
    %v1361 = vpack.c.b16 %v1321, %v1320
    %v1362 = vpack.c.b16 %v1323, %v1322
    %v1363 = vpack.c.b16 %v1325, %v1324
    %v1364 = vpack.c.b16 %v1327, %v1326
    %v1365 = vpack.c.b16 %v1329, %v1328
    %v1366 = vpack.c.b16 %v1331, %v1330
    %v1367 = vpack.c.b16 %v1333, %v1332
    %v1368 = vpack.c.b16 %v1335, %v1334
    %v1369 = vpack.c.b16 %v1337, %v1336
    %v1370 = vpack.c.b16 %v1339, %v1338
    %v1371 = vpack.c.b16 %v1341, %v1340
    %v1372 = vpack.c.b16 %v1343, %v1342
    %v1373 = vpack.c.b16 %v1345, %v1344
    %v1374 = vpack.c.b16 %v1347, %v1346
    %v1375 = vpack.c.b16 %v1349, %v1348
    %v1376 = vpack.c.b16 %v1351, %v1350
    %v1377 = vpack.c.b16 %v1353, %v1352
    %1402 = vmatprep.subr.bf16.mxu0 0
    %1403 = vmatpush1.bf16.msra.mxu0 %v1354
    %1404 = vmatprep.subr.bf16.mxu0 0
    %1405 = vmatpush1.bf16.msra.mxu0 %v1355
    %1406 = vmatprep.subr.bf16.mxu0 0
    %1407 = vmatpush1.bf16.msra.mxu0 %v1356
    %1408 = vmatprep.subr.bf16.mxu0 0
    %1409 = vmatpush1.bf16.msra.mxu0 %v1357
    %1410 = vmatprep.subr.bf16.mxu0 0
    %1411 = vmatpush1.bf16.msra.mxu0 %v1358
    %1412 = vmatprep.subr.bf16.mxu0 0
    %1413 = vmatpush1.bf16.msra.mxu0 %v1359
    %1414 = vmatprep.subr.bf16.mxu0 0
    %1415 = vmatpush1.bf16.msra.mxu0 %v1360
    %1416 = vmatprep.subr.bf16.mxu0 0
    %1417 = vmatpush1.bf16.msra.mxu0 %v1361
    %1418 = vmatprep.subr.bf16.mxu0 0
    %1419 = vmatpush1.bf16.msra.mxu0 %v1362
    %1420 = vmatprep.subr.bf16.mxu0 0
    %1421 = vmatpush1.bf16.msra.mxu0 %v1363
    %1422 = vmatprep.subr.bf16.mxu0 0
    %1423 = vmatpush1.bf16.msra.mxu0 %v1364
    %1424 = vmatprep.subr.bf16.mxu0 0
    %1425 = vmatpush1.bf16.msra.mxu0 %v1365
    %1426 = vmatprep.subr.bf16.mxu0 0
    %1427 = vmatpush1.bf16.msra.mxu0 %v1366
    %1428 = vmatprep.subr.bf16.mxu0 0
    %1429 = vmatpush1.bf16.msra.mxu0 %v1367
    %1430 = vmatprep.subr.bf16.mxu0 0
    %1431 = vmatpush1.bf16.msra.mxu0 %v1368
    %1432 = vmatprep.subr.bf16.mxu0 0
    %1433 = vmatpush1.bf16.msra.mxu0 %v1369
    %1434 = vmatprep.mubr.bf16.mxu0 %v1171
    %1435 = vmatmul.mubr.bf16.gmra.mrb[0].mxu0 %v1199
    %v1436 = vpop.f32.mrb[0].mxu0
    %v1437 = vadd.f32 %v1256, %v1436
    %v1438 = vpop.f32.mrb[0].mxu0
    %v1439 = vpop.f32.mrb[0].mxu0
    %v1440 = vadd.f32 %v1256, %v1439
    %v1441 = vpop.f32.mrb[0].mxu0
    %1442 = vmatprep.mubr.bf16.mxu0 %v1172
    %1443 = vmatmul.mubr.bf16.gmra.mrb[0].mxu0 %v1200
    %v1444 = vpop.f32.mrb[0].mxu0
    %v1445 = vadd.f32 %v1256, %v1444
    %v1446 = vpop.f32.mrb[0].mxu0
    %v1447 = vpop.f32.mrb[0].mxu0
    %v1448 = vadd.f32 %v1256, %v1447
    %v1449 = vpop.f32.mrb[0].mxu0
    %1450 = vdwg.mxu0
    %1451 = vmatprep.subr.bf16.mxu0 0
    %1452 = vmatpush1.bf16.msra.mxu0 %v1370
    %1453 = vmatprep.subr.bf16.mxu0 0
    %1454 = vmatpush1.bf16.msra.mxu0 %v1371
    %1455 = vmatprep.subr.bf16.mxu0 0
    %1456 = vmatpush1.bf16.msra.mxu0 %v1372
    %1457 = vmatprep.subr.bf16.mxu0 0
    %1458 = vmatpush1.bf16.msra.mxu0 %v1373
    %1459 = vmatprep.subr.bf16.mxu0 0
    %1460 = vmatpush1.bf16.msra.mxu0 %v1374
    %1461 = vmatprep.subr.bf16.mxu0 0
    %1462 = vmatpush1.bf16.msra.mxu0 %v1375
    %1463 = vmatprep.subr.bf16.mxu0 0
    %1464 = vmatpush1.bf16.msra.mxu0 %v1376
    %1465 = vmatprep.subr.bf16.mxu0 0
    %1466 = vmatpush1.bf16.msra.mxu0 %v1377
    %1467 = vmatprep.subr.bf16.mxu0 0
    %1468 = vmatpush1.bf16.msra.mxu0 0
    %1469 = vmatprep.subr.bf16.mxu0 0
    %1470 = vmatpush1.bf16.msra.mxu0 0
    %1471 = vmatprep.subr.bf16.mxu0 0
    %1472 = vmatpush1.bf16.msra.mxu0 0
    %1473 = vmatprep.subr.bf16.mxu0 0
    %1474 = vmatpush1.bf16.msra.mxu0 0
    %1475 = vmatprep.subr.bf16.mxu0 0
    %1476 = vmatpush1.bf16.msra.mxu0 0
    %1477 = vmatprep.subr.bf16.mxu0 0
    %1478 = vmatpush1.bf16.msra.mxu0 0
    %1479 = vmatprep.subr.bf16.mxu0 0
    %1480 = vmatpush1.bf16.msra.mxu0 0
    %1481 = vmatprep.subr.bf16.mxu0 0
    %1482 = vmatpush1.bf16.msra.mxu0 0
    %1483 = vmatprep.mubr.bf16.mxu0 0
    %1484 = vmatmul.mubr.bf16.gmra.mrb[0].mxu0 %v1201
    %v1485 = vpop.f32.mrb[0].mxu0
    %v1486 = vadd.f32 %v1437, %v1485
    %v1487 = vpop.f32.mrb[0].mxu0
    %v1488 = vpop.f32.mrb[0].mxu0
    %v1489 = vadd.f32 %v1440, %v1488
    %v1490 = vpop.f32.mrb[0].mxu0
    %1491 = vmatprep.mubr.bf16.mxu0 0
    %1492 = vmatmul.mubr.bf16.gmra.mrb[0].mxu0 %v1202
    %v1493 = vpop.f32.mrb[0].mxu0
    %v1494 = vadd.f32 %v1445, %v1493
    %v1495 = vpop.f32.mrb[0].mxu0
    %v1496 = vpop.f32.mrb[0].mxu0
    %v1497 = vadd.f32 %v1448, %v1496
    %v1498 = vpop.f32.mrb[0].mxu0
    %1499 = vdwg.mxu0
    %1500 = vadd.xlane.f32.xlu0 %v1486
    %v1501 = vpop.xlane.xlu0 %1500
    %1502 = vadd.xlane.f32.xlu0 %v1489
    %v1503 = vpop.xlane.xlu0 %1502
    %1504 = vadd.xlane.f32.xlu0 %v1494
    %v1505 = vpop.xlane.xlu0 %1504
    %1506 = vadd.xlane.f32.xlu0 %v1497
    %v1507 = vpop.xlane.xlu0 %1506
    %v1508 = vmul.f32 %v1486, %v1486
    %v1509 = vmul.f32 %v1489, %v1489
    %v1510 = vmul.f32 %v1494, %v1494
    %v1511 = vmul.f32 %v1497, %v1497
    %1512 = vadd.xlane.f32.xlu0 %v1508
    %v1513 = vpop.xlane.xlu0 %1512
    %1514 = vadd.xlane.f32.xlu0 %v1509
    %v1515 = vpop.xlane.xlu0 %1514
    %1516 = vadd.xlane.f32.xlu0 %v1510
    %v1517 = vpop.xlane.xlu0 %1516
    %1518 = vadd.xlane.f32.xlu0 %v1511
    %v1519 = vpop.xlane.xlu0 %1518
    %v1520 = vmul.f32 %v1501, 0.03125
    %v1521 = vmul.f32 %v1503, 0.03125
    %v1522 = vmul.f32 %v1505, 0.03125
    %v1523 = vmul.f32 %v1507, 0.03125
    %v1524 = vmul.f32 %v1513, 0.03125
    %v1525 = vmul.f32 %v1515, 0.03125
    %v1526 = vmul.f32 %v1517, 0.03125
    %v1527 = vmul.f32 %v1519, 0.03125
    %v1528 = vmul.f32 %v1520, %v1520
    %v1529 = vmul.f32 %v1521, %v1521
    %v1530 = vmul.f32 %v1522, %v1522
    %v1531 = vmul.f32 %v1523, %v1523
    %v1532 = vsub.f32 %v1524, %v1528
    %v1533 = vsub.f32 %v1525, %v1529
    %v1534 = vsub.f32 %v1526, %v1530
    %v1535 = vsub.f32 %v1527, %v1531
    %v1536 = vmax.f32 %v1532, 0.0
    %v1537 = vmax.f32 %v1533, 0.0
    %v1538 = vmax.f32 %v1534, 0.0
    %v1539 = vmax.f32 %v1535, 0.0
    %v1540 = vsub.f32 %v1486, %v1520
    %v1541 = vsub.f32 %v1489, %v1521
    %v1542 = vsub.f32 %v1494, %v1522
    %v1543 = vsub.f32 %v1497, %v1523
    %v1544 = vadd.f32 %v1536, 1e-05
    %v1545 = vadd.f32 %v1537, 1e-05
    %v1546 = vadd.f32 %v1538, 1e-05
    %v1547 = vadd.f32 %v1539, 1e-05
    %v1548 = vrsqrt.pop %v1544
    %v1549 = vrsqrt.pop %v1545
    %v1550 = vrsqrt.pop %v1546
    %v1551 = vrsqrt.pop %v1547
    %v1552 = vmul.f32 %v1540, %v1548
    %v1553 = vmul.f32 %v1541, %v1549
    %v1554 = vmul.f32 %v1542, %v1550
    %v1555 = vmul.f32 %v1543, %v1551
    %v1556 = vld [vmem:[%s11] sm:$0x1]
    %v1558 = vlaneseq
    %v1559 = vshrl.u32 %v1558, 7
    %v1560 = vsub.s32 0, %v1559
    %v1561 = vrot.slane %v1556, %v1560
    %v1563 = vmul.f32 %v1552, %v1561
    %v1564 = vmul.f32 %v1553, %v1561
    %v1565 = vmul.f32 %v1554, %v1561
    %v1566 = vmul.f32 %v1555, %v1561
    %v1567 = vld [vmem:[%s12] sm:$0x1]
    %v1569 = vlaneseq
    %v1570 = vshrl.u32 %v1569, 7
    %v1571 = vsub.s32 0, %v1570
    %v1572 = vrot.slane %v1567, %v1571
    %v1574 = vadd.f32 %v1563, %v1572
    %v1575 = vadd.f32 %v1564, %v1572
    %v1576 = vadd.f32 %v1565, %v1572
    %v1577 = vadd.f32 %v1566, %v1572
    %v1578 = vadd.f32 %v1574, %v1167
    %v1579 = vadd.f32 %v1575, %v1168
    %v1580 = vadd.f32 %v1576, %v1169
    %v1581 = vadd.f32 %v1577, %v1170
    %v1582 = vmax.f32 %v1578, 0.0
    %v1583 = vmax.f32 %v1579, 0.0
    %v1584 = vmax.f32 %v1580, 0.0
    %v1585 = vmax.f32 %v1581, 0.0
    %1586 = vst [vmem:[#allocation10] sm:$0xff] %v1582
    %1587 = vst [vmem:[#allocation10 + $0x8] sm:$0xff] %v1583
    %1588 = vst [vmem:[#allocation10 + $0x10] sm:$0xff] %v1584
    %1589 = vst [vmem:[#allocation10 + $0x18] sm:$0xff] %v1585
    // Predicated region
    $region70: #{tpu_custom_call.1} parent=1 // pred_check
      _
    $region71: #{tpu_custom_call.1} parent=1 // pred_check_branch
      %1591 = sbr.rel (0) target = $region73
    $region72: #{tpu_custom_call.1} parent=1 // pred_region
      %s1593 = ssub.s32 512, 512
      %1594 = vsyncadd [#allocation4], %s1593
      %s1595 = sshll.u32 [#allocation10], 4
      %s1596 = int_to_ptr.vmem [resolvable:$true] %s1595
      %1601 = dma.vmem_to_hbm [thread:$0]  %s1596, 512, %s13, [#allocation4], 128, 128, 8
    $region73: #{tpu_custom_call.1} parent=1 // pred_fallthru
      _
    // Predicated region
    $region74: #{tpu_custom_call.1} parent=1 // pred_check
      _
    $region75: #{tpu_custom_call.1} parent=1 // pred_check_branch
      %1603 = sbr.rel (0) target = $region77
    $region76: #{tpu_custom_call.1} parent=1 // pred_region
      %1604 = dma.done [#allocation4], 512
    $region77: #{tpu_custom_call.1} parent=1 // pred_fallthru
      _
    %1605 = vsyncpa [#allocation3], 1
    %1606 = vsyncpa [#allocation6], 1
    %1607 = vsyncpa [#allocation9], 1
    %1608 = vsyncpa [#allocation4], 1

</llo_original>
